<compile_context>
chip_gen: v7x
topology: tpu7x:2x2x1
jax: 0.10.0
libtpu: 0.0.40
codegen_flags: <defaults>
</compile_context>

<pallas_src>
import jax
import jax.numpy as jnp
from jax.experimental import pallas as pl
from jax.experimental.pallas import tpu as pltpu

SPATIAL = 16        # input H = W (small synthetic size)
IN_CH = 3
STEM_C = 32         # efficientnet_b0 stem output channels
CNN_OUT = 1280      # efficientnet_b0 classifier[1].in_features
TAB_HIDDEN = 32
NUM_CLASSES = 2
OUT_PAD = 128       # lane-padded logits width (slice to NUM_CLASSES in wrapper)
HW = (SPATIAL // 2) * (SPATIAL // 2)   # spatial positions after stride-2 stem (64)


def _silu(x):
    # Numerically stable x * sigmoid(x):
    #   sigmoid(x) = 1/(1+exp(-x))        for x >= 0
    #              = exp(x)/(1+exp(x))    for x <  0
    # exp argument is always <= 0 so it never overflows; the divide goes to the
    # EUP via approx reciprocal (otherwise-idle slot).
    e = jnp.exp(-jnp.abs(x))
    denom_inv = pl.reciprocal(1.0 + e, approx=True)
    sig = jnp.where(x >= 0, denom_inv, e * denom_inv)
    return x * sig


def _fused_kernel(patches_ref, tab_ref, pool_ref,
                  w_stem_ref, b_stem_ref, w_head_ref, b_head_ref,
                  w_tab_ref, b_tab_ref,
                  w_cls_img_ref, w_cls_tab_ref, b_cls_ref, out_ref):
    # patches_ref : (N*64, 27) f32   im2col of the 3x3 / stride-2 / pad-1 stem conv
    # tab_ref     : (N, tab_dim) f32
    # pool_ref    : (N, N*64) f32    block-diagonal average-pool matrix (1/64 entries)
    # w_stem_ref  : (27, 32) bf16, b_stem_ref: (1, 32) f32        (BN folded)
    # w_head_ref  : (32, 1280) bf16, b_head_ref: (1, 1280) f32    (BN folded)
    # w_tab_ref   : (tab_dim, 32) f32, b_tab_ref: (1, 32) f32
    # w_cls_*     : lane-padded classifier blocks (.., 128), b_cls_ref: (1, 128)
    # out_ref     : (N, 128) f32     lane-padded logits (first 2 lanes valid)

    # Stem 3x3/s2 conv as a flattened matmul (bf16 in, f32 acc) + SiLU.
    x = patches_ref[...]
    h = jnp.dot(x.astype(jnp.bfloat16), w_stem_ref[...],
                preferred_element_type=jnp.float32)
    h = _silu(h + b_stem_ref[...])                                  # (N*64, 32)

    # 1x1 head conv 32 -> 1280 (last layer of base_model.features) + SiLU.
    z = jnp.dot(h.astype(jnp.bfloat16), w_head_ref[...],
                preferred_element_type=jnp.float32)
    z = _silu(z + b_head_ref[...])                                  # (N*64, 1280)

    # AdaptiveAvgPool2d(1) + flatten == block-diagonal pooling matmul.
    feats = jnp.dot(pool_ref[...], z,
                    preferred_element_type=jnp.float32)             # (N, 1280)

    # Tabular branch: relu(tabular @ W_tab + b_tab).
    t = jnp.dot(tab_ref[...], w_tab_ref[...],
                preferred_element_type=jnp.float32)
    t = jnp.maximum(t + b_tab_ref[...], 0.0)                        # (N, 32)

    # torch.cat([feats, tab], 1) @ W_cls.T + b == split-weight sum.
    # nn.Dropout(0.5) is identity in inference mode.  Lane-dense (N, 128) store.
    out_ref[...] = (jnp.dot(feats, w_cls_img_ref[...],
                            preferred_element_type=jnp.float32)
                    + jnp.dot(t, w_cls_tab_ref[...],
                              preferred_element_type=jnp.float32)
                    + b_cls_ref[...])


def _im2col_stem(img_nchw):
    # Layout glue only (no MACs): NCHW -> NHWC, pad=1, gather 3x3 stride-2 patches.
    x = jnp.transpose(img_nchw, (0, 2, 3, 1)).astype(jnp.float32)   # (N, H, W, C)
    n, h, w, c = x.shape
    xp = jnp.pad(x, ((0, 0), (1, 1), (1, 1), (0, 0)))
    out_h = (h + 2 - 3) // 2 + 1
    cols = []
    for kh in range(3):
        for kw in range(3):
            cols.append(xp[:, kh:kh + 2 * out_h:2, kw:kw + 2 * out_h:2, :])
    patches = jnp.stack(cols, axis=-2)                    # (N, oh, ow, 9, C)
    return patches.reshape(n, out_h * out_h, 9 * c)       # (N, 64, 27)


def cnn_with_tabular_forward(img, tabular, params):
    n = img.shape[0]
    tab = tabular.astype(jnp.float32)
    tab_dim = tab.shape[1]

    # Flatten the batch into the MXU M dimension: (N, 64, 27) -> (N*64, 27).
    patches = _im2col_stem(img).reshape(n * HW, 9 * IN_CH)

    # Block-diagonal average-pool matrix: feats[i] = mean over image i's HW rows.
    pool = jnp.repeat(jnp.eye(n, dtype=jnp.float32), HW, axis=1) / float(HW)

    # Lane-pad the 2-wide classifier so the kernel's output store is lane-dense.
    pad = OUT_PAD - NUM_CLASSES
    w_cls_img = jnp.pad(params['w_cls_img'], ((0, 0), (0, pad)))
    w_cls_tab = jnp.pad(params['w_cls_tab'], ((0, 0), (0, pad)))
    b_cls = jnp.pad(params['b_cls'], ((0, 0), (0, pad)))

    out_padded = pl.pallas_call(
        _fused_kernel,
        out_shape=jax.ShapeDtypeStruct((n, OUT_PAD), jnp.float32),
        grid=(1,),
        in_specs=[
            pl.BlockSpec((n * HW, 9 * IN_CH), lambda i: (0, 0)),
            pl.BlockSpec((n, tab_dim), lambda i: (0, 0)),
            pl.BlockSpec((n, n * HW), lambda i: (0, 0)),
            pl.BlockSpec((9 * IN_CH, STEM_C), lambda i: (0, 0)),
            pl.BlockSpec((1, STEM_C), lambda i: (0, 0)),
            pl.BlockSpec((STEM_C, CNN_OUT), lambda i: (0, 0)),
            pl.BlockSpec((1, CNN_OUT), lambda i: (0, 0)),
            pl.BlockSpec((tab_dim, TAB_HIDDEN), lambda i: (0, 0)),
            pl.BlockSpec((1, TAB_HIDDEN), lambda i: (0, 0)),
            pl.BlockSpec((CNN_OUT, OUT_PAD), lambda i: (0, 0)),
            pl.BlockSpec((TAB_HIDDEN, OUT_PAD), lambda i: (0, 0)),
            pl.BlockSpec((1, OUT_PAD), lambda i: (0, 0)),
        ],
        out_specs=pl.BlockSpec((n, OUT_PAD), lambda i: (0, 0)),
        compiler_params=pltpu.CompilerParams(
            dimension_semantics=("arbitrary",)),
    )(patches, tab, pool,
      params['w_stem'].astype(jnp.bfloat16), params['b_stem'],
      params['w_head'].astype(jnp.bfloat16), params['b_head'],
      params['w_tab'], params['b_tab'],
      w_cls_img, w_cls_tab, b_cls)

    return out_padded[:, :NUM_CLASSES]


def init_params(key, tabular_dim):
    ks = jax.random.split(key, 7)

    def nrm(k, shape, scale):
        return scale * jax.random.normal(k, shape, jnp.float32)

    return dict(
        # stem conv 3x3/s2, 3->32, HWIO flattened to (27, 32); BN folded into w/b.
        # NOTE: if real pretrained weights are loaded, PyTorch OIHW must be
        # permuted to HWIO and flattened in (kh, kw, c_in) order to match im2col.
        w_stem=nrm(ks[0], (9 * IN_CH, STEM_C), 0.1),
        b_stem=nrm(ks[1], (1, STEM_C), 0.1),
        # head 1x1 conv 32->1280 (last layer of base_model.features); BN folded.
        w_head=nrm(ks[2], (STEM_C, CNN_OUT), 0.05),
        b_head=nrm(ks[3], (1, CNN_OUT), 0.05),
        # tabular_fc: nn.Linear(tabular_dim, 32)  (stored as (in, out))
        w_tab=nrm(ks[4], (tabular_dim, TAB_HIDDEN), 0.1),
        b_tab=jnp.zeros((1, TAB_HIDDEN), jnp.float32),
        # classifier: nn.Linear(1280 + 32, 2) split into image / tabular column blocks
        w_cls_img=nrm(ks[5], (CNN_OUT, NUM_CLASSES), 0.02),
        w_cls_tab=nrm(ks[6], (TAB_HIDDEN, NUM_CLASSES), 0.02),
        b_cls=jnp.zeros((1, NUM_CLASSES), jnp.float32),
    )


if __name__ == "__main__":
    key = jax.random.PRNGKey(0)
    k_img, k_tab, k_par = jax.random.split(key, 3)

    batch, tab_dim = 2, 20
    img = jax.random.normal(k_img, (batch, IN_CH, SPATIAL, SPATIAL), jnp.float32)  # NCHW
    tabular = jax.random.normal(k_tab, (batch, tab_dim), jnp.float32)
    params = init_params(k_par, tab_dim)

    fwd = jax.jit(cnn_with_tabular_forward)
    logits = jax.block_until_ready(fwd(img, tabular, params))
    assert logits.shape == (batch, NUM_CLASSES)
    assert logits.dtype == jnp.float32
    print("KERNEL_OK")
</pallas_src>

<mosaic_0001>
module attributes {stable_mosaic.version = 11 : i64} {
  func.func @_fused_kernel(%arg0: i32, %arg1: memref<128x27xf32, #tpu.memory_space<vmem>>, %arg2: memref<2x20xf32, #tpu.memory_space<vmem>>, %arg3: memref<2x128xf32, #tpu.memory_space<vmem>>, %arg4: memref<27x32xbf16, #tpu.memory_space<vmem>>, %arg5: memref<1x32xf32, #tpu.memory_space<vmem>>, %arg6: memref<32x1280xbf16, #tpu.memory_space<vmem>>, %arg7: memref<1x1280xf32, #tpu.memory_space<vmem>>, %arg8: memref<20x32xf32, #tpu.memory_space<vmem>>, %arg9: memref<1x32xf32, #tpu.memory_space<vmem>>, %arg10: memref<1280x128xf32, #tpu.memory_space<vmem>>, %arg11: memref<32x128xf32, #tpu.memory_space<vmem>>, %arg12: memref<1x128xf32, #tpu.memory_space<vmem>>, %arg13: memref<2x128xf32, #tpu.memory_space<vmem>>) attributes {dimension_semantics = [#tpu.dimension_semantics<arbitrary>], iteration_bounds = array<i64: 1>, scalar_prefetch = 0 : i64, scratch_operands = 0 : i64, tpu.core_type = #tpu.core_type<tc>, window_params = [{pipeline_mode = #tpu.pipeline_mode<synchronous>, transform_indices = @transform_0, window_bounds = array<i64: 128, 27>}, {pipeline_mode = #tpu.pipeline_mode<synchronous>, transform_indices = @transform_1, window_bounds = array<i64: 2, 20>}, {pipeline_mode = #tpu.pipeline_mode<synchronous>, transform_indices = @transform_2, window_bounds = array<i64: 2, 128>}, {pipeline_mode = #tpu.pipeline_mode<synchronous>, transform_indices = @transform_3, window_bounds = array<i64: 27, 32>}, {pipeline_mode = #tpu.pipeline_mode<synchronous>, transform_indices = @transform_4, window_bounds = array<i64: 1, 32>}, {pipeline_mode = #tpu.pipeline_mode<synchronous>, transform_indices = @transform_5, window_bounds = array<i64: 32, 1280>}, {pipeline_mode = #tpu.pipeline_mode<synchronous>, transform_indices = @transform_6, window_bounds = array<i64: 1, 1280>}, {pipeline_mode = #tpu.pipeline_mode<synchronous>, transform_indices = @transform_7, window_bounds = array<i64: 20, 32>}, {pipeline_mode = #tpu.pipeline_mode<synchronous>, transform_indices = @transform_8, window_bounds = array<i64: 1, 32>}, {pipeline_mode = #tpu.pipeline_mode<synchronous>, transform_indices = @transform_9, window_bounds = array<i64: 1280, 128>}, {pipeline_mode = #tpu.pipeline_mode<synchronous>, transform_indices = @transform_10, window_bounds = array<i64: 32, 128>}, {pipeline_mode = #tpu.pipeline_mode<synchronous>, transform_indices = @transform_11, window_bounds = array<i64: 1, 128>}, {pipeline_mode = #tpu.pipeline_mode<synchronous>, transform_indices = @transform_12, window_bounds = array<i64: 2, 128>}]} {
    %c0 = arith.constant 0 : index
    %c0_0 = arith.constant 0 : index
    %0 = vector.load %arg1[%c0, %c0_0] : memref<128x27xf32, #tpu.memory_space<vmem>>, vector<128x27xf32>
    %1 = arith.truncf %0 : vector<128x27xf32> to vector<128x27xbf16>
    %c0_1 = arith.constant 0 : index
    %c0_2 = arith.constant 0 : index
    %2 = vector.load %arg4[%c0_1, %c0_2] : memref<27x32xbf16, #tpu.memory_space<vmem>>, vector<27x32xbf16>
    %cst = arith.constant dense<0.000000e+00> : vector<128x32xf32>
    %3 = tpu.matmul %1, %2, %cst {dimension_numbers = #tpu.dot_dimension_numbers<[1], [0], [0], [1], [0, 0, 1, 1], [], []>} : vector<128x27xbf16>, vector<27x32xbf16>, vector<128x32xf32> -> vector<128x32xf32>
    %c0_3 = arith.constant 0 : index
    %c0_4 = arith.constant 0 : index
    %4 = vector.load %arg5[%c0_3, %c0_4] : memref<1x32xf32, #tpu.memory_space<vmem>>, vector<1x32xf32>
    %5 = vector.broadcast %4 : vector<1x32xf32> to vector<128x32xf32>
    %6 = arith.addf %3, %5 : vector<128x32xf32>
    %7 = math.absf %6 : vector<128x32xf32>
    %cst_5 = arith.constant 0.000000e+00 : f32
    %8 = vector.broadcast %cst_5 : f32 to vector<128x32xf32>
    %9 = arith.subf %8, %7 : vector<128x32xf32>
    %10 = math.exp %9 : vector<128x32xf32>
    %cst_6 = arith.constant 1.000000e+00 : f32
    %11 = vector.broadcast %cst_6 : f32 to vector<128x32xf32>
    %12 = arith.addf %11, %10 : vector<128x32xf32>
    %13 = tpu.reciprocal %12 {approx = true} : vector<128x32xf32> -> vector<128x32xf32>
    %cst_7 = arith.constant 0.000000e+00 : f32
    %14 = vector.broadcast %cst_7 : f32 to vector<128x32xf32>
    %15 = arith.cmpf oge, %6, %14 : vector<128x32xf32>
    %16 = arith.mulf %10, %13 : vector<128x32xf32>
    %17 = arith.select %15, %13, %16 : vector<128x32xi1>, vector<128x32xf32>
    %18 = arith.mulf %6, %17 : vector<128x32xf32>
    %19 = arith.truncf %18 : vector<128x32xf32> to vector<128x32xbf16>
    %c0_8 = arith.constant 0 : index
    %c0_9 = arith.constant 0 : index
    %20 = vector.load %arg6[%c0_8, %c0_9] : memref<32x1280xbf16, #tpu.memory_space<vmem>>, vector<32x1280xbf16>
    %cst_10 = arith.constant dense<0.000000e+00> : vector<128x1280xf32>
    %21 = tpu.matmul %19, %20, %cst_10 {dimension_numbers = #tpu.dot_dimension_numbers<[1], [0], [0], [1], [0, 0, 1, 1], [], []>} : vector<128x32xbf16>, vector<32x1280xbf16>, vector<128x1280xf32> -> vector<128x1280xf32>
    %c0_11 = arith.constant 0 : index
    %c0_12 = arith.constant 0 : index
    %22 = vector.load %arg7[%c0_11, %c0_12] : memref<1x1280xf32, #tpu.memory_space<vmem>>, vector<1x1280xf32>
    %23 = vector.broadcast %22 : vector<1x1280xf32> to vector<128x1280xf32>
    %24 = arith.addf %21, %23 : vector<128x1280xf32>
    %25 = math.absf %24 : vector<128x1280xf32>
    %cst_13 = arith.constant 0.000000e+00 : f32
    %26 = vector.broadcast %cst_13 : f32 to vector<128x1280xf32>
    %27 = arith.subf %26, %25 : vector<128x1280xf32>
    %28 = math.exp %27 : vector<128x1280xf32>
    %cst_14 = arith.constant 1.000000e+00 : f32
    %29 = vector.broadcast %cst_14 : f32 to vector<128x1280xf32>
    %30 = arith.addf %29, %28 : vector<128x1280xf32>
    %31 = tpu.reciprocal %30 {approx = true} : vector<128x1280xf32> -> vector<128x1280xf32>
    %cst_15 = arith.constant 0.000000e+00 : f32
    %32 = vector.broadcast %cst_15 : f32 to vector<128x1280xf32>
    %33 = arith.cmpf oge, %24, %32 : vector<128x1280xf32>
    %34 = arith.mulf %28, %31 : vector<128x1280xf32>
    %35 = arith.select %33, %31, %34 : vector<128x1280xi1>, vector<128x1280xf32>
    %36 = arith.mulf %24, %35 : vector<128x1280xf32>
    %c0_16 = arith.constant 0 : index
    %c0_17 = arith.constant 0 : index
    %37 = vector.load %arg3[%c0_16, %c0_17] : memref<2x128xf32, #tpu.memory_space<vmem>>, vector<2x128xf32>
    %cst_18 = arith.constant dense<0.000000e+00> : vector<2x1280xf32>
    %38 = tpu.matmul %37, %36, %cst_18 {dimension_numbers = #tpu.dot_dimension_numbers<[1], [0], [0], [1], [0, 0, 1, 1], [], []>} : vector<2x128xf32>, vector<128x1280xf32>, vector<2x1280xf32> -> vector<2x1280xf32>
    %c0_19 = arith.constant 0 : index
    %c0_20 = arith.constant 0 : index
    %39 = vector.load %arg2[%c0_19, %c0_20] : memref<2x20xf32, #tpu.memory_space<vmem>>, vector<2x20xf32>
    %c0_21 = arith.constant 0 : index
    %c0_22 = arith.constant 0 : index
    %40 = vector.load %arg8[%c0_21, %c0_22] : memref<20x32xf32, #tpu.memory_space<vmem>>, vector<20x32xf32>
    %cst_23 = arith.constant dense<0.000000e+00> : vector<2x32xf32>
    %41 = tpu.matmul %39, %40, %cst_23 {dimension_numbers = #tpu.dot_dimension_numbers<[1], [0], [0], [1], [0, 0, 1, 1], [], []>} : vector<2x20xf32>, vector<20x32xf32>, vector<2x32xf32> -> vector<2x32xf32>
    %c0_24 = arith.constant 0 : index
    %c0_25 = arith.constant 0 : index
    %42 = vector.load %arg9[%c0_24, %c0_25] : memref<1x32xf32, #tpu.memory_space<vmem>>, vector<1x32xf32>
    %43 = vector.broadcast %42 : vector<1x32xf32> to vector<2x32xf32>
    %44 = arith.addf %41, %43 : vector<2x32xf32>
    %cst_26 = arith.constant 0.000000e+00 : f32
    %45 = vector.broadcast %cst_26 : f32 to vector<2x32xf32>
    %46 = arith.maximumf %44, %45 : vector<2x32xf32>
    %c0_27 = arith.constant 0 : index
    %c0_28 = arith.constant 0 : index
    %47 = vector.load %arg10[%c0_27, %c0_28] : memref<1280x128xf32, #tpu.memory_space<vmem>>, vector<1280x128xf32>
    %cst_29 = arith.constant dense<0.000000e+00> : vector<2x128xf32>
    %48 = tpu.matmul %38, %47, %cst_29 {dimension_numbers = #tpu.dot_dimension_numbers<[1], [0], [0], [1], [0, 0, 1, 1], [], []>} : vector<2x1280xf32>, vector<1280x128xf32>, vector<2x128xf32> -> vector<2x128xf32>
    %c0_30 = arith.constant 0 : index
    %c0_31 = arith.constant 0 : index
    %49 = vector.load %arg11[%c0_30, %c0_31] : memref<32x128xf32, #tpu.memory_space<vmem>>, vector<32x128xf32>
    %cst_32 = arith.constant dense<0.000000e+00> : vector<2x128xf32>
    %50 = tpu.matmul %46, %49, %cst_32 {dimension_numbers = #tpu.dot_dimension_numbers<[1], [0], [0], [1], [0, 0, 1, 1], [], []>} : vector<2x32xf32>, vector<32x128xf32>, vector<2x128xf32> -> vector<2x128xf32>
    %51 = arith.addf %48, %50 : vector<2x128xf32>
    %c0_33 = arith.constant 0 : index
    %c0_34 = arith.constant 0 : index
    %52 = vector.load %arg12[%c0_33, %c0_34] : memref<1x128xf32, #tpu.memory_space<vmem>>, vector<1x128xf32>
    %53 = vector.broadcast %52 : vector<1x128xf32> to vector<2x128xf32>
    %54 = arith.addf %51, %53 : vector<2x128xf32>
    %c0_35 = arith.constant 0 : index
    %c0_36 = arith.constant 0 : index
    %55 = vector.load %arg13[%c0_35, %c0_36] : memref<2x128xf32, #tpu.memory_space<vmem>>, vector<2x128xf32>
    tpu.vector_store %arg13[%c0_35, %c0_36], %54 {strides = array<i32>} : memref<2x128xf32, #tpu.memory_space<vmem>>, vector<2x128xf32>,
    return
  }
  func.func @transform_0(%arg0: i32) -> (i32, i32) {
    %c0_i32 = arith.constant 0 : i32
    %c0_i32_0 = arith.constant 0 : i32
    %c0_i32_1 = arith.constant 0 : i32
    return %c0_i32, %c0_i32_0 : i32, i32
  }
  func.func @transform_1(%arg0: i32) -> (i32, i32) {
    %c0_i32 = arith.constant 0 : i32
    %c0_i32_0 = arith.constant 0 : i32
    %c0_i32_1 = arith.constant 0 : i32
    return %c0_i32, %c0_i32_0 : i32, i32
  }
  func.func @transform_2(%arg0: i32) -> (i32, i32) {
    %c0_i32 = arith.constant 0 : i32
    %c0_i32_0 = arith.constant 0 : i32
    %c0_i32_1 = arith.constant 0 : i32
    return %c0_i32, %c0_i32_0 : i32, i32
  }
  func.func @transform_3(%arg0: i32) -> (i32, i32) {
    %c0_i32 = arith.constant 0 : i32
    %c0_i32_0 = arith.constant 0 : i32
    %c0_i32_1 = arith.constant 0 : i32
    return %c0_i32, %c0_i32_0 : i32, i32
  }
  func.func @transform_4(%arg0: i32) -> (i32, i32) {
    %c0_i32 = arith.constant 0 : i32
    %c0_i32_0 = arith.constant 0 : i32
    %c0_i32_1 = arith.constant 0 : i32
    return %c0_i32, %c0_i32_0 : i32, i32
  }
  func.func @transform_5(%arg0: i32) -> (i32, i32) {
    %c0_i32 = arith.constant 0 : i32
    %c0_i32_0 = arith.constant 0 : i32
    %c0_i32_1 = arith.constant 0 : i32
    return %c0_i32, %c0_i32_0 : i32, i32
  }
  func.func @transform_6(%arg0: i32) -> (i32, i32) {
    %c0_i32 = arith.constant 0 : i32
    %c0_i32_0 = arith.constant 0 : i32
    %c0_i32_1 = arith.constant 0 : i32
    return %c0_i32, %c0_i32_0 : i32, i32
  }
  func.func @transform_7(%arg0: i32) -> (i32, i32) {
    %c0_i32 = arith.constant 0 : i32
    %c0_i32_0 = arith.constant 0 : i32
    %c0_i32_1 = arith.constant 0 : i32
    return %c0_i32, %c0_i32_0 : i32, i32
  }
  func.func @transform_8(%arg0: i32) -> (i32, i32) {
    %c0_i32 = arith.constant 0 : i32
    %c0_i32_0 = arith.constant 0 : i32
    %c0_i32_1 = arith.constant 0 : i32
    return %c0_i32, %c0_i32_0 : i32, i32
  }
  func.func @transform_9(%arg0: i32) -> (i32, i32) {
    %c0_i32 = arith.constant 0 : i32
    %c0_i32_0 = arith.constant 0 : i32
    %c0_i32_1 = arith.constant 0 : i32
    return %c0_i32, %c0_i32_0 : i32, i32
  }
  func.func @transform_10(%arg0: i32) -> (i32, i32) {
    %c0_i32 = arith.constant 0 : i32
    %c0_i32_0 = arith.constant 0 : i32
    %c0_i32_1 = arith.constant 0 : i32
    return %c0_i32, %c0_i32_0 : i32, i32
  }
  func.func @transform_11(%arg0: i32) -> (i32, i32) {
    %c0_i32 = arith.constant 0 : i32
    %c0_i32_0 = arith.constant 0 : i32
    %c0_i32_1 = arith.constant 0 : i32
    return %c0_i32, %c0_i32_0 : i32, i32
  }
  func.func @transform_12(%arg0: i32) -> (i32, i32) {
    %c0_i32 = arith.constant 0 : i32
    %c0_i32_0 = arith.constant 0 : i32
    %c0_i32_1 = arith.constant 0 : i32
    return %c0_i32, %c0_i32_0 : i32, i32
  }
}

</mosaic_0001>

<llo_original>
// kernel: cnn_with_tabular_forward.1
$region0: #{cnn_with_tabular_forward.1}
  #allocation0 [shape = 'u32[]', space=smem, size = 0x4, offset = 0x4, fixed_abs, tag = 'smem constant byte address 0x4 - core index']
  #allocation1 [shape = 'u32[144,128]{1,0:T(1,128)}', space=vmem, size = 0x12000, scoped, tag = 'internal scratch']
  %s0 = inlined_call_operand.vmem [shape: f32[128,27], index: 0, kind: input, shape index: {}]
  %s1 = inlined_call_operand.vmem [shape: f32[2,20], index: 1, kind: input, shape index: {}]
  %s2 = inlined_call_operand.vmem [shape: f32[2,128], index: 2, kind: input, shape index: {}]
  %s3 = inlined_call_operand.vmem [shape: bf16[27,32], index: 3, kind: input, shape index: {}]
  %s4 = inlined_call_operand.vmem [shape: f32[1,32], index: 4, kind: input, shape index: {}]
  %s5 = inlined_call_operand.vmem [shape: bf16[32,1280], index: 5, kind: input, shape index: {}]
  %s6 = inlined_call_operand.vmem [shape: f32[1,1280], index: 6, kind: input, shape index: {}]
  %s7 = inlined_call_operand.vmem [shape: f32[20,32], index: 7, kind: input, shape index: {}]
  %s8 = inlined_call_operand.vmem [shape: f32[1,32], index: 8, kind: input, shape index: {}]
  %s9 = inlined_call_operand.vmem [shape: f32[1280,128], index: 9, kind: input, shape index: {}]
  %s10 = inlined_call_operand.vmem [shape: f32[32,128], index: 10, kind: input, shape index: {}]
  %s11 = inlined_call_operand.vmem [shape: f32[1,128], index: 11, kind: input, shape index: {}]
  %s12 = inlined_call_operand.hbm [shape: f32[2,128], index: 12, kind: output, shape index: {}]
  %s13 = sld [smem:[#allocation0]]
  $region58: #{cnn_with_tabular_forward.1} parent=0
    _
  %s15 = ssub.s32 1, %s13
  %s16 = scalar_select 0, %s15, %s13
  $region1: #{cnn_with_tabular_forward.1} parent=0
    #allocation2 [shape = 'u8[1024]{0}', space=vmem, size = 0x400, scoped, tag = 'output window, operand 0, single buffered']
    #allocation3 [shape = 's32[1]{0}', space=sflag, size = 0x4, scoped, tag = 'scoped memory for cnn_with_tabular_forward.1']
    %17 = vsyncpa [#allocation3], 0
    // Predicated region
    $region2: #{cnn_with_tabular_forward.1} parent=1 // pred_check
      _
    $region3: #{cnn_with_tabular_forward.1} parent=1 // pred_check_branch
      %19 = sbr.rel (0) target = $region5
    $region4: #{cnn_with_tabular_forward.1} parent=1 // pred_region
      _
    $region5: #{cnn_with_tabular_forward.1} parent=1 // pred_fallthru
      _
    // Predicated region
    $region6: #{cnn_with_tabular_forward.1} parent=1 // pred_check
      _
    $region7: #{cnn_with_tabular_forward.1} parent=1 // pred_check_branch
      %21 = sbr.rel (0) target = $region9
    $region8: #{cnn_with_tabular_forward.1} parent=1 // pred_region
      _
    $region9: #{cnn_with_tabular_forward.1} parent=1 // pred_fallthru
      _
    // Predicated region
    $region10: #{cnn_with_tabular_forward.1} parent=1 // pred_check
      _
    $region11: #{cnn_with_tabular_forward.1} parent=1 // pred_check_branch
      %23 = sbr.rel (0) target = $region13
    $region12: #{cnn_with_tabular_forward.1} parent=1 // pred_region
      _
    $region13: #{cnn_with_tabular_forward.1} parent=1 // pred_fallthru
      _
    // Predicated region
    $region14: #{cnn_with_tabular_forward.1} parent=1 // pred_check
      _
    $region15: #{cnn_with_tabular_forward.1} parent=1 // pred_check_branch
      %25 = sbr.rel (0) target = $region17
    $region16: #{cnn_with_tabular_forward.1} parent=1 // pred_region
      _
    $region17: #{cnn_with_tabular_forward.1} parent=1 // pred_fallthru
      _
    // Predicated region
    $region18: #{cnn_with_tabular_forward.1} parent=1 // pred_check
      _
    $region19: #{cnn_with_tabular_forward.1} parent=1 // pred_check_branch
      %27 = sbr.rel (0) target = $region21
    $region20: #{cnn_with_tabular_forward.1} parent=1 // pred_region
      _
    $region21: #{cnn_with_tabular_forward.1} parent=1 // pred_fallthru
      _
    // Predicated region
    $region22: #{cnn_with_tabular_forward.1} parent=1 // pred_check
      _
    $region23: #{cnn_with_tabular_forward.1} parent=1 // pred_check_branch
      %29 = sbr.rel (0) target = $region25
    $region24: #{cnn_with_tabular_forward.1} parent=1 // pred_region
      _
    $region25: #{cnn_with_tabular_forward.1} parent=1 // pred_fallthru
      _
    // Predicated region
    $region26: #{cnn_with_tabular_forward.1} parent=1 // pred_check
      _
    $region27: #{cnn_with_tabular_forward.1} parent=1 // pred_check_branch
      %31 = sbr.rel (0) target = $region29
    $region28: #{cnn_with_tabular_forward.1} parent=1 // pred_region
      _
    $region29: #{cnn_with_tabular_forward.1} parent=1 // pred_fallthru
      _
    // Predicated region
    $region30: #{cnn_with_tabular_forward.1} parent=1 // pred_check
      _
    $region31: #{cnn_with_tabular_forward.1} parent=1 // pred_check_branch
      %33 = sbr.rel (0) target = $region33
    $region32: #{cnn_with_tabular_forward.1} parent=1 // pred_region
      _
    $region33: #{cnn_with_tabular_forward.1} parent=1 // pred_fallthru
      _
    // Predicated region
    $region34: #{cnn_with_tabular_forward.1} parent=1 // pred_check
      _
    $region35: #{cnn_with_tabular_forward.1} parent=1 // pred_check_branch
      %35 = sbr.rel (0) target = $region37
    $region36: #{cnn_with_tabular_forward.1} parent=1 // pred_region
      _
    $region37: #{cnn_with_tabular_forward.1} parent=1 // pred_fallthru
      _
    // Predicated region
    $region38: #{cnn_with_tabular_forward.1} parent=1 // pred_check
      _
    $region39: #{cnn_with_tabular_forward.1} parent=1 // pred_check_branch
      %37 = sbr.rel (0) target = $region41
    $region40: #{cnn_with_tabular_forward.1} parent=1 // pred_region
      _
    $region41: #{cnn_with_tabular_forward.1} parent=1 // pred_fallthru
      _
    // Predicated region
    $region42: #{cnn_with_tabular_forward.1} parent=1 // pred_check
      _
    $region43: #{cnn_with_tabular_forward.1} parent=1 // pred_check_branch
      %39 = sbr.rel (0) target = $region45
    $region44: #{cnn_with_tabular_forward.1} parent=1 // pred_region
      _
    $region45: #{cnn_with_tabular_forward.1} parent=1 // pred_fallthru
      _
    // Predicated region
    $region46: #{cnn_with_tabular_forward.1} parent=1 // pred_check
      _
    $region47: #{cnn_with_tabular_forward.1} parent=1 // pred_check_branch
      %41 = sbr.rel (0) target = $region49
    $region48: #{cnn_with_tabular_forward.1} parent=1 // pred_region
      _
    $region49: #{cnn_with_tabular_forward.1} parent=1 // pred_fallthru
      _
    %v43 = vld [vmem:[%s0] sm:$0xff]
    %v44 = vld [vmem:[%s0 + $0x8] sm:$0xff]
    %v45 = vld [vmem:[%s0 + $0x10] sm:$0xff]
    %v46 = vld [vmem:[%s0 + $0x18] sm:$0xff]
    %v47 = vld [vmem:[%s0 + $0x20] sm:$0xff]
    %v48 = vld [vmem:[%s0 + $0x28] sm:$0xff]
    %v49 = vld [vmem:[%s0 + $0x30] sm:$0xff]
    %v50 = vld [vmem:[%s0 + $0x38] sm:$0xff]
    %v51 = vld [vmem:[%s0 + $0x40] sm:$0xff]
    %v52 = vld [vmem:[%s0 + $0x48] sm:$0xff]
    %v53 = vld [vmem:[%s0 + $0x50] sm:$0xff]
    %v54 = vld [vmem:[%s0 + $0x58] sm:$0xff]
    %v55 = vld [vmem:[%s0 + $0x60] sm:$0xff]
    %v56 = vld [vmem:[%s0 + $0x68] sm:$0xff]
    %v57 = vld [vmem:[%s0 + $0x70] sm:$0xff]
    %v58 = vld [vmem:[%s0 + $0x78] sm:$0xff]
    %v59 = vpack.c.bf16 %v44, %v43
    %v60 = vpack.c.bf16 %v46, %v45
    %v61 = vpack.c.bf16 %v48, %v47
    %v62 = vpack.c.bf16 %v50, %v49
    %v63 = vpack.c.bf16 %v52, %v51
    %v64 = vpack.c.bf16 %v54, %v53
    %v65 = vpack.c.bf16 %v56, %v55
    %v66 = vpack.c.bf16 %v58, %v57
    %v67 = vld [vmem:[%s3] sm:$0xf]
    %v68 = vld [vmem:[%s3 + $0x4] sm:$0xf]
    %v69 = vld [vmem:[%s3 + $0x8] sm:$0xf]
    %v70 = vld [vmem:[%s3 + $0xc] sm:$0x3]
    %v71 = vld [vmem:[%s4] sm:$0x1]
    %v73 = vlaneseq
    %v74 = vshrl.u32 %v73, 7
    %v75 = vsub.s32 0, %v74
    %v76 = vrot.slane %v71, %v75
    %v82 = vunpack.c.l.b16 %v67
    %v83 = vunpack.c.l.b16 %v68
    %v84 = vunpack.c.l.b16 %v69
    %v85 = vunpack.c.l.b16 %v70
    %v86 = vpack.c.b16 %v83, %v82
    %v87 = vpack.c.b16 %v85, %v84
    %vm89 = vcmask 220160
    %v91 = vsel %vm89, %v59, 0
    %v94 = vsel %vm89, %v60, 0
    %v97 = vsel %vm89, %v61, 0
    %v100 = vsel %vm89, %v62, 0
    %v103 = vsel %vm89, %v63, 0
    %v106 = vsel %vm89, %v64, 0
    %v109 = vsel %vm89, %v65, 0
    %v112 = vsel %vm89, %v66, 0
    %vm114 = vcmask 1044480
    %vm115 = vcmask 1045504
    %v116 = vsel %vm114, 4294967295, 65535
    %v117 = vsel %vm115, %v116, 0
    %v119 = vand.u32 %v87, %v117
    %121 = vmatprep.subr.bf16.mxu0 0
    %122 = vmatpush1.bf16.msra.mxu0 %v86
    %123 = vmatprep.subr.bf16.mxu0 0
    %124 = vmatpush1.bf16.msra.mxu0 %v119
    %125 = vmatprep.subr.bf16.mxu0 0
    %126 = vmatpush1.bf16.msra.mxu0 0
    %127 = vmatprep.subr.bf16.mxu0 0
    %128 = vmatpush1.bf16.msra.mxu0 0
    %129 = vmatprep.subr.bf16.mxu0 0
    %130 = vmatpush1.bf16.msra.mxu0 0
    %131 = vmatprep.subr.bf16.mxu0 0
    %132 = vmatpush1.bf16.msra.mxu0 0
    %133 = vmatprep.subr.bf16.mxu0 0
    %134 = vmatpush1.bf16.msra.mxu0 0
    %135 = vmatprep.subr.bf16.mxu0 0
    %136 = vmatpush1.bf16.msra.mxu0 0
    %137 = vmatprep.subr.bf16.mxu0 0
    %138 = vmatpush1.bf16.msra.mxu0 0
    %139 = vmatprep.subr.bf16.mxu0 0
    %140 = vmatpush1.bf16.msra.mxu0 0
    %141 = vmatprep.subr.bf16.mxu0 0
    %142 = vmatpush1.bf16.msra.mxu0 0
    %143 = vmatprep.subr.bf16.mxu0 0
    %144 = vmatpush1.bf16.msra.mxu0 0
    %145 = vmatprep.subr.bf16.mxu0 0
    %146 = vmatpush1.bf16.msra.mxu0 0
    %147 = vmatprep.subr.bf16.mxu0 0
    %148 = vmatpush1.bf16.msra.mxu0 0
    %149 = vmatprep.subr.bf16.mxu0 0
    %150 = vmatpush1.bf16.msra.mxu0 0
    %151 = vmatprep.subr.bf16.mxu0 0
    %152 = vmatpush1.bf16.msra.mxu0 0
    %153 = vmatprep.mubr.bf16.mxu0 0
    %154 = vmatmul.mubr.bf16.gmra.mrb[0].mxu0 %v91
    %v155 = vpop.f32.mrb[0].mxu0
    %v156 = vadd.f32 %v76, %v155
    %v157 = vpop.f32.mrb[0].mxu0
    %v158 = vpop.f32.mrb[0].mxu0
    %v159 = vadd.f32 %v76, %v158
    %v160 = vpop.f32.mrb[0].mxu0
    %161 = vmatprep.mubr.bf16.mxu0 0
    %162 = vmatmul.mubr.bf16.gmra.mrb[0].mxu0 %v94
    %v163 = vpop.f32.mrb[0].mxu0
    %v164 = vadd.f32 %v76, %v163
    %v165 = vpop.f32.mrb[0].mxu0
    %v166 = vpop.f32.mrb[0].mxu0
    %v167 = vadd.f32 %v76, %v166
    %v168 = vpop.f32.mrb[0].mxu0
    %169 = vmatprep.mubr.bf16.mxu0 0
    %170 = vmatmul.mubr.bf16.gmra.mrb[0].mxu0 %v97
    %v171 = vpop.f32.mrb[0].mxu0
    %v172 = vadd.f32 %v76, %v171
    %v173 = vpop.f32.mrb[0].mxu0
    %v174 = vpop.f32.mrb[0].mxu0
    %v175 = vadd.f32 %v76, %v174
    %v176 = vpop.f32.mrb[0].mxu0
    %177 = vmatprep.mubr.bf16.mxu0 0
    %178 = vmatmul.mubr.bf16.gmra.mrb[0].mxu0 %v100
    %v179 = vpop.f32.mrb[0].mxu0
    %v180 = vadd.f32 %v76, %v179
    %v181 = vpop.f32.mrb[0].mxu0
    %v182 = vpop.f32.mrb[0].mxu0
    %v183 = vadd.f32 %v76, %v182
    %v184 = vpop.f32.mrb[0].mxu0
    %185 = vmatprep.mubr.bf16.mxu0 0
    %186 = vmatmul.mubr.bf16.gmra.mrb[0].mxu0 %v103
    %v187 = vpop.f32.mrb[0].mxu0
    %v188 = vadd.f32 %v76, %v187
    %v189 = vpop.f32.mrb[0].mxu0
    %v190 = vpop.f32.mrb[0].mxu0
    %v191 = vadd.f32 %v76, %v190
    %v192 = vpop.f32.mrb[0].mxu0
    %193 = vmatprep.mubr.bf16.mxu0 0
    %194 = vmatmul.mubr.bf16.gmra.mrb[0].mxu0 %v106
    %v195 = vpop.f32.mrb[0].mxu0
    %v196 = vadd.f32 %v76, %v195
    %v197 = vpop.f32.mrb[0].mxu0
    %v198 = vpop.f32.mrb[0].mxu0
    %v199 = vadd.f32 %v76, %v198
    %v200 = vpop.f32.mrb[0].mxu0
    %201 = vmatprep.mubr.bf16.mxu0 0
    %202 = vmatmul.mubr.bf16.gmra.mrb[0].mxu0 %v109
    %v203 = vpop.f32.mrb[0].mxu0
    %v204 = vadd.f32 %v76, %v203
    %v205 = vpop.f32.mrb[0].mxu0
    %v206 = vpop.f32.mrb[0].mxu0
    %v207 = vadd.f32 %v76, %v206
    %v208 = vpop.f32.mrb[0].mxu0
    %209 = vmatprep.mubr.bf16.mxu0 0
    %210 = vmatmul.mubr.bf16.gmra.mrb[0].mxu0 %v112
    %v211 = vpop.f32.mrb[0].mxu0
    %v212 = vadd.f32 %v76, %v211
    %v213 = vpop.f32.mrb[0].mxu0
    %v214 = vpop.f32.mrb[0].mxu0
    %v215 = vadd.f32 %v76, %v214
    %v216 = vpop.f32.mrb[0].mxu0
    %217 = vdwg.mxu0
    %v218 = vand.u32 2147483647, %v156
    %v219 = vand.u32 2147483647, %v159
    %v220 = vand.u32 2147483647, %v164
    %v221 = vand.u32 2147483647, %v167
    %v222 = vand.u32 2147483647, %v172
    %v223 = vand.u32 2147483647, %v175
    %v224 = vand.u32 2147483647, %v180
    %v225 = vand.u32 2147483647, %v183
    %v226 = vand.u32 2147483647, %v188
    %v227 = vand.u32 2147483647, %v191
    %v228 = vand.u32 2147483647, %v196
    %v229 = vand.u32 2147483647, %v199
    %v230 = vand.u32 2147483647, %v204
    %v231 = vand.u32 2147483647, %v207
    %v232 = vand.u32 2147483647, %v212
    %v233 = vand.u32 2147483647, %v215
    %v234 = vsub.f32 0.0, %v218
    %v235 = vsub.f32 0.0, %v219
    %v236 = vsub.f32 0.0, %v220
    %v237 = vsub.f32 0.0, %v221
    %v238 = vsub.f32 0.0, %v222
    %v239 = vsub.f32 0.0, %v223
    %v240 = vsub.f32 0.0, %v224
    %v241 = vsub.f32 0.0, %v225
    %v242 = vsub.f32 0.0, %v226
    %v243 = vsub.f32 0.0, %v227
    %v244 = vsub.f32 0.0, %v228
    %v245 = vsub.f32 0.0, %v229
    %v246 = vsub.f32 0.0, %v230
    %v247 = vsub.f32 0.0, %v231
    %v248 = vsub.f32 0.0, %v232
    %v249 = vsub.f32 0.0, %v233
    %v250 = vmul.f32 %v234, 1.442695
    %v251 = vpow.pop %v250
    %v252 = vmul.f32 %v235, 1.442695
    %v253 = vpow.pop %v252
    %v254 = vmul.f32 %v236, 1.442695
    %v255 = vpow.pop %v254
    %v256 = vmul.f32 %v237, 1.442695
    %v257 = vpow.pop %v256
    %v258 = vmul.f32 %v238, 1.442695
    %v259 = vpow.pop %v258
    %v260 = vmul.f32 %v239, 1.442695
    %v261 = vpow.pop %v260
    %v262 = vmul.f32 %v240, 1.442695
    %v263 = vpow.pop %v262
    %v264 = vmul.f32 %v241, 1.442695
    %v265 = vpow.pop %v264
    %v266 = vmul.f32 %v242, 1.442695
    %v267 = vpow.pop %v266
    %v268 = vmul.f32 %v243, 1.442695
    %v269 = vpow.pop %v268
    %v270 = vmul.f32 %v244, 1.442695
    %v271 = vpow.pop %v270
    %v272 = vmul.f32 %v245, 1.442695
    %v273 = vpow.pop %v272
    %v274 = vmul.f32 %v246, 1.442695
    %v275 = vpow.pop %v274
    %v276 = vmul.f32 %v247, 1.442695
    %v277 = vpow.pop %v276
    %v278 = vmul.f32 %v248, 1.442695
    %v279 = vpow.pop %v278
    %v280 = vmul.f32 %v249, 1.442695
    %v281 = vpow.pop %v280
    %v282 = vadd.f32 %v251, 1.0
    %v283 = vadd.f32 %v253, 1.0
    %v284 = vadd.f32 %v255, 1.0
    %v285 = vadd.f32 %v257, 1.0
    %v286 = vadd.f32 %v259, 1.0
    %v287 = vadd.f32 %v261, 1.0
    %v288 = vadd.f32 %v263, 1.0
    %v289 = vadd.f32 %v265, 1.0
    %v290 = vadd.f32 %v267, 1.0
    %v291 = vadd.f32 %v269, 1.0
    %v292 = vadd.f32 %v271, 1.0
    %v293 = vadd.f32 %v273, 1.0
    %v294 = vadd.f32 %v275, 1.0
    %v295 = vadd.f32 %v277, 1.0
    %v296 = vadd.f32 %v279, 1.0
    %v297 = vadd.f32 %v281, 1.0
    %v298 = vrcp.pop %v282
    %v299 = vrcp.pop %v283
    %v300 = vrcp.pop %v284
    %v301 = vrcp.pop %v285
    %v302 = vrcp.pop %v286
    %v303 = vrcp.pop %v287
    %v304 = vrcp.pop %v288
    %v305 = vrcp.pop %v289
    %v306 = vrcp.pop %v290
    %v307 = vrcp.pop %v291
    %v308 = vrcp.pop %v292
    %v309 = vrcp.pop %v293
    %v310 = vrcp.pop %v294
    %v311 = vrcp.pop %v295
    %v312 = vrcp.pop %v296
    %v313 = vrcp.pop %v297
    %vm314 = vcmp.ge.f32.partialorder %v156, 0.0
    %vm315 = vcmp.ge.f32.partialorder %v159, 0.0
    %vm316 = vcmp.ge.f32.partialorder %v164, 0.0
    %vm317 = vcmp.ge.f32.partialorder %v167, 0.0
    %vm318 = vcmp.ge.f32.partialorder %v172, 0.0
    %vm319 = vcmp.ge.f32.partialorder %v175, 0.0
    %vm320 = vcmp.ge.f32.partialorder %v180, 0.0
    %vm321 = vcmp.ge.f32.partialorder %v183, 0.0
    %vm322 = vcmp.ge.f32.partialorder %v188, 0.0
    %vm323 = vcmp.ge.f32.partialorder %v191, 0.0
    %vm324 = vcmp.ge.f32.partialorder %v196, 0.0
    %vm325 = vcmp.ge.f32.partialorder %v199, 0.0
    %vm326 = vcmp.ge.f32.partialorder %v204, 0.0
    %vm327 = vcmp.ge.f32.partialorder %v207, 0.0
    %vm328 = vcmp.ge.f32.partialorder %v212, 0.0
    %vm329 = vcmp.ge.f32.partialorder %v215, 0.0
    %v330 = vmul.f32 %v251, %v298
    %v331 = vmul.f32 %v253, %v299
    %v332 = vmul.f32 %v255, %v300
    %v333 = vmul.f32 %v257, %v301
    %v334 = vmul.f32 %v259, %v302
    %v335 = vmul.f32 %v261, %v303
    %v336 = vmul.f32 %v263, %v304
    %v337 = vmul.f32 %v265, %v305
    %v338 = vmul.f32 %v267, %v306
    %v339 = vmul.f32 %v269, %v307
    %v340 = vmul.f32 %v271, %v308
    %v341 = vmul.f32 %v273, %v309
    %v342 = vmul.f32 %v275, %v310
    %v343 = vmul.f32 %v277, %v311
    %v344 = vmul.f32 %v279, %v312
    %v345 = vmul.f32 %v281, %v313
    %v346 = vsel %vm314, %v298, %v330
    %v347 = vsel %vm315, %v299, %v331
    %v348 = vsel %vm316, %v300, %v332
    %v349 = vsel %vm317, %v301, %v333
    %v350 = vsel %vm318, %v302, %v334
    %v351 = vsel %vm319, %v303, %v335
    %v352 = vsel %vm320, %v304, %v336
    %v353 = vsel %vm321, %v305, %v337
    %v354 = vsel %vm322, %v306, %v338
    %v355 = vsel %vm323, %v307, %v339
    %v356 = vsel %vm324, %v308, %v340
    %v357 = vsel %vm325, %v309, %v341
    %v358 = vsel %vm326, %v310, %v342
    %v359 = vsel %vm327, %v311, %v343
    %v360 = vsel %vm328, %v312, %v344
    %v361 = vsel %vm329, %v313, %v345
    %v362 = vmul.f32 %v156, %v346
    %v363 = vmul.f32 %v159, %v347
    %v364 = vmul.f32 %v164, %v348
    %v365 = vmul.f32 %v167, %v349
    %v366 = vmul.f32 %v172, %v350
    %v367 = vmul.f32 %v175, %v351
    %v368 = vmul.f32 %v180, %v352
    %v369 = vmul.f32 %v183, %v353
    %v370 = vmul.f32 %v188, %v354
    %v371 = vmul.f32 %v191, %v355
    %v372 = vmul.f32 %v196, %v356
    %v373 = vmul.f32 %v199, %v357
    %v374 = vmul.f32 %v204, %v358
    %v375 = vmul.f32 %v207, %v359
    %v376 = vmul.f32 %v212, %v360
    %v377 = vmul.f32 %v215, %v361
    %v378 = vpack.c.bf16 %v363, %v362
    %v379 = vpack.c.bf16 %v365, %v364
    %v380 = vpack.c.bf16 %v367, %v366
    %v381 = vpack.c.bf16 %v369, %v368
    %v382 = vpack.c.bf16 %v371, %v370
    %v383 = vpack.c.bf16 %v373, %v372
    %v384 = vpack.c.bf16 %v375, %v374
    %v385 = vpack.c.bf16 %v377, %v376
    %v386 = vld [vmem:[%s5] sm:$0xff]
    %v387 = vld [vmem:[%s5 + $0x8] sm:$0xff]
    %v388 = vld [vmem:[%s5 + $0x10] sm:$0xff]
    %v389 = vld [vmem:[%s5 + $0x18] sm:$0xff]
    %v390 = vld [vmem:[%s5 + $0x20] sm:$0xff]
    %v391 = vld [vmem:[%s5 + $0x28] sm:$0xff]
    %v392 = vld [vmem:[%s5 + $0x30] sm:$0xff]
    %v393 = vld [vmem:[%s5 + $0x38] sm:$0xff]
    %v394 = vld [vmem:[%s5 + $0x40] sm:$0xff]
    %v395 = vld [vmem:[%s5 + $0x48] sm:$0xff]
    %v396 = vld [vmem:[%s5 + $0x50] sm:$0xff]
    %v397 = vld [vmem:[%s5 + $0x58] sm:$0xff]
    %v398 = vld [vmem:[%s5 + $0x60] sm:$0xff]
    %v399 = vld [vmem:[%s5 + $0x68] sm:$0xff]
    %v400 = vld [vmem:[%s5 + $0x70] sm:$0xff]
    %v401 = vld [vmem:[%s5 + $0x78] sm:$0xff]
    %v402 = vld [vmem:[%s5 + $0x80] sm:$0xff]
    %v403 = vld [vmem:[%s5 + $0x88] sm:$0xff]
    %v404 = vld [vmem:[%s5 + $0x90] sm:$0xff]
    %v405 = vld [vmem:[%s5 + $0x98] sm:$0xff]
    %v406 = vld [vmem:[%s6] sm:$0xff]
    %v407 = vld [vmem:[%s6 + $0x8] sm:$0x3]
    %v410 = vlaneseq
    %v411 = vshrl.u32 %v410, 7
    %v412 = vsub.s32 0, %v411
    %v413 = vrot.slane %v406, %v412
    %v414 = vlaneseq
    %v415 = vshrl.u32 %v414, 7
    %v416 = vsub.s32 1, %v415
    %v417 = vrot.slane %v406, %v416
    %v418 = vlaneseq
    %v419 = vshrl.u32 %v418, 7
    %v420 = vsub.s32 2, %v419
    %v421 = vrot.slane %v406, %v420
    %v422 = vlaneseq
    %v423 = vshrl.u32 %v422, 7
    %v424 = vsub.s32 3, %v423
    %v425 = vrot.slane %v406, %v424
    %v426 = vlaneseq
    %v427 = vshrl.u32 %v426, 7
    %v428 = vsub.s32 4, %v427
    %v429 = vrot.slane %v406, %v428
    %v430 = vlaneseq
    %v431 = vshrl.u32 %v430, 7
    %v432 = vsub.s32 5, %v431
    %v433 = vrot.slane %v406, %v432
    %v434 = vlaneseq
    %v435 = vshrl.u32 %v434, 7
    %v436 = vsub.s32 6, %v435
    %v437 = vrot.slane %v406, %v436
    %v438 = vlaneseq
    %v439 = vshrl.u32 %v438, 7
    %v440 = vsub.s32 7, %v439
    %v441 = vrot.slane %v406, %v440
    %v442 = vlaneseq
    %v443 = vshrl.u32 %v442, 7
    %v444 = vsub.s32 0, %v443
    %v445 = vrot.slane %v407, %v444
    %v446 = vlaneseq
    %v447 = vshrl.u32 %v446, 7
    %v448 = vsub.s32 1, %v447
    %v449 = vrot.slane %v407, %v448
    %v480 = vunpack.c.l.b16 %v386
    %v481 = vunpack.c.h.b16 %v386
    %v482 = vunpack.c.l.b16 %v387
    %v483 = vunpack.c.h.b16 %v387
    %v484 = vunpack.c.l.b16 %v388
    %v485 = vunpack.c.h.b16 %v388
    %v486 = vunpack.c.l.b16 %v389
    %v487 = vunpack.c.h.b16 %v389
    %v488 = vunpack.c.l.b16 %v390
    %v489 = vunpack.c.h.b16 %v390
    %v490 = vunpack.c.l.b16 %v391
    %v491 = vunpack.c.h.b16 %v391
    %v492 = vunpack.c.l.b16 %v392
    %v493 = vunpack.c.h.b16 %v392
    %v494 = vunpack.c.l.b16 %v393
    %v495 = vunpack.c.h.b16 %v393
    %v496 = vunpack.c.l.b16 %v394
    %v497 = vunpack.c.h.b16 %v394
    %v498 = vunpack.c.l.b16 %v395
    %v499 = vunpack.c.h.b16 %v395
    %v500 = vunpack.c.l.b16 %v396
    %v501 = vunpack.c.h.b16 %v396
    %v502 = vunpack.c.l.b16 %v397
    %v503 = vunpack.c.h.b16 %v397
    %v504 = vunpack.c.l.b16 %v398
    %v505 = vunpack.c.h.b16 %v398
    %v506 = vunpack.c.l.b16 %v399
    %v507 = vunpack.c.h.b16 %v399
    %v508 = vunpack.c.l.b16 %v400
    %v509 = vunpack.c.h.b16 %v400
    %v510 = vunpack.c.l.b16 %v401
    %v511 = vunpack.c.h.b16 %v401
    %v512 = vunpack.c.l.b16 %v402
    %v513 = vunpack.c.h.b16 %v402
    %v514 = vunpack.c.l.b16 %v403
    %v515 = vunpack.c.h.b16 %v403
    %v516 = vunpack.c.l.b16 %v404
    %v517 = vunpack.c.h.b16 %v404
    %v518 = vunpack.c.l.b16 %v405
    %v519 = vunpack.c.h.b16 %v405
    %v520 = vpack.c.b16 %v490, %v480
    %v521 = vpack.c.b16 %v491, %v481
    %v522 = vpack.c.b16 %v492, %v482
    %v523 = vpack.c.b16 %v493, %v483
    %v524 = vpack.c.b16 %v494, %v484
    %v525 = vpack.c.b16 %v495, %v485
    %v526 = vpack.c.b16 %v496, %v486
    %v527 = vpack.c.b16 %v497, %v487
    %v528 = vpack.c.b16 %v498, %v488
    %v529 = vpack.c.b16 %v499, %v489
    %v530 = vpack.c.b16 %v510, %v500
    %v531 = vpack.c.b16 %v511, %v501
    %v532 = vpack.c.b16 %v512, %v502
    %v533 = vpack.c.b16 %v513, %v503
    %v534 = vpack.c.b16 %v514, %v504
    %v535 = vpack.c.b16 %v515, %v505
    %v536 = vpack.c.b16 %v516, %v506
    %v537 = vpack.c.b16 %v517, %v507
    %v538 = vpack.c.b16 %v518, %v508
    %v539 = vpack.c.b16 %v519, %v509
    %vm560 = vcmask 261120
    %v562 = vsel %vm560, %v378, 0
    %v565 = vsel %vm560, %v379, 0
    %v568 = vsel %vm560, %v380, 0
    %v571 = vsel %vm560, %v381, 0
    %v574 = vsel %vm560, %v382, 0
    %v577 = vsel %vm560, %v383, 0
    %v580 = vsel %vm560, %v384, 0
    %v583 = vsel %vm560, %v385, 0
    %585 = vmatprep.subr.bf16.mxu0 %v521
    %586 = vmatpush1.bf16.msra.mxu0 %v520
    %587 = vmatprep.subr.bf16.mxu0 %v531
    %588 = vmatpush1.bf16.msra.mxu0 %v530
    %589 = vmatprep.subr.bf16.mxu0 0
    %590 = vmatpush1.bf16.msra.mxu0 0
    %591 = vmatprep.subr.bf16.mxu0 0
    %592 = vmatpush1.bf16.msra.mxu0 0
    %593 = vmatprep.subr.bf16.mxu0 0
    %594 = vmatpush1.bf16.msra.mxu0 0
    %595 = vmatprep.subr.bf16.mxu0 0
    %596 = vmatpush1.bf16.msra.mxu0 0
    %597 = vmatprep.subr.bf16.mxu0 0
    %598 = vmatpush1.bf16.msra.mxu0 0
    %599 = vmatprep.subr.bf16.mxu0 0
    %600 = vmatpush1.bf16.msra.mxu0 0
    %601 = vmatprep.subr.bf16.mxu0 0
    %602 = vmatpush1.bf16.msra.mxu0 0
    %603 = vmatprep.subr.bf16.mxu0 0
    %604 = vmatpush1.bf16.msra.mxu0 0
    %605 = vmatprep.subr.bf16.mxu0 0
    %606 = vmatpush1.bf16.msra.mxu0 0
    %607 = vmatprep.subr.bf16.mxu0 0
    %608 = vmatpush1.bf16.msra.mxu0 0
    %609 = vmatprep.subr.bf16.mxu0 0
    %610 = vmatpush1.bf16.msra.mxu0 0
    %611 = vmatprep.subr.bf16.mxu0 0
    %612 = vmatpush1.bf16.msra.mxu0 0
    %613 = vmatprep.subr.bf16.mxu0 0
    %614 = vmatpush1.bf16.msra.mxu0 0
    %615 = vmatprep.subr.bf16.mxu0 0
    %616 = vmatpush1.bf16.msra.mxu0 0
    %617 = vmatprep.mubr.bf16.mxu0 0
    %618 = vmatmul.mubr.bf16.gmra.mrb[0].mxu0 %v562
    %v619 = vpop.f32.mrb[0].mxu0
    %v620 = vadd.f32 %v413, %v619
    %v621 = vpop.f32.mrb[0].mxu0
    %v622 = vadd.f32 %v417, %v621
    %v623 = vpop.f32.mrb[0].mxu0
    %v624 = vadd.f32 %v413, %v623
    %v625 = vpop.f32.mrb[0].mxu0
    %v626 = vadd.f32 %v417, %v625
    %627 = vmatprep.mubr.bf16.mxu0 0
    %628 = vmatmul.mubr.bf16.gmra.mrb[0].mxu0 %v565
    %v629 = vpop.f32.mrb[0].mxu0
    %v630 = vadd.f32 %v413, %v629
    %v631 = vpop.f32.mrb[0].mxu0
    %v632 = vadd.f32 %v417, %v631
    %v633 = vpop.f32.mrb[0].mxu0
    %v634 = vadd.f32 %v413, %v633
    %v635 = vpop.f32.mrb[0].mxu0
    %v636 = vadd.f32 %v417, %v635
    %637 = vmatprep.mubr.bf16.mxu0 0
    %638 = vmatmul.mubr.bf16.gmra.mrb[0].mxu0 %v568
    %v639 = vpop.f32.mrb[0].mxu0
    %v640 = vadd.f32 %v413, %v639
    %v641 = vpop.f32.mrb[0].mxu0
    %v642 = vadd.f32 %v417, %v641
    %v643 = vpop.f32.mrb[0].mxu0
    %v644 = vadd.f32 %v413, %v643
    %v645 = vpop.f32.mrb[0].mxu0
    %v646 = vadd.f32 %v417, %v645
    %647 = vmatprep.mubr.bf16.mxu0 0
    %648 = vmatmul.mubr.bf16.gmra.mrb[0].mxu0 %v571
    %v649 = vpop.f32.mrb[0].mxu0
    %v650 = vadd.f32 %v413, %v649
    %v651 = vpop.f32.mrb[0].mxu0
    %v652 = vadd.f32 %v417, %v651
    %v653 = vpop.f32.mrb[0].mxu0
    %v654 = vadd.f32 %v413, %v653
    %v655 = vpop.f32.mrb[0].mxu0
    %v656 = vadd.f32 %v417, %v655
    %657 = vmatprep.mubr.bf16.mxu0 0
    %658 = vmatmul.mubr.bf16.gmra.mrb[0].mxu0 %v574
    %v659 = vpop.f32.mrb[0].mxu0
    %v660 = vadd.f32 %v413, %v659
    %v661 = vpop.f32.mrb[0].mxu0
    %v662 = vadd.f32 %v417, %v661
    %v663 = vpop.f32.mrb[0].mxu0
    %v664 = vadd.f32 %v413, %v663
    %v665 = vpop.f32.mrb[0].mxu0
    %v666 = vadd.f32 %v417, %v665
    %667 = vmatprep.mubr.bf16.mxu0 0
    %668 = vmatmul.mubr.bf16.gmra.mrb[0].mxu0 %v577
    %v669 = vpop.f32.mrb[0].mxu0
    %v670 = vadd.f32 %v413, %v669
    %v671 = vpop.f32.mrb[0].mxu0
    %v672 = vadd.f32 %v417, %v671
    %v673 = vpop.f32.mrb[0].mxu0
    %v674 = vadd.f32 %v413, %v673
    %v675 = vpop.f32.mrb[0].mxu0
    %v676 = vadd.f32 %v417, %v675
    %677 = vmatprep.mubr.bf16.mxu0 0
    %678 = vmatmul.mubr.bf16.gmra.mrb[0].mxu0 %v580
    %v679 = vpop.f32.mrb[0].mxu0
    %v680 = vadd.f32 %v413, %v679
    %v681 = vpop.f32.mrb[0].mxu0
    %v682 = vadd.f32 %v417, %v681
    %v683 = vpop.f32.mrb[0].mxu0
    %v684 = vadd.f32 %v413, %v683
    %v685 = vpop.f32.mrb[0].mxu0
    %v686 = vadd.f32 %v417, %v685
    %687 = vmatprep.mubr.bf16.mxu0 0
    %688 = vmatmul.mubr.bf16.gmra.mrb[0].mxu0 %v583
    %v689 = vpop.f32.mrb[0].mxu0
    %v690 = vadd.f32 %v413, %v689
    %v691 = vpop.f32.mrb[0].mxu0
    %v692 = vadd.f32 %v417, %v691
    %v693 = vpop.f32.mrb[0].mxu0
    %v694 = vadd.f32 %v413, %v693
    %v695 = vpop.f32.mrb[0].mxu0
    %v696 = vadd.f32 %v417, %v695
    %697 = vdwg.mxu0
    %698 = vmatprep.subr.bf16.mxu0 %v523
    %699 = vmatpush1.bf16.msra.mxu0 %v522
    %700 = vmatprep.subr.bf16.mxu0 %v533
    %701 = vmatpush1.bf16.msra.mxu0 %v532
    %702 = vmatprep.subr.bf16.mxu0 0
    %703 = vmatpush1.bf16.msra.mxu0 0
    %704 = vmatprep.subr.bf16.mxu0 0
    %705 = vmatpush1.bf16.msra.mxu0 0
    %706 = vmatprep.subr.bf16.mxu0 0
    %707 = vmatpush1.bf16.msra.mxu0 0
    %708 = vmatprep.subr.bf16.mxu0 0
    %709 = vmatpush1.bf16.msra.mxu0 0
    %710 = vmatprep.subr.bf16.mxu0 0
    %711 = vmatpush1.bf16.msra.mxu0 0
    %712 = vmatprep.subr.bf16.mxu0 0
    %713 = vmatpush1.bf16.msra.mxu0 0
    %714 = vmatprep.subr.bf16.mxu0 0
    %715 = vmatpush1.bf16.msra.mxu0 0
    %716 = vmatprep.subr.bf16.mxu0 0
    %717 = vmatpush1.bf16.msra.mxu0 0
    %718 = vmatprep.subr.bf16.mxu0 0
    %719 = vmatpush1.bf16.msra.mxu0 0
    %720 = vmatprep.subr.bf16.mxu0 0
    %721 = vmatpush1.bf16.msra.mxu0 0
    %722 = vmatprep.subr.bf16.mxu0 0
    %723 = vmatpush1.bf16.msra.mxu0 0
    %724 = vmatprep.subr.bf16.mxu0 0
    %725 = vmatpush1.bf16.msra.mxu0 0
    %726 = vmatprep.subr.bf16.mxu0 0
    %727 = vmatpush1.bf16.msra.mxu0 0
    %728 = vmatprep.subr.bf16.mxu0 0
    %729 = vmatpush1.bf16.msra.mxu0 0
    %730 = vmatprep.mubr.bf16.mxu0 0
    %731 = vmatmul.mubr.bf16.gmra.mrb[0].mxu0 %v562
    %v732 = vpop.f32.mrb[0].mxu0
    %v733 = vadd.f32 %v421, %v732
    %v734 = vpop.f32.mrb[0].mxu0
    %v735 = vadd.f32 %v425, %v734
    %v736 = vpop.f32.mrb[0].mxu0
    %v737 = vadd.f32 %v421, %v736
    %v738 = vpop.f32.mrb[0].mxu0
    %v739 = vadd.f32 %v425, %v738
    %740 = vmatprep.mubr.bf16.mxu0 0
    %741 = vmatmul.mubr.bf16.gmra.mrb[0].mxu0 %v565
    %v742 = vpop.f32.mrb[0].mxu0
    %v743 = vadd.f32 %v421, %v742
    %v744 = vpop.f32.mrb[0].mxu0
    %v745 = vadd.f32 %v425, %v744
    %v746 = vpop.f32.mrb[0].mxu0
    %v747 = vadd.f32 %v421, %v746
    %v748 = vpop.f32.mrb[0].mxu0
    %v749 = vadd.f32 %v425, %v748
    %750 = vmatprep.mubr.bf16.mxu0 0
    %751 = vmatmul.mubr.bf16.gmra.mrb[0].mxu0 %v568
    %v752 = vpop.f32.mrb[0].mxu0
    %v753 = vadd.f32 %v421, %v752
    %v754 = vpop.f32.mrb[0].mxu0
    %v755 = vadd.f32 %v425, %v754
    %v756 = vpop.f32.mrb[0].mxu0
    %v757 = vadd.f32 %v421, %v756
    %v758 = vpop.f32.mrb[0].mxu0
    %v759 = vadd.f32 %v425, %v758
    %760 = vmatprep.mubr.bf16.mxu0 0
    %761 = vmatmul.mubr.bf16.gmra.mrb[0].mxu0 %v571
    %v762 = vpop.f32.mrb[0].mxu0
    %v763 = vadd.f32 %v421, %v762
    %v764 = vpop.f32.mrb[0].mxu0
    %v765 = vadd.f32 %v425, %v764
    %v766 = vpop.f32.mrb[0].mxu0
    %v767 = vadd.f32 %v421, %v766
    %v768 = vpop.f32.mrb[0].mxu0
    %v769 = vadd.f32 %v425, %v768
    %770 = vmatprep.mubr.bf16.mxu0 0
    %771 = vmatmul.mubr.bf16.gmra.mrb[0].mxu0 %v574
    %v772 = vpop.f32.mrb[0].mxu0
    %v773 = vadd.f32 %v421, %v772
    %v774 = vpop.f32.mrb[0].mxu0
    %v775 = vadd.f32 %v425, %v774
    %v776 = vpop.f32.mrb[0].mxu0
    %v777 = vadd.f32 %v421, %v776
    %v778 = vpop.f32.mrb[0].mxu0
    %v779 = vadd.f32 %v425, %v778
    %780 = vmatprep.mubr.bf16.mxu0 0
    %781 = vmatmul.mubr.bf16.gmra.mrb[0].mxu0 %v577
    %v782 = vpop.f32.mrb[0].mxu0
    %v783 = vadd.f32 %v421, %v782
    %v784 = vpop.f32.mrb[0].mxu0
    %v785 = vadd.f32 %v425, %v784
    %v786 = vpop.f32.mrb[0].mxu0
    %v787 = vadd.f32 %v421, %v786
    %v788 = vpop.f32.mrb[0].mxu0
    %v789 = vadd.f32 %v425, %v788
    %790 = vmatprep.mubr.bf16.mxu0 0
    %791 = vmatmul.mubr.bf16.gmra.mrb[0].mxu0 %v580
    %v792 = vpop.f32.mrb[0].mxu0
    %v793 = vadd.f32 %v421, %v792
    %v794 = vpop.f32.mrb[0].mxu0
    %v795 = vadd.f32 %v425, %v794
    %v796 = vpop.f32.mrb[0].mxu0
    %v797 = vadd.f32 %v421, %v796
    %v798 = vpop.f32.mrb[0].mxu0
    %v799 = vadd.f32 %v425, %v798
    %800 = vmatprep.mubr.bf16.mxu0 0
    %801 = vmatmul.mubr.bf16.gmra.mrb[0].mxu0 %v583
    %v802 = vpop.f32.mrb[0].mxu0
    %v803 = vadd.f32 %v421, %v802
    %v804 = vpop.f32.mrb[0].mxu0
    %v805 = vadd.f32 %v425, %v804
    %v806 = vpop.f32.mrb[0].mxu0
    %v807 = vadd.f32 %v421, %v806
    %v808 = vpop.f32.mrb[0].mxu0
    %v809 = vadd.f32 %v425, %v808
    %810 = vdwg.mxu0
    %811 = vmatprep.subr.bf16.mxu0 %v525
    %812 = vmatpush1.bf16.msra.mxu0 %v524
    %813 = vmatprep.subr.bf16.mxu0 %v535
    %814 = vmatpush1.bf16.msra.mxu0 %v534
    %815 = vmatprep.subr.bf16.mxu0 0
    %816 = vmatpush1.bf16.msra.mxu0 0
    %817 = vmatprep.subr.bf16.mxu0 0
    %818 = vmatpush1.bf16.msra.mxu0 0
    %819 = vmatprep.subr.bf16.mxu0 0
    %820 = vmatpush1.bf16.msra.mxu0 0
    %821 = vmatprep.subr.bf16.mxu0 0
    %822 = vmatpush1.bf16.msra.mxu0 0
    %823 = vmatprep.subr.bf16.mxu0 0
    %824 = vmatpush1.bf16.msra.mxu0 0
    %825 = vmatprep.subr.bf16.mxu0 0
    %826 = vmatpush1.bf16.msra.mxu0 0
    %827 = vmatprep.subr.bf16.mxu0 0
    %828 = vmatpush1.bf16.msra.mxu0 0
    %829 = vmatprep.subr.bf16.mxu0 0
    %830 = vmatpush1.bf16.msra.mxu0 0
    %831 = vmatprep.subr.bf16.mxu0 0
    %832 = vmatpush1.bf16.msra.mxu0 0
    %833 = vmatprep.subr.bf16.mxu0 0
    %834 = vmatpush1.bf16.msra.mxu0 0
    %835 = vmatprep.subr.bf16.mxu0 0
    %836 = vmatpush1.bf16.msra.mxu0 0
    %837 = vmatprep.subr.bf16.mxu0 0
    %838 = vmatpush1.bf16.msra.mxu0 0
    %839 = vmatprep.subr.bf16.mxu0 0
    %840 = vmatpush1.bf16.msra.mxu0 0
    %841 = vmatprep.subr.bf16.mxu0 0
    %842 = vmatpush1.bf16.msra.mxu0 0
    %843 = vmatprep.mubr.bf16.mxu0 0
    %844 = vmatmul.mubr.bf16.gmra.mrb[0].mxu0 %v562
    %v845 = vpop.f32.mrb[0].mxu0
    %v846 = vadd.f32 %v429, %v845
    %v847 = vpop.f32.mrb[0].mxu0
    %v848 = vadd.f32 %v433, %v847
    %v849 = vpop.f32.mrb[0].mxu0
    %v850 = vadd.f32 %v429, %v849
    %v851 = vpop.f32.mrb[0].mxu0
    %v852 = vadd.f32 %v433, %v851
    %853 = vmatprep.mubr.bf16.mxu0 0
    %854 = vmatmul.mubr.bf16.gmra.mrb[0].mxu0 %v565
    %v855 = vpop.f32.mrb[0].mxu0
    %v856 = vadd.f32 %v429, %v855
    %v857 = vpop.f32.mrb[0].mxu0
    %v858 = vadd.f32 %v433, %v857
    %v859 = vpop.f32.mrb[0].mxu0
    %v860 = vadd.f32 %v429, %v859
    %v861 = vpop.f32.mrb[0].mxu0
    %v862 = vadd.f32 %v433, %v861
    %863 = vmatprep.mubr.bf16.mxu0 0
    %864 = vmatmul.mubr.bf16.gmra.mrb[0].mxu0 %v568
    %v865 = vpop.f32.mrb[0].mxu0
    %v866 = vadd.f32 %v429, %v865
    %v867 = vpop.f32.mrb[0].mxu0
    %v868 = vadd.f32 %v433, %v867
    %v869 = vpop.f32.mrb[0].mxu0
    %v870 = vadd.f32 %v429, %v869
    %v871 = vpop.f32.mrb[0].mxu0
    %v872 = vadd.f32 %v433, %v871
    %873 = vmatprep.mubr.bf16.mxu0 0
    %874 = vmatmul.mubr.bf16.gmra.mrb[0].mxu0 %v571
    %v875 = vpop.f32.mrb[0].mxu0
    %v876 = vadd.f32 %v429, %v875
    %v877 = vpop.f32.mrb[0].mxu0
    %v878 = vadd.f32 %v433, %v877
    %v879 = vpop.f32.mrb[0].mxu0
    %v880 = vadd.f32 %v429, %v879
    %v881 = vpop.f32.mrb[0].mxu0
    %v882 = vadd.f32 %v433, %v881
    %883 = vmatprep.mubr.bf16.mxu0 0
    %884 = vmatmul.mubr.bf16.gmra.mrb[0].mxu0 %v574
    %v885 = vpop.f32.mrb[0].mxu0
    %v886 = vadd.f32 %v429, %v885
    %v887 = vpop.f32.mrb[0].mxu0
    %v888 = vadd.f32 %v433, %v887
    %v889 = vpop.f32.mrb[0].mxu0
    %v890 = vadd.f32 %v429, %v889
    %v891 = vpop.f32.mrb[0].mxu0
    %v892 = vadd.f32 %v433, %v891
    %893 = vmatprep.mubr.bf16.mxu0 0
    %894 = vmatmul.mubr.bf16.gmra.mrb[0].mxu0 %v577
    %v895 = vpop.f32.mrb[0].mxu0
    %v896 = vadd.f32 %v429, %v895
    %v897 = vpop.f32.mrb[0].mxu0
    %v898 = vadd.f32 %v433, %v897
    %v899 = vpop.f32.mrb[0].mxu0
    %v900 = vadd.f32 %v429, %v899
    %v901 = vpop.f32.mrb[0].mxu0
    %v902 = vadd.f32 %v433, %v901
    %903 = vmatprep.mubr.bf16.mxu0 0
    %904 = vmatmul.mubr.bf16.gmra.mrb[0].mxu0 %v580
    %v905 = vpop.f32.mrb[0].mxu0
    %v906 = vadd.f32 %v429, %v905
    %v907 = vpop.f32.mrb[0].mxu0
    %v908 = vadd.f32 %v433, %v907
    %v909 = vpop.f32.mrb[0].mxu0
    %v910 = vadd.f32 %v429, %v909
    %v911 = vpop.f32.mrb[0].mxu0
    %v912 = vadd.f32 %v433, %v911
    %913 = vmatprep.mubr.bf16.mxu0 0
    %914 = vmatmul.mubr.bf16.gmra.mrb[0].mxu0 %v583
    %v915 = vpop.f32.mrb[0].mxu0
    %v916 = vadd.f32 %v429, %v915
    %v917 = vpop.f32.mrb[0].mxu0
    %v918 = vadd.f32 %v433, %v917
    %v919 = vpop.f32.mrb[0].mxu0
    %v920 = vadd.f32 %v429, %v919
    %v921 = vpop.f32.mrb[0].mxu0
    %v922 = vadd.f32 %v433, %v921
    %923 = vdwg.mxu0
    %924 = vmatprep.subr.bf16.mxu0 %v527
    %925 = vmatpush1.bf16.msra.mxu0 %v526
    %926 = vmatprep.subr.bf16.mxu0 %v537
    %927 = vmatpush1.bf16.msra.mxu0 %v536
    %928 = vmatprep.subr.bf16.mxu0 0
    %929 = vmatpush1.bf16.msra.mxu0 0
    %930 = vmatprep.subr.bf16.mxu0 0
    %931 = vmatpush1.bf16.msra.mxu0 0
    %932 = vmatprep.subr.bf16.mxu0 0
    %933 = vmatpush1.bf16.msra.mxu0 0
    %934 = vmatprep.subr.bf16.mxu0 0
    %935 = vmatpush1.bf16.msra.mxu0 0
    %936 = vmatprep.subr.bf16.mxu0 0
    %937 = vmatpush1.bf16.msra.mxu0 0
    %938 = vmatprep.subr.bf16.mxu0 0
    %939 = vmatpush1.bf16.msra.mxu0 0
    %940 = vmatprep.subr.bf16.mxu0 0
    %941 = vmatpush1.bf16.msra.mxu0 0
    %942 = vmatprep.subr.bf16.mxu0 0
    %943 = vmatpush1.bf16.msra.mxu0 0
    %944 = vmatprep.subr.bf16.mxu0 0
    %945 = vmatpush1.bf16.msra.mxu0 0
    %946 = vmatprep.subr.bf16.mxu0 0
    %947 = vmatpush1.bf16.msra.mxu0 0
    %948 = vmatprep.subr.bf16.mxu0 0
    %949 = vmatpush1.bf16.msra.mxu0 0
    %950 = vmatprep.subr.bf16.mxu0 0
    %951 = vmatpush1.bf16.msra.mxu0 0
    %952 = vmatprep.subr.bf16.mxu0 0
    %953 = vmatpush1.bf16.msra.mxu0 0
    %954 = vmatprep.subr.bf16.mxu0 0
    %955 = vmatpush1.bf16.msra.mxu0 0
    %956 = vmatprep.mubr.bf16.mxu0 0
    %957 = vmatmul.mubr.bf16.gmra.mrb[0].mxu0 %v562
    %v958 = vpop.f32.mrb[0].mxu0
    %v959 = vadd.f32 %v437, %v958
    %v960 = vpop.f32.mrb[0].mxu0
    %v961 = vadd.f32 %v441, %v960
    %v962 = vpop.f32.mrb[0].mxu0
    %v963 = vadd.f32 %v437, %v962
    %v964 = vpop.f32.mrb[0].mxu0
    %v965 = vadd.f32 %v441, %v964
    %966 = vmatprep.mubr.bf16.mxu0 0
    %967 = vmatmul.mubr.bf16.gmra.mrb[0].mxu0 %v565
    %v968 = vpop.f32.mrb[0].mxu0
    %v969 = vadd.f32 %v437, %v968
    %v970 = vpop.f32.mrb[0].mxu0
    %v971 = vadd.f32 %v441, %v970
    %v972 = vpop.f32.mrb[0].mxu0
    %v973 = vadd.f32 %v437, %v972
    %v974 = vpop.f32.mrb[0].mxu0
    %v975 = vadd.f32 %v441, %v974
    %976 = vmatprep.mubr.bf16.mxu0 0
    %977 = vmatmul.mubr.bf16.gmra.mrb[0].mxu0 %v568
    %v978 = vpop.f32.mrb[0].mxu0
    %v979 = vadd.f32 %v437, %v978
    %v980 = vpop.f32.mrb[0].mxu0
    %v981 = vadd.f32 %v441, %v980
    %v982 = vpop.f32.mrb[0].mxu0
    %v983 = vadd.f32 %v437, %v982
    %v984 = vpop.f32.mrb[0].mxu0
    %v985 = vadd.f32 %v441, %v984
    %986 = vmatprep.mubr.bf16.mxu0 0
    %987 = vmatmul.mubr.bf16.gmra.mrb[0].mxu0 %v571
    %v988 = vpop.f32.mrb[0].mxu0
    %v989 = vadd.f32 %v437, %v988
    %v990 = vpop.f32.mrb[0].mxu0
    %v991 = vadd.f32 %v441, %v990
    %v992 = vpop.f32.mrb[0].mxu0
    %v993 = vadd.f32 %v437, %v992
    %v994 = vpop.f32.mrb[0].mxu0
    %v995 = vadd.f32 %v441, %v994
    %996 = vmatprep.mubr.bf16.mxu0 0
    %997 = vmatmul.mubr.bf16.gmra.mrb[0].mxu0 %v574
    %v998 = vpop.f32.mrb[0].mxu0
    %v999 = vadd.f32 %v437, %v998
    %v1000 = vpop.f32.mrb[0].mxu0
    %v1001 = vadd.f32 %v441, %v1000
    %v1002 = vpop.f32.mrb[0].mxu0
    %v1003 = vadd.f32 %v437, %v1002
    %v1004 = vpop.f32.mrb[0].mxu0
    %v1005 = vadd.f32 %v441, %v1004
    %1006 = vmatprep.mubr.bf16.mxu0 0
    %1007 = vmatmul.mubr.bf16.gmra.mrb[0].mxu0 %v577
    %v1008 = vpop.f32.mrb[0].mxu0
    %v1009 = vadd.f32 %v437, %v1008
    %v1010 = vpop.f32.mrb[0].mxu0
    %v1011 = vadd.f32 %v441, %v1010
    %v1012 = vpop.f32.mrb[0].mxu0
    %v1013 = vadd.f32 %v437, %v1012
    %v1014 = vpop.f32.mrb[0].mxu0
    %v1015 = vadd.f32 %v441, %v1014
    %1016 = vmatprep.mubr.bf16.mxu0 0
    %1017 = vmatmul.mubr.bf16.gmra.mrb[0].mxu0 %v580
    %v1018 = vpop.f32.mrb[0].mxu0
    %v1019 = vadd.f32 %v437, %v1018
    %v1020 = vpop.f32.mrb[0].mxu0
    %v1021 = vadd.f32 %v441, %v1020
    %v1022 = vpop.f32.mrb[0].mxu0
    %v1023 = vadd.f32 %v437, %v1022
    %v1024 = vpop.f32.mrb[0].mxu0
    %v1025 = vadd.f32 %v441, %v1024
    %1026 = vmatprep.mubr.bf16.mxu0 0
    %1027 = vmatmul.mubr.bf16.gmra.mrb[0].mxu0 %v583
    %v1028 = vpop.f32.mrb[0].mxu0
    %v1029 = vadd.f32 %v437, %v1028
    %v1030 = vpop.f32.mrb[0].mxu0
    %v1031 = vadd.f32 %v441, %v1030
    %v1032 = vpop.f32.mrb[0].mxu0
    %v1033 = vadd.f32 %v437, %v1032
    %v1034 = vpop.f32.mrb[0].mxu0
    %v1035 = vadd.f32 %v441, %v1034
    %1036 = vdwg.mxu0
    %1037 = vmatprep.subr.bf16.mxu0 %v529
    %1038 = vmatpush1.bf16.msra.mxu0 %v528
    %1039 = vmatprep.subr.bf16.mxu0 %v539
    %1040 = vmatpush1.bf16.msra.mxu0 %v538
    %1041 = vmatprep.subr.bf16.mxu0 0
    %1042 = vmatpush1.bf16.msra.mxu0 0
    %1043 = vmatprep.subr.bf16.mxu0 0
    %1044 = vmatpush1.bf16.msra.mxu0 0
    %1045 = vmatprep.subr.bf16.mxu0 0
    %1046 = vmatpush1.bf16.msra.mxu0 0
    %1047 = vmatprep.subr.bf16.mxu0 0
    %1048 = vmatpush1.bf16.msra.mxu0 0
    %1049 = vmatprep.subr.bf16.mxu0 0
    %1050 = vmatpush1.bf16.msra.mxu0 0
    %1051 = vmatprep.subr.bf16.mxu0 0
    %1052 = vmatpush1.bf16.msra.mxu0 0
    %1053 = vmatprep.subr.bf16.mxu0 0
    %1054 = vmatpush1.bf16.msra.mxu0 0
    %1055 = vmatprep.subr.bf16.mxu0 0
    %1056 = vmatpush1.bf16.msra.mxu0 0
    %1057 = vmatprep.subr.bf16.mxu0 0
    %1058 = vmatpush1.bf16.msra.mxu0 0
    %1059 = vmatprep.subr.bf16.mxu0 0
    %1060 = vmatpush1.bf16.msra.mxu0 0
    %1061 = vmatprep.subr.bf16.mxu0 0
    %1062 = vmatpush1.bf16.msra.mxu0 0
    %1063 = vmatprep.subr.bf16.mxu0 0
    %1064 = vmatpush1.bf16.msra.mxu0 0
    %1065 = vmatprep.subr.bf16.mxu0 0
    %1066 = vmatpush1.bf16.msra.mxu0 0
    %1067 = vmatprep.subr.bf16.mxu0 0
    %1068 = vmatpush1.bf16.msra.mxu0 0
    %1069 = vmatprep.mubr.bf16.mxu0 0
    %1070 = vmatmul.mubr.bf16.gmra.mrb[0].mxu0 %v562
    %v1071 = vpop.f32.mrb[0].mxu0
    %v1072 = vadd.f32 %v445, %v1071
    %v1073 = vpop.f32.mrb[0].mxu0
    %v1074 = vadd.f32 %v449, %v1073
    %v1075 = vpop.f32.mrb[0].mxu0
    %v1076 = vadd.f32 %v445, %v1075
    %v1077 = vpop.f32.mrb[0].mxu0
    %v1078 = vadd.f32 %v449, %v1077
    %1079 = vmatprep.mubr.bf16.mxu0 0
    %1080 = vmatmul.mubr.bf16.gmra.mrb[0].mxu0 %v565
    %v1081 = vpop.f32.mrb[0].mxu0
    %v1082 = vadd.f32 %v445, %v1081
    %v1083 = vpop.f32.mrb[0].mxu0
    %v1084 = vadd.f32 %v449, %v1083
    %v1085 = vpop.f32.mrb[0].mxu0
    %v1086 = vadd.f32 %v445, %v1085
    %v1087 = vpop.f32.mrb[0].mxu0
    %v1088 = vadd.f32 %v449, %v1087
    %1089 = vmatprep.mubr.bf16.mxu0 0
    %1090 = vmatmul.mubr.bf16.gmra.mrb[0].mxu0 %v568
    %v1091 = vpop.f32.mrb[0].mxu0
    %v1092 = vadd.f32 %v445, %v1091
    %v1093 = vpop.f32.mrb[0].mxu0
    %v1094 = vadd.f32 %v449, %v1093
    %v1095 = vpop.f32.mrb[0].mxu0
    %v1096 = vadd.f32 %v445, %v1095
    %v1097 = vpop.f32.mrb[0].mxu0
    %v1098 = vadd.f32 %v449, %v1097
    %1099 = vmatprep.mubr.bf16.mxu0 0
    %1100 = vmatmul.mubr.bf16.gmra.mrb[0].mxu0 %v571
    %v1101 = vpop.f32.mrb[0].mxu0
    %v1102 = vadd.f32 %v445, %v1101
    %v1103 = vpop.f32.mrb[0].mxu0
    %v1104 = vadd.f32 %v449, %v1103
    %v1105 = vpop.f32.mrb[0].mxu0
    %v1106 = vadd.f32 %v445, %v1105
    %v1107 = vpop.f32.mrb[0].mxu0
    %v1108 = vadd.f32 %v449, %v1107
    %1109 = vmatprep.mubr.bf16.mxu0 0
    %1110 = vmatmul.mubr.bf16.gmra.mrb[0].mxu0 %v574
    %v1111 = vpop.f32.mrb[0].mxu0
    %v1112 = vadd.f32 %v445, %v1111
    %v1113 = vpop.f32.mrb[0].mxu0
    %v1114 = vadd.f32 %v449, %v1113
    %v1115 = vpop.f32.mrb[0].mxu0
    %v1116 = vadd.f32 %v445, %v1115
    %v1117 = vpop.f32.mrb[0].mxu0
    %v1118 = vadd.f32 %v449, %v1117
    %1119 = vmatprep.mubr.bf16.mxu0 0
    %1120 = vmatmul.mubr.bf16.gmra.mrb[0].mxu0 %v577
    %v1121 = vpop.f32.mrb[0].mxu0
    %v1122 = vadd.f32 %v445, %v1121
    %v1123 = vpop.f32.mrb[0].mxu0
    %v1124 = vadd.f32 %v449, %v1123
    %v1125 = vpop.f32.mrb[0].mxu0
    %v1126 = vadd.f32 %v445, %v1125
    %v1127 = vpop.f32.mrb[0].mxu0
    %v1128 = vadd.f32 %v449, %v1127
    %1129 = vmatprep.mubr.bf16.mxu0 0
    %1130 = vmatmul.mubr.bf16.gmra.mrb[0].mxu0 %v580
    %v1131 = vpop.f32.mrb[0].mxu0
    %v1132 = vadd.f32 %v445, %v1131
    %v1133 = vpop.f32.mrb[0].mxu0
    %v1134 = vadd.f32 %v449, %v1133
    %v1135 = vpop.f32.mrb[0].mxu0
    %v1136 = vadd.f32 %v445, %v1135
    %v1137 = vpop.f32.mrb[0].mxu0
    %v1138 = vadd.f32 %v449, %v1137
    %1139 = vmatprep.mubr.bf16.mxu0 0
    %1140 = vmatmul.mubr.bf16.gmra.mrb[0].mxu0 %v583
    %v1141 = vpop.f32.mrb[0].mxu0
    %v1142 = vadd.f32 %v445, %v1141
    %v1143 = vpop.f32.mrb[0].mxu0
    %v1144 = vadd.f32 %v449, %v1143
    %v1145 = vpop.f32.mrb[0].mxu0
    %v1146 = vadd.f32 %v445, %v1145
    %v1147 = vpop.f32.mrb[0].mxu0
    %v1148 = vadd.f32 %v449, %v1147
    %1149 = vdwg.mxu0
    %v1150 = vand.u32 2147483647, %v620
    %v1151 = vand.u32 2147483647, %v622
    %v1152 = vand.u32 2147483647, %v733
    %v1153 = vand.u32 2147483647, %v735
    %v1154 = vand.u32 2147483647, %v846
    %v1155 = vand.u32 2147483647, %v848
    %v1156 = vand.u32 2147483647, %v959
    %v1157 = vand.u32 2147483647, %v961
    %v1158 = vand.u32 2147483647, %v1072
    %v1159 = vand.u32 2147483647, %v1074
    %v1160 = vand.u32 2147483647, %v624
    %v1161 = vand.u32 2147483647, %v626
    %v1162 = vand.u32 2147483647, %v737
    %v1163 = vand.u32 2147483647, %v739
    %v1164 = vand.u32 2147483647, %v850
    %v1165 = vand.u32 2147483647, %v852
    %v1166 = vand.u32 2147483647, %v963
    %v1167 = vand.u32 2147483647, %v965
    %v1168 = vand.u32 2147483647, %v1076
    %v1169 = vand.u32 2147483647, %v1078
    %v1170 = vand.u32 2147483647, %v630
    %v1171 = vand.u32 2147483647, %v632
    %v1172 = vand.u32 2147483647, %v743
    %v1173 = vand.u32 2147483647, %v745
    %v1174 = vand.u32 2147483647, %v856
    %v1175 = vand.u32 2147483647, %v858
    %v1176 = vand.u32 2147483647, %v969
    %v1177 = vand.u32 2147483647, %v971
    %v1178 = vand.u32 2147483647, %v1082
    %v1179 = vand.u32 2147483647, %v1084
    %v1180 = vand.u32 2147483647, %v634
    %v1181 = vand.u32 2147483647, %v636
    %v1182 = vand.u32 2147483647, %v747
    %v1183 = vand.u32 2147483647, %v749
    %v1184 = vand.u32 2147483647, %v860
    %v1185 = vand.u32 2147483647, %v862
    %v1186 = vand.u32 2147483647, %v973
    %v1187 = vand.u32 2147483647, %v975
    %v1188 = vand.u32 2147483647, %v1086
    %v1189 = vand.u32 2147483647, %v1088
    %v1190 = vand.u32 2147483647, %v640
    %v1191 = vand.u32 2147483647, %v642
    %v1192 = vand.u32 2147483647, %v753
    %v1193 = vand.u32 2147483647, %v755
    %v1194 = vand.u32 2147483647, %v866
    %v1195 = vand.u32 2147483647, %v868
    %v1196 = vand.u32 2147483647, %v979
    %v1197 = vand.u32 2147483647, %v981
    %v1198 = vand.u32 2147483647, %v1092
    %v1199 = vand.u32 2147483647, %v1094
    %v1200 = vand.u32 2147483647, %v644
    %v1201 = vand.u32 2147483647, %v646
    %v1202 = vand.u32 2147483647, %v757
    %v1203 = vand.u32 2147483647, %v759
    %v1204 = vand.u32 2147483647, %v870
    %v1205 = vand.u32 2147483647, %v872
    %v1206 = vand.u32 2147483647, %v983
    %v1207 = vand.u32 2147483647, %v985
    %v1208 = vand.u32 2147483647, %v1096
    %v1209 = vand.u32 2147483647, %v1098
    %v1210 = vand.u32 2147483647, %v650
    %v1211 = vand.u32 2147483647, %v652
    %v1212 = vand.u32 2147483647, %v763
    %v1213 = vand.u32 2147483647, %v765
    %v1214 = vand.u32 2147483647, %v876
    %v1215 = vand.u32 2147483647, %v878
    %v1216 = vand.u32 2147483647, %v989
    %v1217 = vand.u32 2147483647, %v991
    %v1218 = vand.u32 2147483647, %v1102
    %v1219 = vand.u32 2147483647, %v1104
    %v1220 = vand.u32 2147483647, %v654
    %v1221 = vand.u32 2147483647, %v656
    %v1222 = vand.u32 2147483647, %v767
    %v1223 = vand.u32 2147483647, %v769
    %v1224 = vand.u32 2147483647, %v880
    %v1225 = vand.u32 2147483647, %v882
    %v1226 = vand.u32 2147483647, %v993
    %v1227 = vand.u32 2147483647, %v995
    %v1228 = vand.u32 2147483647, %v1106
    %v1229 = vand.u32 2147483647, %v1108
    %v1230 = vand.u32 2147483647, %v660
    %v1231 = vand.u32 2147483647, %v662
    %v1232 = vand.u32 2147483647, %v773
    %v1233 = vand.u32 2147483647, %v775
    %v1234 = vand.u32 2147483647, %v886
    %v1235 = vand.u32 2147483647, %v888
    %v1236 = vand.u32 2147483647, %v999
    %v1237 = vand.u32 2147483647, %v1001
    %v1238 = vand.u32 2147483647, %v1112
    %v1239 = vand.u32 2147483647, %v1114
    %v1240 = vand.u32 2147483647, %v664
    %v1241 = vand.u32 2147483647, %v666
    %v1242 = vand.u32 2147483647, %v777
    %v1243 = vand.u32 2147483647, %v779
    %v1244 = vand.u32 2147483647, %v890
    %v1245 = vand.u32 2147483647, %v892
    %v1246 = vand.u32 2147483647, %v1003
    %v1247 = vand.u32 2147483647, %v1005
    %v1248 = vand.u32 2147483647, %v1116
    %v1249 = vand.u32 2147483647, %v1118
    %v1250 = vand.u32 2147483647, %v670
    %v1251 = vand.u32 2147483647, %v672
    %v1252 = vand.u32 2147483647, %v783
    %v1253 = vand.u32 2147483647, %v785
    %v1254 = vand.u32 2147483647, %v896
    %v1255 = vand.u32 2147483647, %v898
    %v1256 = vand.u32 2147483647, %v1009
    %v1257 = vand.u32 2147483647, %v1011
    %v1258 = vand.u32 2147483647, %v1122
    %v1259 = vand.u32 2147483647, %v1124
    %v1260 = vand.u32 2147483647, %v674
    %v1261 = vand.u32 2147483647, %v676
    %v1262 = vand.u32 2147483647, %v787
    %v1263 = vand.u32 2147483647, %v789
    %v1264 = vand.u32 2147483647, %v900
    %v1265 = vand.u32 2147483647, %v902
    %v1266 = vand.u32 2147483647, %v1013
    %v1267 = vand.u32 2147483647, %v1015
    %v1268 = vand.u32 2147483647, %v1126
    %v1269 = vand.u32 2147483647, %v1128
    %v1270 = vand.u32 2147483647, %v680
    %v1271 = vand.u32 2147483647, %v682
    %v1272 = vand.u32 2147483647, %v793
    %v1273 = vand.u32 2147483647, %v795
    %v1274 = vand.u32 2147483647, %v906
    %v1275 = vand.u32 2147483647, %v908
    %v1276 = vand.u32 2147483647, %v1019
    %v1277 = vand.u32 2147483647, %v1021
    %v1278 = vand.u32 2147483647, %v1132
    %v1279 = vand.u32 2147483647, %v1134
    %v1280 = vand.u32 2147483647, %v684
    %v1281 = vand.u32 2147483647, %v686
    %v1282 = vand.u32 2147483647, %v797
    %v1283 = vand.u32 2147483647, %v799
    %v1284 = vand.u32 2147483647, %v910
    %v1285 = vand.u32 2147483647, %v912
    %v1286 = vand.u32 2147483647, %v1023
    %v1287 = vand.u32 2147483647, %v1025
    %v1288 = vand.u32 2147483647, %v1136
    %v1289 = vand.u32 2147483647, %v1138
    %v1290 = vand.u32 2147483647, %v690
    %v1291 = vand.u32 2147483647, %v692
    %v1292 = vand.u32 2147483647, %v803
    %v1293 = vand.u32 2147483647, %v805
    %v1294 = vand.u32 2147483647, %v916
    %v1295 = vand.u32 2147483647, %v918
    %v1296 = vand.u32 2147483647, %v1029
    %v1297 = vand.u32 2147483647, %v1031
    %v1298 = vand.u32 2147483647, %v1142
    %v1299 = vand.u32 2147483647, %v1144
    %v1300 = vand.u32 2147483647, %v694
    %v1301 = vand.u32 2147483647, %v696
    %v1302 = vand.u32 2147483647, %v807
    %v1303 = vand.u32 2147483647, %v809
    %v1304 = vand.u32 2147483647, %v920
    %v1305 = vand.u32 2147483647, %v922
    %v1306 = vand.u32 2147483647, %v1033
    %v1307 = vand.u32 2147483647, %v1035
    %v1308 = vand.u32 2147483647, %v1146
    %v1309 = vand.u32 2147483647, %v1148
    %v1310 = vsub.f32 0.0, %v1150
    %v1311 = vsub.f32 0.0, %v1151
    %v1312 = vsub.f32 0.0, %v1152
    %v1313 = vsub.f32 0.0, %v1153
    %v1314 = vsub.f32 0.0, %v1154
    %v1315 = vsub.f32 0.0, %v1155
    %v1316 = vsub.f32 0.0, %v1156
    %v1317 = vsub.f32 0.0, %v1157
    %v1318 = vsub.f32 0.0, %v1158
    %v1319 = vsub.f32 0.0, %v1159
    %v1320 = vsub.f32 0.0, %v1160
    %v1321 = vsub.f32 0.0, %v1161
    %v1322 = vsub.f32 0.0, %v1162
    %v1323 = vsub.f32 0.0, %v1163
    %v1324 = vsub.f32 0.0, %v1164
    %v1325 = vsub.f32 0.0, %v1165
    %v1326 = vsub.f32 0.0, %v1166
    %v1327 = vsub.f32 0.0, %v1167
    %v1328 = vsub.f32 0.0, %v1168
    %v1329 = vsub.f32 0.0, %v1169
    %v1330 = vsub.f32 0.0, %v1170
    %v1331 = vsub.f32 0.0, %v1171
    %v1332 = vsub.f32 0.0, %v1172
    %v1333 = vsub.f32 0.0, %v1173
    %v1334 = vsub.f32 0.0, %v1174
    %v1335 = vsub.f32 0.0, %v1175
    %v1336 = vsub.f32 0.0, %v1176
    %v1337 = vsub.f32 0.0, %v1177
    %v1338 = vsub.f32 0.0, %v1178
    %v1339 = vsub.f32 0.0, %v1179
    %v1340 = vsub.f32 0.0, %v1180
    %v1341 = vsub.f32 0.0, %v1181
    %v1342 = vsub.f32 0.0, %v1182
    %v1343 = vsub.f32 0.0, %v1183
    %v1344 = vsub.f32 0.0, %v1184
    %v1345 = vsub.f32 0.0, %v1185
    %v1346 = vsub.f32 0.0, %v1186
    %v1347 = vsub.f32 0.0, %v1187
    %v1348 = vsub.f32 0.0, %v1188
    %v1349 = vsub.f32 0.0, %v1189
    %v1350 = vsub.f32 0.0, %v1190
    %v1351 = vsub.f32 0.0, %v1191
    %v1352 = vsub.f32 0.0, %v1192
    %v1353 = vsub.f32 0.0, %v1193
    %v1354 = vsub.f32 0.0, %v1194
    %v1355 = vsub.f32 0.0, %v1195
    %v1356 = vsub.f32 0.0, %v1196
    %v1357 = vsub.f32 0.0, %v1197
    %v1358 = vsub.f32 0.0, %v1198
    %v1359 = vsub.f32 0.0, %v1199
    %v1360 = vsub.f32 0.0, %v1200
    %v1361 = vsub.f32 0.0, %v1201
    %v1362 = vsub.f32 0.0, %v1202
    %v1363 = vsub.f32 0.0, %v1203
    %v1364 = vsub.f32 0.0, %v1204
    %v1365 = vsub.f32 0.0, %v1205
    %v1366 = vsub.f32 0.0, %v1206
    %v1367 = vsub.f32 0.0, %v1207
    %v1368 = vsub.f32 0.0, %v1208
    %v1369 = vsub.f32 0.0, %v1209
    %v1370 = vsub.f32 0.0, %v1210
    %v1371 = vsub.f32 0.0, %v1211
    %v1372 = vsub.f32 0.0, %v1212
    %v1373 = vsub.f32 0.0, %v1213
    %v1374 = vsub.f32 0.0, %v1214
    %v1375 = vsub.f32 0.0, %v1215
    %v1376 = vsub.f32 0.0, %v1216
    %v1377 = vsub.f32 0.0, %v1217
    %v1378 = vsub.f32 0.0, %v1218
    %v1379 = vsub.f32 0.0, %v1219
    %v1380 = vsub.f32 0.0, %v1220
    %v1381 = vsub.f32 0.0, %v1221
    %v1382 = vsub.f32 0.0, %v1222
    %v1383 = vsub.f32 0.0, %v1223
    %v1384 = vsub.f32 0.0, %v1224
    %v1385 = vsub.f32 0.0, %v1225
    %v1386 = vsub.f32 0.0, %v1226
    %v1387 = vsub.f32 0.0, %v1227
    %v1388 = vsub.f32 0.0, %v1228
    %v1389 = vsub.f32 0.0, %v1229
    %v1390 = vsub.f32 0.0, %v1230
    %v1391 = vsub.f32 0.0, %v1231
    %v1392 = vsub.f32 0.0, %v1232
    %v1393 = vsub.f32 0.0, %v1233
    %v1394 = vsub.f32 0.0, %v1234
    %v1395 = vsub.f32 0.0, %v1235
    %v1396 = vsub.f32 0.0, %v1236
    %v1397 = vsub.f32 0.0, %v1237
    %v1398 = vsub.f32 0.0, %v1238
    %v1399 = vsub.f32 0.0, %v1239
    %v1400 = vsub.f32 0.0, %v1240
    %v1401 = vsub.f32 0.0, %v1241
    %v1402 = vsub.f32 0.0, %v1242
    %v1403 = vsub.f32 0.0, %v1243
    %v1404 = vsub.f32 0.0, %v1244
    %v1405 = vsub.f32 0.0, %v1245
    %v1406 = vsub.f32 0.0, %v1246
    %v1407 = vsub.f32 0.0, %v1247
    %v1408 = vsub.f32 0.0, %v1248
    %v1409 = vsub.f32 0.0, %v1249
    %v1410 = vsub.f32 0.0, %v1250
    %v1411 = vsub.f32 0.0, %v1251
    %v1412 = vsub.f32 0.0, %v1252
    %v1413 = vsub.f32 0.0, %v1253
    %v1414 = vsub.f32 0.0, %v1254
    %v1415 = vsub.f32 0.0, %v1255
    %v1416 = vsub.f32 0.0, %v1256
    %v1417 = vsub.f32 0.0, %v1257
    %v1418 = vsub.f32 0.0, %v1258
    %v1419 = vsub.f32 0.0, %v1259
    %v1420 = vsub.f32 0.0, %v1260
    %v1421 = vsub.f32 0.0, %v1261
    %v1422 = vsub.f32 0.0, %v1262
    %v1423 = vsub.f32 0.0, %v1263
    %v1424 = vsub.f32 0.0, %v1264
    %v1425 = vsub.f32 0.0, %v1265
    %v1426 = vsub.f32 0.0, %v1266
    %v1427 = vsub.f32 0.0, %v1267
    %v1428 = vsub.f32 0.0, %v1268
    %v1429 = vsub.f32 0.0, %v1269
    %v1430 = vsub.f32 0.0, %v1270
    %v1431 = vsub.f32 0.0, %v1271
    %v1432 = vsub.f32 0.0, %v1272
    %v1433 = vsub.f32 0.0, %v1273
    %v1434 = vsub.f32 0.0, %v1274
    %v1435 = vsub.f32 0.0, %v1275
    %v1436 = vsub.f32 0.0, %v1276
    %v1437 = vsub.f32 0.0, %v1277
    %v1438 = vsub.f32 0.0, %v1278
    %v1439 = vsub.f32 0.0, %v1279
    %v1440 = vsub.f32 0.0, %v1280
    %v1441 = vsub.f32 0.0, %v1281
    %v1442 = vsub.f32 0.0, %v1282
    %v1443 = vsub.f32 0.0, %v1283
    %v1444 = vsub.f32 0.0, %v1284
    %v1445 = vsub.f32 0.0, %v1285
    %v1446 = vsub.f32 0.0, %v1286
    %v1447 = vsub.f32 0.0, %v1287
    %v1448 = vsub.f32 0.0, %v1288
    %v1449 = vsub.f32 0.0, %v1289
    %v1450 = vsub.f32 0.0, %v1290
    %v1451 = vsub.f32 0.0, %v1291
    %v1452 = vsub.f32 0.0, %v1292
    %v1453 = vsub.f32 0.0, %v1293
    %v1454 = vsub.f32 0.0, %v1294
    %v1455 = vsub.f32 0.0, %v1295
    %v1456 = vsub.f32 0.0, %v1296
    %v1457 = vsub.f32 0.0, %v1297
    %v1458 = vsub.f32 0.0, %v1298
    %v1459 = vsub.f32 0.0, %v1299
    %v1460 = vsub.f32 0.0, %v1300
    %v1461 = vsub.f32 0.0, %v1301
    %v1462 = vsub.f32 0.0, %v1302
    %v1463 = vsub.f32 0.0, %v1303
    %v1464 = vsub.f32 0.0, %v1304
    %v1465 = vsub.f32 0.0, %v1305
    %v1466 = vsub.f32 0.0, %v1306
    %v1467 = vsub.f32 0.0, %v1307
    %v1468 = vsub.f32 0.0, %v1308
    %v1469 = vsub.f32 0.0, %v1309
    %v1470 = vmul.f32 %v1310, 1.442695
    %v1471 = vpow.pop %v1470
    %v1472 = vmul.f32 %v1311, 1.442695
    %v1473 = vpow.pop %v1472
    %v1474 = vmul.f32 %v1312, 1.442695
    %v1475 = vpow.pop %v1474
    %v1476 = vmul.f32 %v1313, 1.442695
    %v1477 = vpow.pop %v1476
    %v1478 = vmul.f32 %v1314, 1.442695
    %v1479 = vpow.pop %v1478
    %v1480 = vmul.f32 %v1315, 1.442695
    %v1481 = vpow.pop %v1480
    %v1482 = vmul.f32 %v1316, 1.442695
    %v1483 = vpow.pop %v1482
    %v1484 = vmul.f32 %v1317, 1.442695
    %v1485 = vpow.pop %v1484
    %v1486 = vmul.f32 %v1318, 1.442695
    %v1487 = vpow.pop %v1486
    %v1488 = vmul.f32 %v1319, 1.442695
    %v1489 = vpow.pop %v1488
    %v1490 = vmul.f32 %v1320, 1.442695
    %v1491 = vpow.pop %v1490
    %v1492 = vmul.f32 %v1321, 1.442695
    %v1493 = vpow.pop %v1492
    %v1494 = vmul.f32 %v1322, 1.442695
    %v1495 = vpow.pop %v1494
    %v1496 = vmul.f32 %v1323, 1.442695
    %v1497 = vpow.pop %v1496
    %v1498 = vmul.f32 %v1324, 1.442695
    %v1499 = vpow.pop %v1498
    %v1500 = vmul.f32 %v1325, 1.442695
    %v1501 = vpow.pop %v1500
    %v1502 = vmul.f32 %v1326, 1.442695
    %v1503 = vpow.pop %v1502
    %v1504 = vmul.f32 %v1327, 1.442695
    %v1505 = vpow.pop %v1504
    %v1506 = vmul.f32 %v1328, 1.442695
    %v1507 = vpow.pop %v1506
    %v1508 = vmul.f32 %v1329, 1.442695
    %v1509 = vpow.pop %v1508
    %v1510 = vmul.f32 %v1330, 1.442695
    %v1511 = vpow.pop %v1510
    %v1512 = vmul.f32 %v1331, 1.442695
    %v1513 = vpow.pop %v1512
    %v1514 = vmul.f32 %v1332, 1.442695
    %v1515 = vpow.pop %v1514
    %v1516 = vmul.f32 %v1333, 1.442695
    %v1517 = vpow.pop %v1516
    %v1518 = vmul.f32 %v1334, 1.442695
    %v1519 = vpow.pop %v1518
    %v1520 = vmul.f32 %v1335, 1.442695
    %v1521 = vpow.pop %v1520
    %v1522 = vmul.f32 %v1336, 1.442695
    %v1523 = vpow.pop %v1522
    %v1524 = vmul.f32 %v1337, 1.442695
    %v1525 = vpow.pop %v1524
    %v1526 = vmul.f32 %v1338, 1.442695
    %v1527 = vpow.pop %v1526
    %v1528 = vmul.f32 %v1339, 1.442695
    %v1529 = vpow.pop %v1528
    %v1530 = vmul.f32 %v1340, 1.442695
    %v1531 = vpow.pop %v1530
    %v1532 = vmul.f32 %v1341, 1.442695
    %v1533 = vpow.pop %v1532
    %v1534 = vmul.f32 %v1342, 1.442695
    %v1535 = vpow.pop %v1534
    %v1536 = vmul.f32 %v1343, 1.442695
    %v1537 = vpow.pop %v1536
    %v1538 = vmul.f32 %v1344, 1.442695
    %v1539 = vpow.pop %v1538
    %v1540 = vmul.f32 %v1345, 1.442695
    %v1541 = vpow.pop %v1540
    %v1542 = vmul.f32 %v1346, 1.442695
    %v1543 = vpow.pop %v1542
    %v1544 = vmul.f32 %v1347, 1.442695
    %v1545 = vpow.pop %v1544
    %v1546 = vmul.f32 %v1348, 1.442695
    %v1547 = vpow.pop %v1546
    %v1548 = vmul.f32 %v1349, 1.442695
    %v1549 = vpow.pop %v1548
    %v1550 = vmul.f32 %v1350, 1.442695
    %v1551 = vpow.pop %v1550
    %v1552 = vmul.f32 %v1351, 1.442695
    %v1553 = vpow.pop %v1552
    %v1554 = vmul.f32 %v1352, 1.442695
    %v1555 = vpow.pop %v1554
    %v1556 = vmul.f32 %v1353, 1.442695
    %v1557 = vpow.pop %v1556
    %v1558 = vmul.f32 %v1354, 1.442695
    %v1559 = vpow.pop %v1558
    %v1560 = vmul.f32 %v1355, 1.442695
    %v1561 = vpow.pop %v1560
    %v1562 = vmul.f32 %v1356, 1.442695
    %v1563 = vpow.pop %v1562
    %v1564 = vmul.f32 %v1357, 1.442695
    %v1565 = vpow.pop %v1564
    %v1566 = vmul.f32 %v1358, 1.442695
    %v1567 = vpow.pop %v1566
    %v1568 = vmul.f32 %v1359, 1.442695
    %v1569 = vpow.pop %v1568
    %v1570 = vmul.f32 %v1360, 1.442695
    %v1571 = vpow.pop %v1570
    %v1572 = vmul.f32 %v1361, 1.442695
    %v1573 = vpow.pop %v1572
    %v1574 = vmul.f32 %v1362, 1.442695
    %v1575 = vpow.pop %v1574
    %v1576 = vmul.f32 %v1363, 1.442695
    %v1577 = vpow.pop %v1576
    %v1578 = vmul.f32 %v1364, 1.442695
    %v1579 = vpow.pop %v1578
    %v1580 = vmul.f32 %v1365, 1.442695
    %v1581 = vpow.pop %v1580
    %v1582 = vmul.f32 %v1366, 1.442695
    %v1583 = vpow.pop %v1582
    %v1584 = vmul.f32 %v1367, 1.442695
    %v1585 = vpow.pop %v1584
    %v1586 = vmul.f32 %v1368, 1.442695
    %v1587 = vpow.pop %v1586
    %v1588 = vmul.f32 %v1369, 1.442695
    %v1589 = vpow.pop %v1588
    %v1590 = vmul.f32 %v1370, 1.442695
    %v1591 = vpow.pop %v1590
    %v1592 = vmul.f32 %v1371, 1.442695
    %v1593 = vpow.pop %v1592
    %v1594 = vmul.f32 %v1372, 1.442695
    %v1595 = vpow.pop %v1594
    %v1596 = vmul.f32 %v1373, 1.442695
    %v1597 = vpow.pop %v1596
    %v1598 = vmul.f32 %v1374, 1.442695
    %v1599 = vpow.pop %v1598
    %v1600 = vmul.f32 %v1375, 1.442695
    %v1601 = vpow.pop %v1600
    %v1602 = vmul.f32 %v1376, 1.442695
    %v1603 = vpow.pop %v1602
    %v1604 = vmul.f32 %v1377, 1.442695
    %v1605 = vpow.pop %v1604
    %v1606 = vmul.f32 %v1378, 1.442695
    %v1607 = vpow.pop %v1606
    %v1608 = vmul.f32 %v1379, 1.442695
    %v1609 = vpow.pop %v1608
    %v1610 = vmul.f32 %v1380, 1.442695
    %v1611 = vpow.pop %v1610
    %v1612 = vmul.f32 %v1381, 1.442695
    %v1613 = vpow.pop %v1612
    %v1614 = vmul.f32 %v1382, 1.442695
    %v1615 = vpow.pop %v1614
    %v1616 = vmul.f32 %v1383, 1.442695
    %v1617 = vpow.pop %v1616
    %v1618 = vmul.f32 %v1384, 1.442695
    %v1619 = vpow.pop %v1618
    %v1620 = vmul.f32 %v1385, 1.442695
    %v1621 = vpow.pop %v1620
    %v1622 = vmul.f32 %v1386, 1.442695
    %v1623 = vpow.pop %v1622
    %v1624 = vmul.f32 %v1387, 1.442695
    %v1625 = vpow.pop %v1624
    %v1626 = vmul.f32 %v1388, 1.442695
    %v1627 = vpow.pop %v1626
    %v1628 = vmul.f32 %v1389, 1.442695
    %v1629 = vpow.pop %v1628
    %v1630 = vmul.f32 %v1390, 1.442695
    %v1631 = vpow.pop %v1630
    %v1632 = vmul.f32 %v1391, 1.442695
    %v1633 = vpow.pop %v1632
    %v1634 = vmul.f32 %v1392, 1.442695
    %v1635 = vpow.pop %v1634
    %v1636 = vmul.f32 %v1393, 1.442695
    %v1637 = vpow.pop %v1636
    %v1638 = vmul.f32 %v1394, 1.442695
    %v1639 = vpow.pop %v1638
    %v1640 = vmul.f32 %v1395, 1.442695
    %v1641 = vpow.pop %v1640
    %v1642 = vmul.f32 %v1396, 1.442695
    %v1643 = vpow.pop %v1642
    %v1644 = vmul.f32 %v1397, 1.442695
    %v1645 = vpow.pop %v1644
    %v1646 = vmul.f32 %v1398, 1.442695
    %v1647 = vpow.pop %v1646
    %v1648 = vmul.f32 %v1399, 1.442695
    %v1649 = vpow.pop %v1648
    %v1650 = vmul.f32 %v1400, 1.442695
    %v1651 = vpow.pop %v1650
    %v1652 = vmul.f32 %v1401, 1.442695
    %v1653 = vpow.pop %v1652
    %v1654 = vmul.f32 %v1402, 1.442695
    %v1655 = vpow.pop %v1654
    %v1656 = vmul.f32 %v1403, 1.442695
    %v1657 = vpow.pop %v1656
    %v1658 = vmul.f32 %v1404, 1.442695
    %v1659 = vpow.pop %v1658
    %v1660 = vmul.f32 %v1405, 1.442695
    %v1661 = vpow.pop %v1660
    %v1662 = vmul.f32 %v1406, 1.442695
    %v1663 = vpow.pop %v1662
    %v1664 = vmul.f32 %v1407, 1.442695
    %v1665 = vpow.pop %v1664
    %v1666 = vmul.f32 %v1408, 1.442695
    %v1667 = vpow.pop %v1666
    %v1668 = vmul.f32 %v1409, 1.442695
    %v1669 = vpow.pop %v1668
    %v1670 = vmul.f32 %v1410, 1.442695
    %v1671 = vpow.pop %v1670
    %v1672 = vmul.f32 %v1411, 1.442695
    %v1673 = vpow.pop %v1672
    %v1674 = vmul.f32 %v1412, 1.442695
    %v1675 = vpow.pop %v1674
    %v1676 = vmul.f32 %v1413, 1.442695
    %v1677 = vpow.pop %v1676
    %v1678 = vmul.f32 %v1414, 1.442695
    %v1679 = vpow.pop %v1678
    %v1680 = vmul.f32 %v1415, 1.442695
    %v1681 = vpow.pop %v1680
    %v1682 = vmul.f32 %v1416, 1.442695
    %v1683 = vpow.pop %v1682
    %v1684 = vmul.f32 %v1417, 1.442695
    %v1685 = vpow.pop %v1684
    %v1686 = vmul.f32 %v1418, 1.442695
    %v1687 = vpow.pop %v1686
    %v1688 = vmul.f32 %v1419, 1.442695
    %v1689 = vpow.pop %v1688
    %v1690 = vmul.f32 %v1420, 1.442695
    %v1691 = vpow.pop %v1690
    %v1692 = vmul.f32 %v1421, 1.442695
    %v1693 = vpow.pop %v1692
    %v1694 = vmul.f32 %v1422, 1.442695
    %v1695 = vpow.pop %v1694
    %v1696 = vmul.f32 %v1423, 1.442695
    %v1697 = vpow.pop %v1696
    %v1698 = vmul.f32 %v1424, 1.442695
    %v1699 = vpow.pop %v1698
    %v1700 = vmul.f32 %v1425, 1.442695
    %v1701 = vpow.pop %v1700
    %v1702 = vmul.f32 %v1426, 1.442695
    %v1703 = vpow.pop %v1702
    %v1704 = vmul.f32 %v1427, 1.442695
    %v1705 = vpow.pop %v1704
    %v1706 = vmul.f32 %v1428, 1.442695
    %v1707 = vpow.pop %v1706
    %v1708 = vmul.f32 %v1429, 1.442695
    %v1709 = vpow.pop %v1708
    %v1710 = vmul.f32 %v1430, 1.442695
    %v1711 = vpow.pop %v1710
    %v1712 = vmul.f32 %v1431, 1.442695
    %v1713 = vpow.pop %v1712
    %v1714 = vmul.f32 %v1432, 1.442695
    %v1715 = vpow.pop %v1714
    %v1716 = vmul.f32 %v1433, 1.442695
    %v1717 = vpow.pop %v1716
    %v1718 = vmul.f32 %v1434, 1.442695
    %v1719 = vpow.pop %v1718
    %v1720 = vmul.f32 %v1435, 1.442695
    %v1721 = vpow.pop %v1720
    %v1722 = vmul.f32 %v1436, 1.442695
    %v1723 = vpow.pop %v1722
    %v1724 = vmul.f32 %v1437, 1.442695
    %v1725 = vpow.pop %v1724
    %v1726 = vmul.f32 %v1438, 1.442695
    %v1727 = vpow.pop %v1726
    %v1728 = vmul.f32 %v1439, 1.442695
    %v1729 = vpow.pop %v1728
    %v1730 = vmul.f32 %v1440, 1.442695
    %v1731 = vpow.pop %v1730
    %v1732 = vmul.f32 %v1441, 1.442695
    %v1733 = vpow.pop %v1732
    %v1734 = vmul.f32 %v1442, 1.442695
    %v1735 = vpow.pop %v1734
    %v1736 = vmul.f32 %v1443, 1.442695
    %v1737 = vpow.pop %v1736
    %v1738 = vmul.f32 %v1444, 1.442695
    %v1739 = vpow.pop %v1738
    %v1740 = vmul.f32 %v1445, 1.442695
    %v1741 = vpow.pop %v1740
    %v1742 = vmul.f32 %v1446, 1.442695
    %v1743 = vpow.pop %v1742
    %v1744 = vmul.f32 %v1447, 1.442695
    %v1745 = vpow.pop %v1744
    %v1746 = vmul.f32 %v1448, 1.442695
    %v1747 = vpow.pop %v1746
    %v1748 = vmul.f32 %v1449, 1.442695
    %v1749 = vpow.pop %v1748
    %v1750 = vmul.f32 %v1450, 1.442695
    %v1751 = vpow.pop %v1750
    %v1752 = vmul.f32 %v1451, 1.442695
    %v1753 = vpow.pop %v1752
    %v1754 = vmul.f32 %v1452, 1.442695
    %v1755 = vpow.pop %v1754
    %v1756 = vmul.f32 %v1453, 1.442695
    %v1757 = vpow.pop %v1756
    %v1758 = vmul.f32 %v1454, 1.442695
    %v1759 = vpow.pop %v1758
    %v1760 = vmul.f32 %v1455, 1.442695
    %v1761 = vpow.pop %v1760
    %v1762 = vmul.f32 %v1456, 1.442695
    %v1763 = vpow.pop %v1762
    %v1764 = vmul.f32 %v1457, 1.442695
    %v1765 = vpow.pop %v1764
    %v1766 = vmul.f32 %v1458, 1.442695
    %v1767 = vpow.pop %v1766
    %v1768 = vmul.f32 %v1459, 1.442695
    %v1769 = vpow.pop %v1768
    %v1770 = vmul.f32 %v1460, 1.442695
    %v1771 = vpow.pop %v1770
    %v1772 = vmul.f32 %v1461, 1.442695
    %v1773 = vpow.pop %v1772
    %v1774 = vmul.f32 %v1462, 1.442695
    %v1775 = vpow.pop %v1774
    %v1776 = vmul.f32 %v1463, 1.442695
    %v1777 = vpow.pop %v1776
    %v1778 = vmul.f32 %v1464, 1.442695
    %v1779 = vpow.pop %v1778
    %v1780 = vmul.f32 %v1465, 1.442695
    %v1781 = vpow.pop %v1780
    %v1782 = vmul.f32 %v1466, 1.442695
    %v1783 = vpow.pop %v1782
    %v1784 = vmul.f32 %v1467, 1.442695
    %v1785 = vpow.pop %v1784
    %v1786 = vmul.f32 %v1468, 1.442695
    %v1787 = vpow.pop %v1786
    %v1788 = vmul.f32 %v1469, 1.442695
    %v1789 = vpow.pop %v1788
    %v1790 = vadd.f32 %v1471, 1.0
    %v1791 = vadd.f32 %v1473, 1.0
    %v1792 = vadd.f32 %v1475, 1.0
    %v1793 = vadd.f32 %v1477, 1.0
    %v1794 = vadd.f32 %v1479, 1.0
    %v1795 = vadd.f32 %v1481, 1.0
    %v1796 = vadd.f32 %v1483, 1.0
    %v1797 = vadd.f32 %v1485, 1.0
    %v1798 = vadd.f32 %v1487, 1.0
    %v1799 = vadd.f32 %v1489, 1.0
    %v1800 = vadd.f32 %v1491, 1.0
    %v1801 = vadd.f32 %v1493, 1.0
    %v1802 = vadd.f32 %v1495, 1.0
    %v1803 = vadd.f32 %v1497, 1.0
    %v1804 = vadd.f32 %v1499, 1.0
    %v1805 = vadd.f32 %v1501, 1.0
    %v1806 = vadd.f32 %v1503, 1.0
    %v1807 = vadd.f32 %v1505, 1.0
    %v1808 = vadd.f32 %v1507, 1.0
    %v1809 = vadd.f32 %v1509, 1.0
    %v1810 = vadd.f32 %v1511, 1.0
    %v1811 = vadd.f32 %v1513, 1.0
    %v1812 = vadd.f32 %v1515, 1.0
    %v1813 = vadd.f32 %v1517, 1.0
    %v1814 = vadd.f32 %v1519, 1.0
    %v1815 = vadd.f32 %v1521, 1.0
    %v1816 = vadd.f32 %v1523, 1.0
    %v1817 = vadd.f32 %v1525, 1.0
    %v1818 = vadd.f32 %v1527, 1.0
    %v1819 = vadd.f32 %v1529, 1.0
    %v1820 = vadd.f32 %v1531, 1.0
    %v1821 = vadd.f32 %v1533, 1.0
    %v1822 = vadd.f32 %v1535, 1.0
    %v1823 = vadd.f32 %v1537, 1.0
    %v1824 = vadd.f32 %v1539, 1.0
    %v1825 = vadd.f32 %v1541, 1.0
    %v1826 = vadd.f32 %v1543, 1.0
    %v1827 = vadd.f32 %v1545, 1.0
    %v1828 = vadd.f32 %v1547, 1.0
    %v1829 = vadd.f32 %v1549, 1.0
    %v1830 = vadd.f32 %v1551, 1.0
    %v1831 = vadd.f32 %v1553, 1.0
    %v1832 = vadd.f32 %v1555, 1.0
    %v1833 = vadd.f32 %v1557, 1.0
    %v1834 = vadd.f32 %v1559, 1.0
    %v1835 = vadd.f32 %v1561, 1.0
    %v1836 = vadd.f32 %v1563, 1.0
    %v1837 = vadd.f32 %v1565, 1.0
    %v1838 = vadd.f32 %v1567, 1.0
    %v1839 = vadd.f32 %v1569, 1.0
    %v1840 = vadd.f32 %v1571, 1.0
    %v1841 = vadd.f32 %v1573, 1.0
    %v1842 = vadd.f32 %v1575, 1.0
    %v1843 = vadd.f32 %v1577, 1.0
    %v1844 = vadd.f32 %v1579, 1.0
    %v1845 = vadd.f32 %v1581, 1.0
    %v1846 = vadd.f32 %v1583, 1.0
    %v1847 = vadd.f32 %v1585, 1.0
    %v1848 = vadd.f32 %v1587, 1.0
    %v1849 = vadd.f32 %v1589, 1.0
    %v1850 = vadd.f32 %v1591, 1.0
    %v1851 = vadd.f32 %v1593, 1.0
    %v1852 = vadd.f32 %v1595, 1.0
    %v1853 = vadd.f32 %v1597, 1.0
    %v1854 = vadd.f32 %v1599, 1.0
    %v1855 = vadd.f32 %v1601, 1.0
    %v1856 = vadd.f32 %v1603, 1.0
    %v1857 = vadd.f32 %v1605, 1.0
    %v1858 = vadd.f32 %v1607, 1.0
    %v1859 = vadd.f32 %v1609, 1.0
    %v1860 = vadd.f32 %v1611, 1.0
    %v1861 = vadd.f32 %v1613, 1.0
    %v1862 = vadd.f32 %v1615, 1.0
    %v1863 = vadd.f32 %v1617, 1.0
    %v1864 = vadd.f32 %v1619, 1.0
    %v1865 = vadd.f32 %v1621, 1.0
    %v1866 = vadd.f32 %v1623, 1.0
    %v1867 = vadd.f32 %v1625, 1.0
    %v1868 = vadd.f32 %v1627, 1.0
    %v1869 = vadd.f32 %v1629, 1.0
    %v1870 = vadd.f32 %v1631, 1.0
    %v1871 = vadd.f32 %v1633, 1.0
    %v1872 = vadd.f32 %v1635, 1.0
    %v1873 = vadd.f32 %v1637, 1.0
    %v1874 = vadd.f32 %v1639, 1.0
    %v1875 = vadd.f32 %v1641, 1.0
    %v1876 = vadd.f32 %v1643, 1.0
    %v1877 = vadd.f32 %v1645, 1.0
    %v1878 = vadd.f32 %v1647, 1.0
    %v1879 = vadd.f32 %v1649, 1.0
    %v1880 = vadd.f32 %v1651, 1.0
    %v1881 = vadd.f32 %v1653, 1.0
    %v1882 = vadd.f32 %v1655, 1.0
    %v1883 = vadd.f32 %v1657, 1.0
    %v1884 = vadd.f32 %v1659, 1.0
    %v1885 = vadd.f32 %v1661, 1.0
    %v1886 = vadd.f32 %v1663, 1.0
    %v1887 = vadd.f32 %v1665, 1.0
    %v1888 = vadd.f32 %v1667, 1.0
    %v1889 = vadd.f32 %v1669, 1.0
    %v1890 = vadd.f32 %v1671, 1.0
    %v1891 = vadd.f32 %v1673, 1.0
    %v1892 = vadd.f32 %v1675, 1.0
    %v1893 = vadd.f32 %v1677, 1.0
    %v1894 = vadd.f32 %v1679, 1.0
    %v1895 = vadd.f32 %v1681, 1.0
    %v1896 = vadd.f32 %v1683, 1.0
    %v1897 = vadd.f32 %v1685, 1.0
    %v1898 = vadd.f32 %v1687, 1.0
    %v1899 = vadd.f32 %v1689, 1.0
    %v1900 = vadd.f32 %v1691, 1.0
    %v1901 = vadd.f32 %v1693, 1.0
    %v1902 = vadd.f32 %v1695, 1.0
    %v1903 = vadd.f32 %v1697, 1.0
    %v1904 = vadd.f32 %v1699, 1.0
    %v1905 = vadd.f32 %v1701, 1.0
    %v1906 = vadd.f32 %v1703, 1.0
    %v1907 = vadd.f32 %v1705, 1.0
    %v1908 = vadd.f32 %v1707, 1.0
    %v1909 = vadd.f32 %v1709, 1.0
    %v1910 = vadd.f32 %v1711, 1.0
    %v1911 = vadd.f32 %v1713, 1.0
    %v1912 = vadd.f32 %v1715, 1.0
    %v1913 = vadd.f32 %v1717, 1.0
    %v1914 = vadd.f32 %v1719, 1.0
    %v1915 = vadd.f32 %v1721, 1.0
    %v1916 = vadd.f32 %v1723, 1.0
    %v1917 = vadd.f32 %v1725, 1.0
    %v1918 = vadd.f32 %v1727, 1.0
    %v1919 = vadd.f32 %v1729, 1.0
    %v1920 = vadd.f32 %v1731, 1.0
    %v1921 = vadd.f32 %v1733, 1.0
    %v1922 = vadd.f32 %v1735, 1.0
    %v1923 = vadd.f32 %v1737, 1.0
    %v1924 = vadd.f32 %v1739, 1.0
    %v1925 = vadd.f32 %v1741, 1.0
    %v1926 = vadd.f32 %v1743, 1.0
    %v1927 = vadd.f32 %v1745, 1.0
    %v1928 = vadd.f32 %v1747, 1.0
    %v1929 = vadd.f32 %v1749, 1.0
    %v1930 = vadd.f32 %v1751, 1.0
    %v1931 = vadd.f32 %v1753, 1.0
    %v1932 = vadd.f32 %v1755, 1.0
    %v1933 = vadd.f32 %v1757, 1.0
    %v1934 = vadd.f32 %v1759, 1.0
    %v1935 = vadd.f32 %v1761, 1.0
    %v1936 = vadd.f32 %v1763, 1.0
    %v1937 = vadd.f32 %v1765, 1.0
    %v1938 = vadd.f32 %v1767, 1.0
    %v1939 = vadd.f32 %v1769, 1.0
    %v1940 = vadd.f32 %v1771, 1.0
    %v1941 = vadd.f32 %v1773, 1.0
    %v1942 = vadd.f32 %v1775, 1.0
    %v1943 = vadd.f32 %v1777, 1.0
    %v1944 = vadd.f32 %v1779, 1.0
    %v1945 = vadd.f32 %v1781, 1.0
    %v1946 = vadd.f32 %v1783, 1.0
    %v1947 = vadd.f32 %v1785, 1.0
    %v1948 = vadd.f32 %v1787, 1.0
    %v1949 = vadd.f32 %v1789, 1.0
    %v1950 = vrcp.pop %v1790
    %v1951 = vrcp.pop %v1791
    %v1952 = vrcp.pop %v1792
    %v1953 = vrcp.pop %v1793
    %v1954 = vrcp.pop %v1794
    %v1955 = vrcp.pop %v1795
    %v1956 = vrcp.pop %v1796
    %v1957 = vrcp.pop %v1797
    %v1958 = vrcp.pop %v1798
    %v1959 = vrcp.pop %v1799
    %v1960 = vrcp.pop %v1800
    %v1961 = vrcp.pop %v1801
    %v1962 = vrcp.pop %v1802
    %v1963 = vrcp.pop %v1803
    %v1964 = vrcp.pop %v1804
    %v1965 = vrcp.pop %v1805
    %v1966 = vrcp.pop %v1806
    %v1967 = vrcp.pop %v1807
    %v1968 = vrcp.pop %v1808
    %v1969 = vrcp.pop %v1809
    %v1970 = vrcp.pop %v1810
    %v1971 = vrcp.pop %v1811
    %v1972 = vrcp.pop %v1812
    %v1973 = vrcp.pop %v1813
    %v1974 = vrcp.pop %v1814
    %v1975 = vrcp.pop %v1815
    %v1976 = vrcp.pop %v1816
    %v1977 = vrcp.pop %v1817
    %v1978 = vrcp.pop %v1818
    %v1979 = vrcp.pop %v1819
    %v1980 = vrcp.pop %v1820
    %v1981 = vrcp.pop %v1821
    %v1982 = vrcp.pop %v1822
    %v1983 = vrcp.pop %v1823
    %v1984 = vrcp.pop %v1824
    %v1985 = vrcp.pop %v1825
    %v1986 = vrcp.pop %v1826
    %v1987 = vrcp.pop %v1827
    %v1988 = vrcp.pop %v1828
    %v1989 = vrcp.pop %v1829
    %v1990 = vrcp.pop %v1830
    %v1991 = vrcp.pop %v1831
    %v1992 = vrcp.pop %v1832
    %v1993 = vrcp.pop %v1833
    %v1994 = vrcp.pop %v1834
    %v1995 = vrcp.pop %v1835
    %v1996 = vrcp.pop %v1836
    %v1997 = vrcp.pop %v1837
    %v1998 = vrcp.pop %v1838
    %v1999 = vrcp.pop %v1839
    %v2000 = vrcp.pop %v1840
    %v2001 = vrcp.pop %v1841
    %v2002 = vrcp.pop %v1842
    %v2003 = vrcp.pop %v1843
    %v2004 = vrcp.pop %v1844
    %v2005 = vrcp.pop %v1845
    %v2006 = vrcp.pop %v1846
    %v2007 = vrcp.pop %v1847
    %v2008 = vrcp.pop %v1848
    %v2009 = vrcp.pop %v1849
    %v2010 = vrcp.pop %v1850
    %v2011 = vrcp.pop %v1851
    %v2012 = vrcp.pop %v1852
    %v2013 = vrcp.pop %v1853
    %v2014 = vrcp.pop %v1854
    %v2015 = vrcp.pop %v1855
    %v2016 = vrcp.pop %v1856
    %v2017 = vrcp.pop %v1857
    %v2018 = vrcp.pop %v1858
    %v2019 = vrcp.pop %v1859
    %v2020 = vrcp.pop %v1860
    %v2021 = vrcp.pop %v1861
    %v2022 = vrcp.pop %v1862
    %v2023 = vrcp.pop %v1863
    %v2024 = vrcp.pop %v1864
    %v2025 = vrcp.pop %v1865
    %v2026 = vrcp.pop %v1866
    %v2027 = vrcp.pop %v1867
    %v2028 = vrcp.pop %v1868
    %v2029 = vrcp.pop %v1869
    %v2030 = vrcp.pop %v1870
    %v2031 = vrcp.pop %v1871
    %v2032 = vrcp.pop %v1872
    %v2033 = vrcp.pop %v1873
    %v2034 = vrcp.pop %v1874
    %v2035 = vrcp.pop %v1875
    %v2036 = vrcp.pop %v1876
    %v2037 = vrcp.pop %v1877
    %v2038 = vrcp.pop %v1878
    %v2039 = vrcp.pop %v1879
    %v2040 = vrcp.pop %v1880
    %v2041 = vrcp.pop %v1881
    %v2042 = vrcp.pop %v1882
    %v2043 = vrcp.pop %v1883
    %v2044 = vrcp.pop %v1884
    %v2045 = vrcp.pop %v1885
    %v2046 = vrcp.pop %v1886
    %v2047 = vrcp.pop %v1887
    %v2048 = vrcp.pop %v1888
    %v2049 = vrcp.pop %v1889
    %v2050 = vrcp.pop %v1890
    %v2051 = vrcp.pop %v1891
    %v2052 = vrcp.pop %v1892
    %v2053 = vrcp.pop %v1893
    %v2054 = vrcp.pop %v1894
    %v2055 = vrcp.pop %v1895
    %v2056 = vrcp.pop %v1896
    %v2057 = vrcp.pop %v1897
    %v2058 = vrcp.pop %v1898
    %v2059 = vrcp.pop %v1899
    %v2060 = vrcp.pop %v1900
    %v2061 = vrcp.pop %v1901
    %v2062 = vrcp.pop %v1902
    %v2063 = vrcp.pop %v1903
    %v2064 = vrcp.pop %v1904
    %v2065 = vrcp.pop %v1905
    %v2066 = vrcp.pop %v1906
    %v2067 = vrcp.pop %v1907
    %v2068 = vrcp.pop %v1908
    %v2069 = vrcp.pop %v1909
    %v2070 = vrcp.pop %v1910
    %v2071 = vrcp.pop %v1911
    %v2072 = vrcp.pop %v1912
    %v2073 = vrcp.pop %v1913
    %v2074 = vrcp.pop %v1914
    %v2075 = vrcp.pop %v1915
    %v2076 = vrcp.pop %v1916
    %v2077 = vrcp.pop %v1917
    %v2078 = vrcp.pop %v1918
    %v2079 = vrcp.pop %v1919
    %v2080 = vrcp.pop %v1920
    %v2081 = vrcp.pop %v1921
    %v2082 = vrcp.pop %v1922
    %v2083 = vrcp.pop %v1923
    %v2084 = vrcp.pop %v1924
    %v2085 = vrcp.pop %v1925
    %v2086 = vrcp.pop %v1926
    %v2087 = vrcp.pop %v1927
    %v2088 = vrcp.pop %v1928
    %v2089 = vrcp.pop %v1929
    %v2090 = vrcp.pop %v1930
    %v2091 = vrcp.pop %v1931
    %v2092 = vrcp.pop %v1932
    %v2093 = vrcp.pop %v1933
    %v2094 = vrcp.pop %v1934
    %v2095 = vrcp.pop %v1935
    %v2096 = vrcp.pop %v1936
    %v2097 = vrcp.pop %v1937
    %v2098 = vrcp.pop %v1938
    %v2099 = vrcp.pop %v1939
    %v2100 = vrcp.pop %v1940
    %v2101 = vrcp.pop %v1941
    %v2102 = vrcp.pop %v1942
    %v2103 = vrcp.pop %v1943
    %v2104 = vrcp.pop %v1944
    %v2105 = vrcp.pop %v1945
    %v2106 = vrcp.pop %v1946
    %v2107 = vrcp.pop %v1947
    %v2108 = vrcp.pop %v1948
    %v2109 = vrcp.pop %v1949
    %vm2110 = vcmp.ge.f32.partialorder %v620, 0.0
    %vm2111 = vcmp.ge.f32.partialorder %v622, 0.0
    %vm2112 = vcmp.ge.f32.partialorder %v733, 0.0
    %vm2113 = vcmp.ge.f32.partialorder %v735, 0.0
    %vm2114 = vcmp.ge.f32.partialorder %v846, 0.0
    %vm2115 = vcmp.ge.f32.partialorder %v848, 0.0
    %vm2116 = vcmp.ge.f32.partialorder %v959, 0.0
    %vm2117 = vcmp.ge.f32.partialorder %v961, 0.0
    %vm2118 = vcmp.ge.f32.partialorder %v1072, 0.0
    %vm2119 = vcmp.ge.f32.partialorder %v1074, 0.0
    %vm2120 = vcmp.ge.f32.partialorder %v624, 0.0
    %vm2121 = vcmp.ge.f32.partialorder %v626, 0.0
    %vm2122 = vcmp.ge.f32.partialorder %v737, 0.0
    %vm2123 = vcmp.ge.f32.partialorder %v739, 0.0
    %vm2124 = vcmp.ge.f32.partialorder %v850, 0.0
    %vm2125 = vcmp.ge.f32.partialorder %v852, 0.0
    %vm2126 = vcmp.ge.f32.partialorder %v963, 0.0
    %vm2127 = vcmp.ge.f32.partialorder %v965, 0.0
    %vm2128 = vcmp.ge.f32.partialorder %v1076, 0.0
    %vm2129 = vcmp.ge.f32.partialorder %v1078, 0.0
    %vm2130 = vcmp.ge.f32.partialorder %v630, 0.0
    %vm2131 = vcmp.ge.f32.partialorder %v632, 0.0
    %vm2132 = vcmp.ge.f32.partialorder %v743, 0.0
    %vm2133 = vcmp.ge.f32.partialorder %v745, 0.0
    %vm2134 = vcmp.ge.f32.partialorder %v856, 0.0
    %vm2135 = vcmp.ge.f32.partialorder %v858, 0.0
    %vm2136 = vcmp.ge.f32.partialorder %v969, 0.0
    %vm2137 = vcmp.ge.f32.partialorder %v971, 0.0
    %vm2138 = vcmp.ge.f32.partialorder %v1082, 0.0
    %vm2139 = vcmp.ge.f32.partialorder %v1084, 0.0
    %vm2140 = vcmp.ge.f32.partialorder %v634, 0.0
    %vm2141 = vcmp.ge.f32.partialorder %v636, 0.0
    %vm2142 = vcmp.ge.f32.partialorder %v747, 0.0
    %vm2143 = vcmp.ge.f32.partialorder %v749, 0.0
    %vm2144 = vcmp.ge.f32.partialorder %v860, 0.0
    %vm2145 = vcmp.ge.f32.partialorder %v862, 0.0
    %vm2146 = vcmp.ge.f32.partialorder %v973, 0.0
    %vm2147 = vcmp.ge.f32.partialorder %v975, 0.0
    %vm2148 = vcmp.ge.f32.partialorder %v1086, 0.0
    %vm2149 = vcmp.ge.f32.partialorder %v1088, 0.0
    %vm2150 = vcmp.ge.f32.partialorder %v640, 0.0
    %vm2151 = vcmp.ge.f32.partialorder %v642, 0.0
    %vm2152 = vcmp.ge.f32.partialorder %v753, 0.0
    %vm2153 = vcmp.ge.f32.partialorder %v755, 0.0
    %vm2154 = vcmp.ge.f32.partialorder %v866, 0.0
    %vm2155 = vcmp.ge.f32.partialorder %v868, 0.0
    %vm2156 = vcmp.ge.f32.partialorder %v979, 0.0
    %vm2157 = vcmp.ge.f32.partialorder %v981, 0.0
    %vm2158 = vcmp.ge.f32.partialorder %v1092, 0.0
    %vm2159 = vcmp.ge.f32.partialorder %v1094, 0.0
    %vm2160 = vcmp.ge.f32.partialorder %v644, 0.0
    %vm2161 = vcmp.ge.f32.partialorder %v646, 0.0
    %vm2162 = vcmp.ge.f32.partialorder %v757, 0.0
    %vm2163 = vcmp.ge.f32.partialorder %v759, 0.0
    %vm2164 = vcmp.ge.f32.partialorder %v870, 0.0
    %vm2165 = vcmp.ge.f32.partialorder %v872, 0.0
    %vm2166 = vcmp.ge.f32.partialorder %v983, 0.0
    %vm2167 = vcmp.ge.f32.partialorder %v985, 0.0
    %vm2168 = vcmp.ge.f32.partialorder %v1096, 0.0
    %vm2169 = vcmp.ge.f32.partialorder %v1098, 0.0
    %vm2170 = vcmp.ge.f32.partialorder %v650, 0.0
    %vm2171 = vcmp.ge.f32.partialorder %v652, 0.0
    %vm2172 = vcmp.ge.f32.partialorder %v763, 0.0
    %vm2173 = vcmp.ge.f32.partialorder %v765, 0.0
    %vm2174 = vcmp.ge.f32.partialorder %v876, 0.0
    %vm2175 = vcmp.ge.f32.partialorder %v878, 0.0
    %vm2176 = vcmp.ge.f32.partialorder %v989, 0.0
    %vm2177 = vcmp.ge.f32.partialorder %v991, 0.0
    %vm2178 = vcmp.ge.f32.partialorder %v1102, 0.0
    %vm2179 = vcmp.ge.f32.partialorder %v1104, 0.0
    %vm2180 = vcmp.ge.f32.partialorder %v654, 0.0
    %vm2181 = vcmp.ge.f32.partialorder %v656, 0.0
    %vm2182 = vcmp.ge.f32.partialorder %v767, 0.0
    %vm2183 = vcmp.ge.f32.partialorder %v769, 0.0
    %vm2184 = vcmp.ge.f32.partialorder %v880, 0.0
    %vm2185 = vcmp.ge.f32.partialorder %v882, 0.0
    %vm2186 = vcmp.ge.f32.partialorder %v993, 0.0
    %vm2187 = vcmp.ge.f32.partialorder %v995, 0.0
    %vm2188 = vcmp.ge.f32.partialorder %v1106, 0.0
    %vm2189 = vcmp.ge.f32.partialorder %v1108, 0.0
    %vm2190 = vcmp.ge.f32.partialorder %v660, 0.0
    %vm2191 = vcmp.ge.f32.partialorder %v662, 0.0
    %vm2192 = vcmp.ge.f32.partialorder %v773, 0.0
    %vm2193 = vcmp.ge.f32.partialorder %v775, 0.0
    %vm2194 = vcmp.ge.f32.partialorder %v886, 0.0
    %vm2195 = vcmp.ge.f32.partialorder %v888, 0.0
    %vm2196 = vcmp.ge.f32.partialorder %v999, 0.0
    %vm2197 = vcmp.ge.f32.partialorder %v1001, 0.0
    %vm2198 = vcmp.ge.f32.partialorder %v1112, 0.0
    %vm2199 = vcmp.ge.f32.partialorder %v1114, 0.0
    %vm2200 = vcmp.ge.f32.partialorder %v664, 0.0
    %vm2201 = vcmp.ge.f32.partialorder %v666, 0.0
    %vm2202 = vcmp.ge.f32.partialorder %v777, 0.0
    %vm2203 = vcmp.ge.f32.partialorder %v779, 0.0
    %vm2204 = vcmp.ge.f32.partialorder %v890, 0.0
    %vm2205 = vcmp.ge.f32.partialorder %v892, 0.0
    %vm2206 = vcmp.ge.f32.partialorder %v1003, 0.0
    %vm2207 = vcmp.ge.f32.partialorder %v1005, 0.0
    %vm2208 = vcmp.ge.f32.partialorder %v1116, 0.0
    %vm2209 = vcmp.ge.f32.partialorder %v1118, 0.0
    %vm2210 = vcmp.ge.f32.partialorder %v670, 0.0
    %vm2211 = vcmp.ge.f32.partialorder %v672, 0.0
    %vm2212 = vcmp.ge.f32.partialorder %v783, 0.0
    %vm2213 = vcmp.ge.f32.partialorder %v785, 0.0
    %vm2214 = vcmp.ge.f32.partialorder %v896, 0.0
    %vm2215 = vcmp.ge.f32.partialorder %v898, 0.0
    %vm2216 = vcmp.ge.f32.partialorder %v1009, 0.0
    %vm2217 = vcmp.ge.f32.partialorder %v1011, 0.0
    %vm2218 = vcmp.ge.f32.partialorder %v1122, 0.0
    %vm2219 = vcmp.ge.f32.partialorder %v1124, 0.0
    %vm2220 = vcmp.ge.f32.partialorder %v674, 0.0
    %vm2221 = vcmp.ge.f32.partialorder %v676, 0.0
    %vm2222 = vcmp.ge.f32.partialorder %v787, 0.0
    %vm2223 = vcmp.ge.f32.partialorder %v789, 0.0
    %vm2224 = vcmp.ge.f32.partialorder %v900, 0.0
    %vm2225 = vcmp.ge.f32.partialorder %v902, 0.0
    %vm2226 = vcmp.ge.f32.partialorder %v1013, 0.0
    %vm2227 = vcmp.ge.f32.partialorder %v1015, 0.0
    %vm2228 = vcmp.ge.f32.partialorder %v1126, 0.0
    %vm2229 = vcmp.ge.f32.partialorder %v1128, 0.0
    %vm2230 = vcmp.ge.f32.partialorder %v680, 0.0
    %vm2231 = vcmp.ge.f32.partialorder %v682, 0.0
    %vm2232 = vcmp.ge.f32.partialorder %v793, 0.0
    %vm2233 = vcmp.ge.f32.partialorder %v795, 0.0
    %vm2234 = vcmp.ge.f32.partialorder %v906, 0.0
    %vm2235 = vcmp.ge.f32.partialorder %v908, 0.0
    %vm2236 = vcmp.ge.f32.partialorder %v1019, 0.0
    %vm2237 = vcmp.ge.f32.partialorder %v1021, 0.0
    %vm2238 = vcmp.ge.f32.partialorder %v1132, 0.0
    %vm2239 = vcmp.ge.f32.partialorder %v1134, 0.0
    %vm2240 = vcmp.ge.f32.partialorder %v684, 0.0
    %vm2241 = vcmp.ge.f32.partialorder %v686, 0.0
    %vm2242 = vcmp.ge.f32.partialorder %v797, 0.0
    %vm2243 = vcmp.ge.f32.partialorder %v799, 0.0
    %vm2244 = vcmp.ge.f32.partialorder %v910, 0.0
    %vm2245 = vcmp.ge.f32.partialorder %v912, 0.0
    %vm2246 = vcmp.ge.f32.partialorder %v1023, 0.0
    %vm2247 = vcmp.ge.f32.partialorder %v1025, 0.0
    %vm2248 = vcmp.ge.f32.partialorder %v1136, 0.0
    %vm2249 = vcmp.ge.f32.partialorder %v1138, 0.0
    %vm2250 = vcmp.ge.f32.partialorder %v690, 0.0
    %vm2251 = vcmp.ge.f32.partialorder %v692, 0.0
    %vm2252 = vcmp.ge.f32.partialorder %v803, 0.0
    %vm2253 = vcmp.ge.f32.partialorder %v805, 0.0
    %vm2254 = vcmp.ge.f32.partialorder %v916, 0.0
    %vm2255 = vcmp.ge.f32.partialorder %v918, 0.0
    %vm2256 = vcmp.ge.f32.partialorder %v1029, 0.0
    %vm2257 = vcmp.ge.f32.partialorder %v1031, 0.0
    %vm2258 = vcmp.ge.f32.partialorder %v1142, 0.0
    %vm2259 = vcmp.ge.f32.partialorder %v1144, 0.0
    %vm2260 = vcmp.ge.f32.partialorder %v694, 0.0
    %vm2261 = vcmp.ge.f32.partialorder %v696, 0.0
    %vm2262 = vcmp.ge.f32.partialorder %v807, 0.0
    %vm2263 = vcmp.ge.f32.partialorder %v809, 0.0
    %vm2264 = vcmp.ge.f32.partialorder %v920, 0.0
    %vm2265 = vcmp.ge.f32.partialorder %v922, 0.0
    %vm2266 = vcmp.ge.f32.partialorder %v1033, 0.0
    %vm2267 = vcmp.ge.f32.partialorder %v1035, 0.0
    %vm2268 = vcmp.ge.f32.partialorder %v1146, 0.0
    %vm2269 = vcmp.ge.f32.partialorder %v1148, 0.0
    %v2270 = vmul.f32 %v1471, %v1950
    %v2271 = vmul.f32 %v1473, %v1951
    %v2272 = vmul.f32 %v1475, %v1952
    %v2273 = vmul.f32 %v1477, %v1953
    %v2274 = vmul.f32 %v1479, %v1954
    %v2275 = vmul.f32 %v1481, %v1955
    %v2276 = vmul.f32 %v1483, %v1956
    %v2277 = vmul.f32 %v1485, %v1957
    %v2278 = vmul.f32 %v1487, %v1958
    %v2279 = vmul.f32 %v1489, %v1959
    %v2280 = vmul.f32 %v1491, %v1960
    %v2281 = vmul.f32 %v1493, %v1961
    %v2282 = vmul.f32 %v1495, %v1962
    %v2283 = vmul.f32 %v1497, %v1963
    %v2284 = vmul.f32 %v1499, %v1964
    %v2285 = vmul.f32 %v1501, %v1965
    %v2286 = vmul.f32 %v1503, %v1966
    %v2287 = vmul.f32 %v1505, %v1967
    %v2288 = vmul.f32 %v1507, %v1968
    %v2289 = vmul.f32 %v1509, %v1969
    %v2290 = vmul.f32 %v1511, %v1970
    %v2291 = vmul.f32 %v1513, %v1971
    %v2292 = vmul.f32 %v1515, %v1972
    %v2293 = vmul.f32 %v1517, %v1973
    %v2294 = vmul.f32 %v1519, %v1974
    %v2295 = vmul.f32 %v1521, %v1975
    %v2296 = vmul.f32 %v1523, %v1976
    %v2297 = vmul.f32 %v1525, %v1977
    %v2298 = vmul.f32 %v1527, %v1978
    %v2299 = vmul.f32 %v1529, %v1979
    %v2300 = vmul.f32 %v1531, %v1980
    %v2301 = vmul.f32 %v1533, %v1981
    %v2302 = vmul.f32 %v1535, %v1982
    %v2303 = vmul.f32 %v1537, %v1983
    %v2304 = vmul.f32 %v1539, %v1984
    %v2305 = vmul.f32 %v1541, %v1985
    %v2306 = vmul.f32 %v1543, %v1986
    %v2307 = vmul.f32 %v1545, %v1987
    %v2308 = vmul.f32 %v1547, %v1988
    %v2309 = vmul.f32 %v1549, %v1989
    %v2310 = vmul.f32 %v1551, %v1990
    %v2311 = vmul.f32 %v1553, %v1991
    %v2312 = vmul.f32 %v1555, %v1992
    %v2313 = vmul.f32 %v1557, %v1993
    %v2314 = vmul.f32 %v1559, %v1994
    %v2315 = vmul.f32 %v1561, %v1995
    %v2316 = vmul.f32 %v1563, %v1996
    %v2317 = vmul.f32 %v1565, %v1997
    %v2318 = vmul.f32 %v1567, %v1998
    %v2319 = vmul.f32 %v1569, %v1999
    %v2320 = vmul.f32 %v1571, %v2000
    %v2321 = vmul.f32 %v1573, %v2001
    %v2322 = vmul.f32 %v1575, %v2002
    %v2323 = vmul.f32 %v1577, %v2003
    %v2324 = vmul.f32 %v1579, %v2004
    %v2325 = vmul.f32 %v1581, %v2005
    %v2326 = vmul.f32 %v1583, %v2006
    %v2327 = vmul.f32 %v1585, %v2007
    %v2328 = vmul.f32 %v1587, %v2008
    %v2329 = vmul.f32 %v1589, %v2009
    %v2330 = vmul.f32 %v1591, %v2010
    %v2331 = vmul.f32 %v1593, %v2011
    %v2332 = vmul.f32 %v1595, %v2012
    %v2333 = vmul.f32 %v1597, %v2013
    %v2334 = vmul.f32 %v1599, %v2014
    %v2335 = vmul.f32 %v1601, %v2015
    %v2336 = vmul.f32 %v1603, %v2016
    %v2337 = vmul.f32 %v1605, %v2017
    %v2338 = vmul.f32 %v1607, %v2018
    %v2339 = vmul.f32 %v1609, %v2019
    %v2340 = vmul.f32 %v1611, %v2020
    %v2341 = vmul.f32 %v1613, %v2021
    %v2342 = vmul.f32 %v1615, %v2022
    %v2343 = vmul.f32 %v1617, %v2023
    %v2344 = vmul.f32 %v1619, %v2024
    %v2345 = vmul.f32 %v1621, %v2025
    %v2346 = vmul.f32 %v1623, %v2026
    %v2347 = vmul.f32 %v1625, %v2027
    %v2348 = vmul.f32 %v1627, %v2028
    %v2349 = vmul.f32 %v1629, %v2029
    %v2350 = vmul.f32 %v1631, %v2030
    %v2351 = vmul.f32 %v1633, %v2031
    %v2352 = vmul.f32 %v1635, %v2032
    %v2353 = vmul.f32 %v1637, %v2033
    %v2354 = vmul.f32 %v1639, %v2034
    %v2355 = vmul.f32 %v1641, %v2035
    %v2356 = vmul.f32 %v1643, %v2036
    %v2357 = vmul.f32 %v1645, %v2037
    %v2358 = vmul.f32 %v1647, %v2038
    %v2359 = vmul.f32 %v1649, %v2039
    %v2360 = vmul.f32 %v1651, %v2040
    %v2361 = vmul.f32 %v1653, %v2041
    %v2362 = vmul.f32 %v1655, %v2042
    %v2363 = vmul.f32 %v1657, %v2043
    %v2364 = vmul.f32 %v1659, %v2044
    %v2365 = vmul.f32 %v1661, %v2045
    %v2366 = vmul.f32 %v1663, %v2046
    %v2367 = vmul.f32 %v1665, %v2047
    %v2368 = vmul.f32 %v1667, %v2048
    %v2369 = vmul.f32 %v1669, %v2049
    %v2370 = vmul.f32 %v1671, %v2050
    %v2371 = vmul.f32 %v1673, %v2051
    %v2372 = vmul.f32 %v1675, %v2052
    %v2373 = vmul.f32 %v1677, %v2053
    %v2374 = vmul.f32 %v1679, %v2054
    %v2375 = vmul.f32 %v1681, %v2055
    %v2376 = vmul.f32 %v1683, %v2056
    %v2377 = vmul.f32 %v1685, %v2057
    %v2378 = vmul.f32 %v1687, %v2058
    %v2379 = vmul.f32 %v1689, %v2059
    %v2380 = vmul.f32 %v1691, %v2060
    %v2381 = vmul.f32 %v1693, %v2061
    %v2382 = vmul.f32 %v1695, %v2062
    %v2383 = vmul.f32 %v1697, %v2063
    %v2384 = vmul.f32 %v1699, %v2064
    %v2385 = vmul.f32 %v1701, %v2065
    %v2386 = vmul.f32 %v1703, %v2066
    %v2387 = vmul.f32 %v1705, %v2067
    %v2388 = vmul.f32 %v1707, %v2068
    %v2389 = vmul.f32 %v1709, %v2069
    %v2390 = vmul.f32 %v1711, %v2070
    %v2391 = vmul.f32 %v1713, %v2071
    %v2392 = vmul.f32 %v1715, %v2072
    %v2393 = vmul.f32 %v1717, %v2073
    %v2394 = vmul.f32 %v1719, %v2074
    %v2395 = vmul.f32 %v1721, %v2075
    %v2396 = vmul.f32 %v1723, %v2076
    %v2397 = vmul.f32 %v1725, %v2077
    %v2398 = vmul.f32 %v1727, %v2078
    %v2399 = vmul.f32 %v1729, %v2079
    %v2400 = vmul.f32 %v1731, %v2080
    %v2401 = vmul.f32 %v1733, %v2081
    %v2402 = vmul.f32 %v1735, %v2082
    %v2403 = vmul.f32 %v1737, %v2083
    %v2404 = vmul.f32 %v1739, %v2084
    %v2405 = vmul.f32 %v1741, %v2085
    %v2406 = vmul.f32 %v1743, %v2086
    %v2407 = vmul.f32 %v1745, %v2087
    %v2408 = vmul.f32 %v1747, %v2088
    %v2409 = vmul.f32 %v1749, %v2089
    %v2410 = vmul.f32 %v1751, %v2090
    %v2411 = vmul.f32 %v1753, %v2091
    %v2412 = vmul.f32 %v1755, %v2092
    %v2413 = vmul.f32 %v1757, %v2093
    %v2414 = vmul.f32 %v1759, %v2094
    %v2415 = vmul.f32 %v1761, %v2095
    %v2416 = vmul.f32 %v1763, %v2096
    %v2417 = vmul.f32 %v1765, %v2097
    %v2418 = vmul.f32 %v1767, %v2098
    %v2419 = vmul.f32 %v1769, %v2099
    %v2420 = vmul.f32 %v1771, %v2100
    %v2421 = vmul.f32 %v1773, %v2101
    %v2422 = vmul.f32 %v1775, %v2102
    %v2423 = vmul.f32 %v1777, %v2103
    %v2424 = vmul.f32 %v1779, %v2104
    %v2425 = vmul.f32 %v1781, %v2105
    %v2426 = vmul.f32 %v1783, %v2106
    %v2427 = vmul.f32 %v1785, %v2107
    %v2428 = vmul.f32 %v1787, %v2108
    %v2429 = vmul.f32 %v1789, %v2109
    %v2430 = vsel %vm2110, %v1950, %v2270
    %v2431 = vsel %vm2111, %v1951, %v2271
    %v2432 = vsel %vm2112, %v1952, %v2272
    %v2433 = vsel %vm2113, %v1953, %v2273
    %v2434 = vsel %vm2114, %v1954, %v2274
    %v2435 = vsel %vm2115, %v1955, %v2275
    %v2436 = vsel %vm2116, %v1956, %v2276
    %v2437 = vsel %vm2117, %v1957, %v2277
    %v2438 = vsel %vm2118, %v1958, %v2278
    %v2439 = vsel %vm2119, %v1959, %v2279
    %v2440 = vsel %vm2120, %v1960, %v2280
    %v2441 = vsel %vm2121, %v1961, %v2281
    %v2442 = vsel %vm2122, %v1962, %v2282
    %v2443 = vsel %vm2123, %v1963, %v2283
    %v2444 = vsel %vm2124, %v1964, %v2284
    %v2445 = vsel %vm2125, %v1965, %v2285
    %v2446 = vsel %vm2126, %v1966, %v2286
    %v2447 = vsel %vm2127, %v1967, %v2287
    %v2448 = vsel %vm2128, %v1968, %v2288
    %v2449 = vsel %vm2129, %v1969, %v2289
    %v2450 = vsel %vm2130, %v1970, %v2290
    %v2451 = vsel %vm2131, %v1971, %v2291
    %v2452 = vsel %vm2132, %v1972, %v2292
    %v2453 = vsel %vm2133, %v1973, %v2293
    %v2454 = vsel %vm2134, %v1974, %v2294
    %v2455 = vsel %vm2135, %v1975, %v2295
    %v2456 = vsel %vm2136, %v1976, %v2296
    %v2457 = vsel %vm2137, %v1977, %v2297
    %v2458 = vsel %vm2138, %v1978, %v2298
    %v2459 = vsel %vm2139, %v1979, %v2299
    %v2460 = vsel %vm2140, %v1980, %v2300
    %v2461 = vsel %vm2141, %v1981, %v2301
    %v2462 = vsel %vm2142, %v1982, %v2302
    %v2463 = vsel %vm2143, %v1983, %v2303
    %v2464 = vsel %vm2144, %v1984, %v2304
    %v2465 = vsel %vm2145, %v1985, %v2305
    %v2466 = vsel %vm2146, %v1986, %v2306
    %v2467 = vsel %vm2147, %v1987, %v2307
    %v2468 = vsel %vm2148, %v1988, %v2308
    %v2469 = vsel %vm2149, %v1989, %v2309
    %v2470 = vsel %vm2150, %v1990, %v2310
    %v2471 = vsel %vm2151, %v1991, %v2311
    %v2472 = vsel %vm2152, %v1992, %v2312
    %v2473 = vsel %vm2153, %v1993, %v2313
    %v2474 = vsel %vm2154, %v1994, %v2314
    %v2475 = vsel %vm2155, %v1995, %v2315
    %v2476 = vsel %vm2156, %v1996, %v2316
    %v2477 = vsel %vm2157, %v1997, %v2317
    %v2478 = vsel %vm2158, %v1998, %v2318
    %v2479 = vsel %vm2159, %v1999, %v2319
    %v2480 = vsel %vm2160, %v2000, %v2320
    %v2481 = vsel %vm2161, %v2001, %v2321
    %v2482 = vsel %vm2162, %v2002, %v2322
    %v2483 = vsel %vm2163, %v2003, %v2323
    %v2484 = vsel %vm2164, %v2004, %v2324
    %v2485 = vsel %vm2165, %v2005, %v2325
    %v2486 = vsel %vm2166, %v2006, %v2326
    %v2487 = vsel %vm2167, %v2007, %v2327
    %v2488 = vsel %vm2168, %v2008, %v2328
    %v2489 = vsel %vm2169, %v2009, %v2329
    %v2490 = vsel %vm2170, %v2010, %v2330
    %v2491 = vsel %vm2171, %v2011, %v2331
    %v2492 = vsel %vm2172, %v2012, %v2332
    %v2493 = vsel %vm2173, %v2013, %v2333
    %v2494 = vsel %vm2174, %v2014, %v2334
    %v2495 = vsel %vm2175, %v2015, %v2335
    %v2496 = vsel %vm2176, %v2016, %v2336
    %v2497 = vsel %vm2177, %v2017, %v2337
    %v2498 = vsel %vm2178, %v2018, %v2338
    %v2499 = vsel %vm2179, %v2019, %v2339
    %v2500 = vsel %vm2180, %v2020, %v2340
    %v2501 = vsel %vm2181, %v2021, %v2341
    %v2502 = vsel %vm2182, %v2022, %v2342
    %v2503 = vsel %vm2183, %v2023, %v2343
    %v2504 = vsel %vm2184, %v2024, %v2344
    %v2505 = vsel %vm2185, %v2025, %v2345
    %v2506 = vsel %vm2186, %v2026, %v2346
    %v2507 = vsel %vm2187, %v2027, %v2347
    %v2508 = vsel %vm2188, %v2028, %v2348
    %v2509 = vsel %vm2189, %v2029, %v2349
    %v2510 = vsel %vm2190, %v2030, %v2350
    %v2511 = vsel %vm2191, %v2031, %v2351
    %v2512 = vsel %vm2192, %v2032, %v2352
    %v2513 = vsel %vm2193, %v2033, %v2353
    %v2514 = vsel %vm2194, %v2034, %v2354
    %v2515 = vsel %vm2195, %v2035, %v2355
    %v2516 = vsel %vm2196, %v2036, %v2356
    %v2517 = vsel %vm2197, %v2037, %v2357
    %v2518 = vsel %vm2198, %v2038, %v2358
    %v2519 = vsel %vm2199, %v2039, %v2359
    %v2520 = vsel %vm2200, %v2040, %v2360
    %v2521 = vsel %vm2201, %v2041, %v2361
    %v2522 = vsel %vm2202, %v2042, %v2362
    %v2523 = vsel %vm2203, %v2043, %v2363
    %v2524 = vsel %vm2204, %v2044, %v2364
    %v2525 = vsel %vm2205, %v2045, %v2365
    %v2526 = vsel %vm2206, %v2046, %v2366
    %v2527 = vsel %vm2207, %v2047, %v2367
    %v2528 = vsel %vm2208, %v2048, %v2368
    %v2529 = vsel %vm2209, %v2049, %v2369
    %v2530 = vsel %vm2210, %v2050, %v2370
    %v2531 = vsel %vm2211, %v2051, %v2371
    %v2532 = vsel %vm2212, %v2052, %v2372
    %v2533 = vsel %vm2213, %v2053, %v2373
    %v2534 = vsel %vm2214, %v2054, %v2374
    %v2535 = vsel %vm2215, %v2055, %v2375
    %v2536 = vsel %vm2216, %v2056, %v2376
    %v2537 = vsel %vm2217, %v2057, %v2377
    %v2538 = vsel %vm2218, %v2058, %v2378
    %v2539 = vsel %vm2219, %v2059, %v2379
    %v2540 = vsel %vm2220, %v2060, %v2380
    %v2541 = vsel %vm2221, %v2061, %v2381
    %v2542 = vsel %vm2222, %v2062, %v2382
    %v2543 = vsel %vm2223, %v2063, %v2383
    %v2544 = vsel %vm2224, %v2064, %v2384
    %v2545 = vsel %vm2225, %v2065, %v2385
    %v2546 = vsel %vm2226, %v2066, %v2386
    %v2547 = vsel %vm2227, %v2067, %v2387
    %v2548 = vsel %vm2228, %v2068, %v2388
    %v2549 = vsel %vm2229, %v2069, %v2389
    %v2550 = vsel %vm2230, %v2070, %v2390
    %v2551 = vsel %vm2231, %v2071, %v2391
    %v2552 = vsel %vm2232, %v2072, %v2392
    %v2553 = vsel %vm2233, %v2073, %v2393
    %v2554 = vsel %vm2234, %v2074, %v2394
    %v2555 = vsel %vm2235, %v2075, %v2395
    %v2556 = vsel %vm2236, %v2076, %v2396
    %v2557 = vsel %vm2237, %v2077, %v2397
    %v2558 = vsel %vm2238, %v2078, %v2398
    %v2559 = vsel %vm2239, %v2079, %v2399
    %v2560 = vsel %vm2240, %v2080, %v2400
    %v2561 = vsel %vm2241, %v2081, %v2401
    %v2562 = vsel %vm2242, %v2082, %v2402
    %v2563 = vsel %vm2243, %v2083, %v2403
    %v2564 = vsel %vm2244, %v2084, %v2404
    %v2565 = vsel %vm2245, %v2085, %v2405
    %v2566 = vsel %vm2246, %v2086, %v2406
    %v2567 = vsel %vm2247, %v2087, %v2407
    %v2568 = vsel %vm2248, %v2088, %v2408
    %v2569 = vsel %vm2249, %v2089, %v2409
    %v2570 = vsel %vm2250, %v2090, %v2410
    %v2571 = vsel %vm2251, %v2091, %v2411
    %v2572 = vsel %vm2252, %v2092, %v2412
    %v2573 = vsel %vm2253, %v2093, %v2413
    %v2574 = vsel %vm2254, %v2094, %v2414
    %v2575 = vsel %vm2255, %v2095, %v2415
    %v2576 = vsel %vm2256, %v2096, %v2416
    %v2577 = vsel %vm2257, %v2097, %v2417
    %v2578 = vsel %vm2258, %v2098, %v2418
    %v2579 = vsel %vm2259, %v2099, %v2419
    %v2580 = vsel %vm2260, %v2100, %v2420
    %v2581 = vsel %vm2261, %v2101, %v2421
    %v2582 = vsel %vm2262, %v2102, %v2422
    %v2583 = vsel %vm2263, %v2103, %v2423
    %v2584 = vsel %vm2264, %v2104, %v2424
    %v2585 = vsel %vm2265, %v2105, %v2425
    %v2586 = vsel %vm2266, %v2106, %v2426
    %v2587 = vsel %vm2267, %v2107, %v2427
    %v2588 = vsel %vm2268, %v2108, %v2428
    %v2589 = vsel %vm2269, %v2109, %v2429
    %v2590 = vmul.f32 %v620, %v2430
    %v2591 = vmul.f32 %v622, %v2431
    %v2592 = vmul.f32 %v733, %v2432
    %v2593 = vmul.f32 %v735, %v2433
    %v2594 = vmul.f32 %v846, %v2434
    %v2595 = vmul.f32 %v848, %v2435
    %v2596 = vmul.f32 %v959, %v2436
    %v2597 = vmul.f32 %v961, %v2437
    %v2598 = vmul.f32 %v1072, %v2438
    %v2599 = vmul.f32 %v1074, %v2439
    %v2600 = vmul.f32 %v624, %v2440
    %v2601 = vmul.f32 %v626, %v2441
    %v2602 = vmul.f32 %v737, %v2442
    %v2603 = vmul.f32 %v739, %v2443
    %v2604 = vmul.f32 %v850, %v2444
    %v2605 = vmul.f32 %v852, %v2445
    %v2606 = vmul.f32 %v963, %v2446
    %v2607 = vmul.f32 %v965, %v2447
    %v2608 = vmul.f32 %v1076, %v2448
    %v2609 = vmul.f32 %v1078, %v2449
    %v2610 = vmul.f32 %v630, %v2450
    %v2611 = vmul.f32 %v632, %v2451
    %v2612 = vmul.f32 %v743, %v2452
    %v2613 = vmul.f32 %v745, %v2453
    %v2614 = vmul.f32 %v856, %v2454
    %v2615 = vmul.f32 %v858, %v2455
    %v2616 = vmul.f32 %v969, %v2456
    %v2617 = vmul.f32 %v971, %v2457
    %v2618 = vmul.f32 %v1082, %v2458
    %v2619 = vmul.f32 %v1084, %v2459
    %v2620 = vmul.f32 %v634, %v2460
    %v2621 = vmul.f32 %v636, %v2461
    %v2622 = vmul.f32 %v747, %v2462
    %v2623 = vmul.f32 %v749, %v2463
    %v2624 = vmul.f32 %v860, %v2464
    %v2625 = vmul.f32 %v862, %v2465
    %v2626 = vmul.f32 %v973, %v2466
    %v2627 = vmul.f32 %v975, %v2467
    %v2628 = vmul.f32 %v1086, %v2468
    %v2629 = vmul.f32 %v1088, %v2469
    %v2630 = vmul.f32 %v640, %v2470
    %v2631 = vmul.f32 %v642, %v2471
    %v2632 = vmul.f32 %v753, %v2472
    %v2633 = vmul.f32 %v755, %v2473
    %v2634 = vmul.f32 %v866, %v2474
    %v2635 = vmul.f32 %v868, %v2475
    %v2636 = vmul.f32 %v979, %v2476
    %v2637 = vmul.f32 %v981, %v2477
    %v2638 = vmul.f32 %v1092, %v2478
    %v2639 = vmul.f32 %v1094, %v2479
    %v2640 = vmul.f32 %v644, %v2480
    %v2641 = vmul.f32 %v646, %v2481
    %v2642 = vmul.f32 %v757, %v2482
    %v2643 = vmul.f32 %v759, %v2483
    %v2644 = vmul.f32 %v870, %v2484
    %v2645 = vmul.f32 %v872, %v2485
    %v2646 = vmul.f32 %v983, %v2486
    %v2647 = vmul.f32 %v985, %v2487
    %v2648 = vmul.f32 %v1096, %v2488
    %v2649 = vmul.f32 %v1098, %v2489
    %v2650 = vmul.f32 %v650, %v2490
    %v2651 = vmul.f32 %v652, %v2491
    %v2652 = vmul.f32 %v763, %v2492
    %v2653 = vmul.f32 %v765, %v2493
    %v2654 = vmul.f32 %v876, %v2494
    %v2655 = vmul.f32 %v878, %v2495
    %v2656 = vmul.f32 %v989, %v2496
    %v2657 = vmul.f32 %v991, %v2497
    %v2658 = vmul.f32 %v1102, %v2498
    %v2659 = vmul.f32 %v1104, %v2499
    %v2660 = vmul.f32 %v654, %v2500
    %v2661 = vmul.f32 %v656, %v2501
    %v2662 = vmul.f32 %v767, %v2502
    %v2663 = vmul.f32 %v769, %v2503
    %v2664 = vmul.f32 %v880, %v2504
    %v2665 = vmul.f32 %v882, %v2505
    %v2666 = vmul.f32 %v993, %v2506
    %v2667 = vmul.f32 %v995, %v2507
    %v2668 = vmul.f32 %v1106, %v2508
    %v2669 = vmul.f32 %v1108, %v2509
    %v2670 = vmul.f32 %v660, %v2510
    %v2671 = vmul.f32 %v662, %v2511
    %v2672 = vmul.f32 %v773, %v2512
    %v2673 = vmul.f32 %v775, %v2513
    %v2674 = vmul.f32 %v886, %v2514
    %v2675 = vmul.f32 %v888, %v2515
    %v2676 = vmul.f32 %v999, %v2516
    %v2677 = vmul.f32 %v1001, %v2517
    %v2678 = vmul.f32 %v1112, %v2518
    %v2679 = vmul.f32 %v1114, %v2519
    %v2680 = vmul.f32 %v664, %v2520
    %v2681 = vmul.f32 %v666, %v2521
    %v2682 = vmul.f32 %v777, %v2522
    %v2683 = vmul.f32 %v779, %v2523
    %v2684 = vmul.f32 %v890, %v2524
    %v2685 = vmul.f32 %v892, %v2525
    %v2686 = vmul.f32 %v1003, %v2526
    %v2687 = vmul.f32 %v1005, %v2527
    %v2688 = vmul.f32 %v1116, %v2528
    %v2689 = vmul.f32 %v1118, %v2529
    %v2690 = vmul.f32 %v670, %v2530
    %v2691 = vmul.f32 %v672, %v2531
    %v2692 = vmul.f32 %v783, %v2532
    %v2693 = vmul.f32 %v785, %v2533
    %v2694 = vmul.f32 %v896, %v2534
    %v2695 = vmul.f32 %v898, %v2535
    %v2696 = vmul.f32 %v1009, %v2536
    %v2697 = vmul.f32 %v1011, %v2537
    %v2698 = vmul.f32 %v1122, %v2538
    %v2699 = vmul.f32 %v1124, %v2539
    %v2700 = vmul.f32 %v674, %v2540
    %v2701 = vmul.f32 %v676, %v2541
    %v2702 = vmul.f32 %v787, %v2542
    %v2703 = vmul.f32 %v789, %v2543
    %v2704 = vmul.f32 %v900, %v2544
    %v2705 = vmul.f32 %v902, %v2545
    %v2706 = vmul.f32 %v1013, %v2546
    %v2707 = vmul.f32 %v1015, %v2547
    %v2708 = vmul.f32 %v1126, %v2548
    %v2709 = vmul.f32 %v1128, %v2549
    %v2710 = vmul.f32 %v680, %v2550
    %v2711 = vmul.f32 %v682, %v2551
    %v2712 = vmul.f32 %v793, %v2552
    %v2713 = vmul.f32 %v795, %v2553
    %v2714 = vmul.f32 %v906, %v2554
    %v2715 = vmul.f32 %v908, %v2555
    %v2716 = vmul.f32 %v1019, %v2556
    %v2717 = vmul.f32 %v1021, %v2557
    %v2718 = vmul.f32 %v1132, %v2558
    %v2719 = vmul.f32 %v1134, %v2559
    %v2720 = vmul.f32 %v684, %v2560
    %v2721 = vmul.f32 %v686, %v2561
    %v2722 = vmul.f32 %v797, %v2562
    %v2723 = vmul.f32 %v799, %v2563
    %v2724 = vmul.f32 %v910, %v2564
    %v2725 = vmul.f32 %v912, %v2565
    %v2726 = vmul.f32 %v1023, %v2566
    %v2727 = vmul.f32 %v1025, %v2567
    %v2728 = vmul.f32 %v1136, %v2568
    %v2729 = vmul.f32 %v1138, %v2569
    %v2730 = vmul.f32 %v690, %v2570
    %v2731 = vmul.f32 %v692, %v2571
    %v2732 = vmul.f32 %v803, %v2572
    %v2733 = vmul.f32 %v805, %v2573
    %v2734 = vmul.f32 %v916, %v2574
    %v2735 = vmul.f32 %v918, %v2575
    %v2736 = vmul.f32 %v1029, %v2576
    %v2737 = vmul.f32 %v1031, %v2577
    %v2738 = vmul.f32 %v1142, %v2578
    %v2739 = vmul.f32 %v1144, %v2579
    %v2740 = vmul.f32 %v694, %v2580
    %v2741 = vmul.f32 %v696, %v2581
    %v2742 = vmul.f32 %v807, %v2582
    %v2743 = vmul.f32 %v809, %v2583
    %v2744 = vmul.f32 %v920, %v2584
    %v2745 = vmul.f32 %v922, %v2585
    %v2746 = vmul.f32 %v1033, %v2586
    %v2747 = vmul.f32 %v1035, %v2587
    %v2748 = vmul.f32 %v1146, %v2588
    %v2749 = vmul.f32 %v1148, %v2589
    %v2750 = vld [vmem:[%s2] sm:$0x3]
    %2751 = vmatprep.subr.mxu0 %v2591
    %2752 = vmatpush1.msra.mxu0 %v2590
    %2753 = vmatprep.subr.mxu0 %v2601
    %2754 = vmatpush1.msra.mxu0 %v2600
    %2755 = vmatprep.subr.mxu0 %v2611
    %2756 = vmatpush1.msra.mxu0 %v2610
    %2757 = vmatprep.subr.mxu0 %v2621
    %2758 = vmatpush1.msra.mxu0 %v2620
    %2759 = vmatprep.subr.mxu0 %v2631
    %2760 = vmatpush1.msra.mxu0 %v2630
    %2761 = vmatprep.subr.mxu0 %v2641
    %2762 = vmatpush1.msra.mxu0 %v2640
    %2763 = vmatprep.subr.mxu0 %v2651
    %2764 = vmatpush1.msra.mxu0 %v2650
    %2765 = vmatprep.subr.mxu0 %v2661
    %2766 = vmatpush1.msra.mxu0 %v2660
    %2767 = vmatprep.subr.mxu0 %v2671
    %2768 = vmatpush1.msra.mxu0 %v2670
    %2769 = vmatprep.subr.mxu0 %v2681
    %2770 = vmatpush1.msra.mxu0 %v2680
    %2771 = vmatprep.subr.mxu0 %v2691
    %2772 = vmatpush1.msra.mxu0 %v2690
    %2773 = vmatprep.subr.mxu0 %v2701
    %2774 = vmatpush1.msra.mxu0 %v2700
    %2775 = vmatprep.subr.mxu0 %v2711
    %2776 = vmatpush1.msra.mxu0 %v2710
    %2777 = vmatprep.subr.mxu0 %v2721
    %2778 = vmatpush1.msra.mxu0 %v2720
    %2779 = vmatprep.subr.mxu0 %v2731
    %2780 = vmatpush1.msra.mxu0 %v2730
    %2781 = vmatprep.subr.mxu0 %v2741
    %2782 = vmatpush1.msra.mxu0 %v2740
    %2783 = vmatprep.subr.mxu0 0.0
    %2784 = vmatpush1.msra.mxu0 0.0
    %2785 = vmatprep.subr.mxu0 0.0
    %2786 = vmatpush1.msra.mxu0 0.0
    %2787 = vmatprep.subr.mxu0 0.0
    %2788 = vmatpush1.msra.mxu0 0.0
    %2789 = vmatprep.subr.mxu0 0.0
    %2790 = vmatpush1.msra.mxu0 0.0
    %2791 = vmatprep.subr.mxu0 0.0
    %2792 = vmatpush1.msra.mxu0 0.0
    %2793 = vmatprep.subr.mxu0 0.0
    %2794 = vmatpush1.msra.mxu0 0.0
    %2795 = vmatprep.subr.mxu0 0.0
    %2796 = vmatpush1.msra.mxu0 0.0
    %2797 = vmatprep.subr.mxu0 0.0
    %2798 = vmatpush1.msra.mxu0 0.0
    %2799 = vmatprep.subr.mxu0 0.0
    %2800 = vmatpush1.msra.mxu0 0.0
    %2801 = vmatprep.subr.mxu0 0.0
    %2802 = vmatpush1.msra.mxu0 0.0
    %2803 = vmatprep.subr.mxu0 0.0
    %2804 = vmatpush1.msra.mxu0 0.0
    %2805 = vmatprep.subr.mxu0 0.0
    %2806 = vmatpush1.msra.mxu0 0.0
    %2807 = vmatprep.subr.mxu0 0.0
    %2808 = vmatpush1.msra.mxu0 0.0
    %2809 = vmatprep.subr.mxu0 0.0
    %2810 = vmatpush1.msra.mxu0 0.0
    %2811 = vmatprep.subr.mxu0 0.0
    %2812 = vmatpush1.msra.mxu0 0.0
    %2813 = vmatprep.subr.mxu0 0.0
    %2814 = vmatpush1.msra.mxu0 0.0
    %2815 = vmatprep.mubr.f32.mxu0 0.0
    %2816 = vmatmul.mubr.f32.gmra.mrb[0].mxu0 %v2750
    %v2817 = vpop.f32.mrb[0].mxu0
    %v2818 = vadd.f32 0.0, %v2817
    %v2819 = vpop.f32.mrb[0].mxu0
    %v2820 = vadd.f32 0.0, %v2819
    %2821 = vdwg.mxu0
    %2822 = vmatprep.subr.mxu0 %v2593
    %2823 = vmatpush1.msra.mxu0 %v2592
    %2824 = vmatprep.subr.mxu0 %v2603
    %2825 = vmatpush1.msra.mxu0 %v2602
    %2826 = vmatprep.subr.mxu0 %v2613
    %2827 = vmatpush1.msra.mxu0 %v2612
    %2828 = vmatprep.subr.mxu0 %v2623
    %2829 = vmatpush1.msra.mxu0 %v2622
    %2830 = vmatprep.subr.mxu0 %v2633
    %2831 = vmatpush1.msra.mxu0 %v2632
    %2832 = vmatprep.subr.mxu0 %v2643
    %2833 = vmatpush1.msra.mxu0 %v2642
    %2834 = vmatprep.subr.mxu0 %v2653
    %2835 = vmatpush1.msra.mxu0 %v2652
    %2836 = vmatprep.subr.mxu0 %v2663
    %2837 = vmatpush1.msra.mxu0 %v2662
    %2838 = vmatprep.subr.mxu0 %v2673
    %2839 = vmatpush1.msra.mxu0 %v2672
    %2840 = vmatprep.subr.mxu0 %v2683
    %2841 = vmatpush1.msra.mxu0 %v2682
    %2842 = vmatprep.subr.mxu0 %v2693
    %2843 = vmatpush1.msra.mxu0 %v2692
    %2844 = vmatprep.subr.mxu0 %v2703
    %2845 = vmatpush1.msra.mxu0 %v2702
    %2846 = vmatprep.subr.mxu0 %v2713
    %2847 = vmatpush1.msra.mxu0 %v2712
    %2848 = vmatprep.subr.mxu0 %v2723
    %2849 = vmatpush1.msra.mxu0 %v2722
    %2850 = vmatprep.subr.mxu0 %v2733
    %2851 = vmatpush1.msra.mxu0 %v2732
    %2852 = vmatprep.subr.mxu0 %v2743
    %2853 = vmatpush1.msra.mxu0 %v2742
    %2854 = vmatprep.subr.mxu0 0.0
    %2855 = vmatpush1.msra.mxu0 0.0
    %2856 = vmatprep.subr.mxu0 0.0
    %2857 = vmatpush1.msra.mxu0 0.0
    %2858 = vmatprep.subr.mxu0 0.0
    %2859 = vmatpush1.msra.mxu0 0.0
    %2860 = vmatprep.subr.mxu0 0.0
    %2861 = vmatpush1.msra.mxu0 0.0
    %2862 = vmatprep.subr.mxu0 0.0
    %2863 = vmatpush1.msra.mxu0 0.0
    %2864 = vmatprep.subr.mxu0 0.0
    %2865 = vmatpush1.msra.mxu0 0.0
    %2866 = vmatprep.subr.mxu0 0.0
    %2867 = vmatpush1.msra.mxu0 0.0
    %2868 = vmatprep.subr.mxu0 0.0
    %2869 = vmatpush1.msra.mxu0 0.0
    %2870 = vmatprep.subr.mxu0 0.0
    %2871 = vmatpush1.msra.mxu0 0.0
    %2872 = vmatprep.subr.mxu0 0.0
    %2873 = vmatpush1.msra.mxu0 0.0
    %2874 = vmatprep.subr.mxu0 0.0
    %2875 = vmatpush1.msra.mxu0 0.0
    %2876 = vmatprep.subr.mxu0 0.0
    %2877 = vmatpush1.msra.mxu0 0.0
    %2878 = vmatprep.subr.mxu0 0.0
    %2879 = vmatpush1.msra.mxu0 0.0
    %2880 = vmatprep.subr.mxu0 0.0
    %2881 = vmatpush1.msra.mxu0 0.0
    %2882 = vmatprep.subr.mxu0 0.0
    %2883 = vmatpush1.msra.mxu0 0.0
    %2884 = vmatprep.subr.mxu0 0.0
    %2885 = vmatpush1.msra.mxu0 0.0
    %2886 = vmatprep.mubr.f32.mxu0 0.0
    %2887 = vmatmul.mubr.f32.gmra.mrb[0].mxu0 %v2750
    %v2888 = vpop.f32.mrb[0].mxu0
    %v2889 = vadd.f32 0.0, %v2888
    %v2890 = vpop.f32.mrb[0].mxu0
    %v2891 = vadd.f32 0.0, %v2890
    %2892 = vdwg.mxu0
    %2893 = vmatprep.subr.mxu0 %v2595
    %2894 = vmatpush1.msra.mxu0 %v2594
    %2895 = vmatprep.subr.mxu0 %v2605
    %2896 = vmatpush1.msra.mxu0 %v2604
    %2897 = vmatprep.subr.mxu0 %v2615
    %2898 = vmatpush1.msra.mxu0 %v2614
    %2899 = vmatprep.subr.mxu0 %v2625
    %2900 = vmatpush1.msra.mxu0 %v2624
    %2901 = vmatprep.subr.mxu0 %v2635
    %2902 = vmatpush1.msra.mxu0 %v2634
    %2903 = vmatprep.subr.mxu0 %v2645
    %2904 = vmatpush1.msra.mxu0 %v2644
    %2905 = vmatprep.subr.mxu0 %v2655
    %2906 = vmatpush1.msra.mxu0 %v2654
    %2907 = vmatprep.subr.mxu0 %v2665
    %2908 = vmatpush1.msra.mxu0 %v2664
    %2909 = vmatprep.subr.mxu0 %v2675
    %2910 = vmatpush1.msra.mxu0 %v2674
    %2911 = vmatprep.subr.mxu0 %v2685
    %2912 = vmatpush1.msra.mxu0 %v2684
    %2913 = vmatprep.subr.mxu0 %v2695
    %2914 = vmatpush1.msra.mxu0 %v2694
    %2915 = vmatprep.subr.mxu0 %v2705
    %2916 = vmatpush1.msra.mxu0 %v2704
    %2917 = vmatprep.subr.mxu0 %v2715
    %2918 = vmatpush1.msra.mxu0 %v2714
    %2919 = vmatprep.subr.mxu0 %v2725
    %2920 = vmatpush1.msra.mxu0 %v2724
    %2921 = vmatprep.subr.mxu0 %v2735
    %2922 = vmatpush1.msra.mxu0 %v2734
    %2923 = vmatprep.subr.mxu0 %v2745
    %2924 = vmatpush1.msra.mxu0 %v2744
    %2925 = vmatprep.subr.mxu0 0.0
    %2926 = vmatpush1.msra.mxu0 0.0
    %2927 = vmatprep.subr.mxu0 0.0
    %2928 = vmatpush1.msra.mxu0 0.0
    %2929 = vmatprep.subr.mxu0 0.0
    %2930 = vmatpush1.msra.mxu0 0.0
    %2931 = vmatprep.subr.mxu0 0.0
    %2932 = vmatpush1.msra.mxu0 0.0
    %2933 = vmatprep.subr.mxu0 0.0
    %2934 = vmatpush1.msra.mxu0 0.0
    %2935 = vmatprep.subr.mxu0 0.0
    %2936 = vmatpush1.msra.mxu0 0.0
    %2937 = vmatprep.subr.mxu0 0.0
    %2938 = vmatpush1.msra.mxu0 0.0
    %2939 = vmatprep.subr.mxu0 0.0
    %2940 = vmatpush1.msra.mxu0 0.0
    %2941 = vmatprep.subr.mxu0 0.0
    %2942 = vmatpush1.msra.mxu0 0.0
    %2943 = vmatprep.subr.mxu0 0.0
    %2944 = vmatpush1.msra.mxu0 0.0
    %2945 = vmatprep.subr.mxu0 0.0
    %2946 = vmatpush1.msra.mxu0 0.0
    %2947 = vmatprep.subr.mxu0 0.0
    %2948 = vmatpush1.msra.mxu0 0.0
    %2949 = vmatprep.subr.mxu0 0.0
    %2950 = vmatpush1.msra.mxu0 0.0
    %2951 = vmatprep.subr.mxu0 0.0
    %2952 = vmatpush1.msra.mxu0 0.0
    %2953 = vmatprep.subr.mxu0 0.0
    %2954 = vmatpush1.msra.mxu0 0.0
    %2955 = vmatprep.subr.mxu0 0.0
    %2956 = vmatpush1.msra.mxu0 0.0
    %2957 = vmatprep.mubr.f32.mxu0 0.0
    %2958 = vmatmul.mubr.f32.gmra.mrb[0].mxu0 %v2750
    %v2959 = vpop.f32.mrb[0].mxu0
    %v2960 = vadd.f32 0.0, %v2959
    %v2961 = vpop.f32.mrb[0].mxu0
    %v2962 = vadd.f32 0.0, %v2961
    %2963 = vdwg.mxu0
    %2964 = vmatprep.subr.mxu0 %v2597
    %2965 = vmatpush1.msra.mxu0 %v2596
    %2966 = vmatprep.subr.mxu0 %v2607
    %2967 = vmatpush1.msra.mxu0 %v2606
    %2968 = vmatprep.subr.mxu0 %v2617
    %2969 = vmatpush1.msra.mxu0 %v2616
    %2970 = vmatprep.subr.mxu0 %v2627
    %2971 = vmatpush1.msra.mxu0 %v2626
    %2972 = vmatprep.subr.mxu0 %v2637
    %2973 = vmatpush1.msra.mxu0 %v2636
    %2974 = vmatprep.subr.mxu0 %v2647
    %2975 = vmatpush1.msra.mxu0 %v2646
    %2976 = vmatprep.subr.mxu0 %v2657
    %2977 = vmatpush1.msra.mxu0 %v2656
    %2978 = vmatprep.subr.mxu0 %v2667
    %2979 = vmatpush1.msra.mxu0 %v2666
    %2980 = vmatprep.subr.mxu0 %v2677
    %2981 = vmatpush1.msra.mxu0 %v2676
    %2982 = vmatprep.subr.mxu0 %v2687
    %2983 = vmatpush1.msra.mxu0 %v2686
    %2984 = vmatprep.subr.mxu0 %v2697
    %2985 = vmatpush1.msra.mxu0 %v2696
    %2986 = vmatprep.subr.mxu0 %v2707
    %2987 = vmatpush1.msra.mxu0 %v2706
    %2988 = vmatprep.subr.mxu0 %v2717
    %2989 = vmatpush1.msra.mxu0 %v2716
    %2990 = vmatprep.subr.mxu0 %v2727
    %2991 = vmatpush1.msra.mxu0 %v2726
    %2992 = vmatprep.subr.mxu0 %v2737
    %2993 = vmatpush1.msra.mxu0 %v2736
    %2994 = vmatprep.subr.mxu0 %v2747
    %2995 = vmatpush1.msra.mxu0 %v2746
    %2996 = vmatprep.subr.mxu0 0.0
    %2997 = vmatpush1.msra.mxu0 0.0
    %2998 = vmatprep.subr.mxu0 0.0
    %2999 = vmatpush1.msra.mxu0 0.0
    %3000 = vmatprep.subr.mxu0 0.0
    %3001 = vmatpush1.msra.mxu0 0.0
    %3002 = vmatprep.subr.mxu0 0.0
    %3003 = vmatpush1.msra.mxu0 0.0
    %3004 = vmatprep.subr.mxu0 0.0
    %3005 = vmatpush1.msra.mxu0 0.0
    %3006 = vmatprep.subr.mxu0 0.0
    %3007 = vmatpush1.msra.mxu0 0.0
    %3008 = vmatprep.subr.mxu0 0.0
    %3009 = vmatpush1.msra.mxu0 0.0
    %3010 = vmatprep.subr.mxu0 0.0
    %3011 = vmatpush1.msra.mxu0 0.0
    %3012 = vmatprep.subr.mxu0 0.0
    %3013 = vmatpush1.msra.mxu0 0.0
    %3014 = vmatprep.subr.mxu0 0.0
    %3015 = vmatpush1.msra.mxu0 0.0
    %3016 = vmatprep.subr.mxu0 0.0
    %3017 = vmatpush1.msra.mxu0 0.0
    %3018 = vmatprep.subr.mxu0 0.0
    %3019 = vmatpush1.msra.mxu0 0.0
    %3020 = vmatprep.subr.mxu0 0.0
    %3021 = vmatpush1.msra.mxu0 0.0
    %3022 = vmatprep.subr.mxu0 0.0
    %3023 = vmatpush1.msra.mxu0 0.0
    %3024 = vmatprep.subr.mxu0 0.0
    %3025 = vmatpush1.msra.mxu0 0.0
    %3026 = vmatprep.subr.mxu0 0.0
    %3027 = vmatpush1.msra.mxu0 0.0
    %3028 = vmatprep.mubr.f32.mxu0 0.0
    %3029 = vmatmul.mubr.f32.gmra.mrb[0].mxu0 %v2750
    %v3030 = vpop.f32.mrb[0].mxu0
    %v3031 = vadd.f32 0.0, %v3030
    %v3032 = vpop.f32.mrb[0].mxu0
    %v3033 = vadd.f32 0.0, %v3032
    %3034 = vdwg.mxu0
    %3035 = vmatprep.subr.mxu0 %v2599
    %3036 = vmatpush1.msra.mxu0 %v2598
    %3037 = vmatprep.subr.mxu0 %v2609
    %3038 = vmatpush1.msra.mxu0 %v2608
    %3039 = vmatprep.subr.mxu0 %v2619
    %3040 = vmatpush1.msra.mxu0 %v2618
    %3041 = vmatprep.subr.mxu0 %v2629
    %3042 = vmatpush1.msra.mxu0 %v2628
    %3043 = vmatprep.subr.mxu0 %v2639
    %3044 = vmatpush1.msra.mxu0 %v2638
    %3045 = vmatprep.subr.mxu0 %v2649
    %3046 = vmatpush1.msra.mxu0 %v2648
    %3047 = vmatprep.subr.mxu0 %v2659
    %3048 = vmatpush1.msra.mxu0 %v2658
    %3049 = vmatprep.subr.mxu0 %v2669
    %3050 = vmatpush1.msra.mxu0 %v2668
    %3051 = vmatprep.subr.mxu0 %v2679
    %3052 = vmatpush1.msra.mxu0 %v2678
    %3053 = vmatprep.subr.mxu0 %v2689
    %3054 = vmatpush1.msra.mxu0 %v2688
    %3055 = vmatprep.subr.mxu0 %v2699
    %3056 = vmatpush1.msra.mxu0 %v2698
    %3057 = vmatprep.subr.mxu0 %v2709
    %3058 = vmatpush1.msra.mxu0 %v2708
    %3059 = vmatprep.subr.mxu0 %v2719
    %3060 = vmatpush1.msra.mxu0 %v2718
    %3061 = vmatprep.subr.mxu0 %v2729
    %3062 = vmatpush1.msra.mxu0 %v2728
    %3063 = vmatprep.subr.mxu0 %v2739
    %3064 = vmatpush1.msra.mxu0 %v2738
    %3065 = vmatprep.subr.mxu0 %v2749
    %3066 = vmatpush1.msra.mxu0 %v2748
    %3067 = vmatprep.subr.mxu0 0.0
    %3068 = vmatpush1.msra.mxu0 0.0
    %3069 = vmatprep.subr.mxu0 0.0
    %3070 = vmatpush1.msra.mxu0 0.0
    %3071 = vmatprep.subr.mxu0 0.0
    %3072 = vmatpush1.msra.mxu0 0.0
    %3073 = vmatprep.subr.mxu0 0.0
    %3074 = vmatpush1.msra.mxu0 0.0
    %3075 = vmatprep.subr.mxu0 0.0
    %3076 = vmatpush1.msra.mxu0 0.0
    %3077 = vmatprep.subr.mxu0 0.0
    %3078 = vmatpush1.msra.mxu0 0.0
    %3079 = vmatprep.subr.mxu0 0.0
    %3080 = vmatpush1.msra.mxu0 0.0
    %3081 = vmatprep.subr.mxu0 0.0
    %3082 = vmatpush1.msra.mxu0 0.0
    %3083 = vmatprep.subr.mxu0 0.0
    %3084 = vmatpush1.msra.mxu0 0.0
    %3085 = vmatprep.subr.mxu0 0.0
    %3086 = vmatpush1.msra.mxu0 0.0
    %3087 = vmatprep.subr.mxu0 0.0
    %3088 = vmatpush1.msra.mxu0 0.0
    %3089 = vmatprep.subr.mxu0 0.0
    %3090 = vmatpush1.msra.mxu0 0.0
    %3091 = vmatprep.subr.mxu0 0.0
    %3092 = vmatpush1.msra.mxu0 0.0
    %3093 = vmatprep.subr.mxu0 0.0
    %3094 = vmatpush1.msra.mxu0 0.0
    %3095 = vmatprep.subr.mxu0 0.0
    %3096 = vmatpush1.msra.mxu0 0.0
    %3097 = vmatprep.subr.mxu0 0.0
    %3098 = vmatpush1.msra.mxu0 0.0
    %3099 = vmatprep.mubr.f32.mxu0 0.0
    %3100 = vmatmul.mubr.f32.gmra.mrb[0].mxu0 %v2750
    %v3101 = vpop.f32.mrb[0].mxu0
    %v3102 = vadd.f32 0.0, %v3101
    %v3103 = vpop.f32.mrb[0].mxu0
    %v3104 = vadd.f32 0.0, %v3103
    %3105 = vdwg.mxu0
    %v3106 = vld [vmem:[%s1] sm:$0x3]
    %v3107 = vld [vmem:[%s7] sm:$0xff]
    %v3108 = vld [vmem:[%s7 + $0x8] sm:$0xff]
    %v3109 = vld [vmem:[%s7 + $0x10] sm:$0xf]
    %v3110 = vld [vmem:[%s8] sm:$0x1]
    %v3112 = vlaneseq
    %v3113 = vshrl.u32 %v3112, 7
    %v3114 = vsub.s32 0, %v3113
    %v3115 = vrot.slane %v3110, %v3114
    %vm3117 = vcmask 162816
    %v3119 = vsel %vm3117, %v3106, 0
    %vm3121 = vcmask 1043456
    %v3123 = vsel %vm3121, %v3109, 0
    %3125 = vmatprep.subr.mxu0 0.0
    %3126 = vmatpush1.msra.mxu0 %v3107
    %3127 = vmatprep.subr.mxu0 0.0
    %3128 = vmatpush1.msra.mxu0 %v3108
    %3129 = vmatprep.subr.mxu0 0.0
    %3130 = vmatpush1.msra.mxu0 %v3123
    %3131 = vmatprep.subr.mxu0 0.0
    %3132 = vmatpush1.msra.mxu0 0.0
    %3133 = vmatprep.subr.mxu0 0.0
    %3134 = vmatpush1.msra.mxu0 0.0
    %3135 = vmatprep.subr.mxu0 0.0
    %3136 = vmatpush1.msra.mxu0 0.0
    %3137 = vmatprep.subr.mxu0 0.0
    %3138 = vmatpush1.msra.mxu0 0.0
    %3139 = vmatprep.subr.mxu0 0.0
    %3140 = vmatpush1.msra.mxu0 0.0
    %3141 = vmatprep.subr.mxu0 0.0
    %3142 = vmatpush1.msra.mxu0 0.0
    %3143 = vmatprep.subr.mxu0 0.0
    %3144 = vmatpush1.msra.mxu0 0.0
    %3145 = vmatprep.subr.mxu0 0.0
    %3146 = vmatpush1.msra.mxu0 0.0
    %3147 = vmatprep.subr.mxu0 0.0
    %3148 = vmatpush1.msra.mxu0 0.0
    %3149 = vmatprep.subr.mxu0 0.0
    %3150 = vmatpush1.msra.mxu0 0.0
    %3151 = vmatprep.subr.mxu0 0.0
    %3152 = vmatpush1.msra.mxu0 0.0
    %3153 = vmatprep.subr.mxu0 0.0
    %3154 = vmatpush1.msra.mxu0 0.0
    %3155 = vmatprep.subr.mxu0 0.0
    %3156 = vmatpush1.msra.mxu0 0.0
    %3157 = vmatprep.subr.mxu0 0.0
    %3158 = vmatpush1.msra.mxu0 0.0
    %3159 = vmatprep.subr.mxu0 0.0
    %3160 = vmatpush1.msra.mxu0 0.0
    %3161 = vmatprep.subr.mxu0 0.0
    %3162 = vmatpush1.msra.mxu0 0.0
    %3163 = vmatprep.subr.mxu0 0.0
    %3164 = vmatpush1.msra.mxu0 0.0
    %3165 = vmatprep.subr.mxu0 0.0
    %3166 = vmatpush1.msra.mxu0 0.0
    %3167 = vmatprep.subr.mxu0 0.0
    %3168 = vmatpush1.msra.mxu0 0.0
    %3169 = vmatprep.subr.mxu0 0.0
    %3170 = vmatpush1.msra.mxu0 0.0
    %3171 = vmatprep.subr.mxu0 0.0
    %3172 = vmatpush1.msra.mxu0 0.0
    %3173 = vmatprep.subr.mxu0 0.0
    %3174 = vmatpush1.msra.mxu0 0.0
    %3175 = vmatprep.subr.mxu0 0.0
    %3176 = vmatpush1.msra.mxu0 0.0
    %3177 = vmatprep.subr.mxu0 0.0
    %3178 = vmatpush1.msra.mxu0 0.0
    %3179 = vmatprep.subr.mxu0 0.0
    %3180 = vmatpush1.msra.mxu0 0.0
    %3181 = vmatprep.subr.mxu0 0.0
    %3182 = vmatpush1.msra.mxu0 0.0
    %3183 = vmatprep.subr.mxu0 0.0
    %3184 = vmatpush1.msra.mxu0 0.0
    %3185 = vmatprep.subr.mxu0 0.0
    %3186 = vmatpush1.msra.mxu0 0.0
    %3187 = vmatprep.subr.mxu0 0.0
    %3188 = vmatpush1.msra.mxu0 0.0
    %3189 = vmatprep.mubr.f32.mxu0 0.0
    %3190 = vmatmul.mubr.f32.gmra.mrb[0].mxu0 %v3119
    %v3191 = vpop.f32.mrb[0].mxu0
    %v3192 = vadd.f32 %v3115, %v3191
    %v3193 = vpop.f32.mrb[0].mxu0
    %3194 = vdwg.mxu0
    %v3195 = vmax.f32 %v3192, 0.0
    %v3196 = vld [vmem:[%s9] sm:$0xff]
    %v3197 = vld [vmem:[%s9 + $0x8] sm:$0xff]
    %v3198 = vld [vmem:[%s9 + $0x10] sm:$0xff]
    %v3199 = vld [vmem:[%s9 + $0x18] sm:$0xff]
    %v3200 = vld [vmem:[%s9 + $0x20] sm:$0xff]
    %v3201 = vld [vmem:[%s9 + $0x28] sm:$0xff]
    %v3202 = vld [vmem:[%s9 + $0x30] sm:$0xff]
    %v3203 = vld [vmem:[%s9 + $0x38] sm:$0xff]
    %v3204 = vld [vmem:[%s9 + $0x40] sm:$0xff]
    %v3205 = vld [vmem:[%s9 + $0x48] sm:$0xff]
    %v3206 = vld [vmem:[%s9 + $0x50] sm:$0xff]
    %v3207 = vld [vmem:[%s9 + $0x58] sm:$0xff]
    %v3208 = vld [vmem:[%s9 + $0x60] sm:$0xff]
    %v3209 = vld [vmem:[%s9 + $0x68] sm:$0xff]
    %v3210 = vld [vmem:[%s9 + $0x70] sm:$0xff]
    %v3211 = vld [vmem:[%s9 + $0x78] sm:$0xff]
    %v3212 = vld [vmem:[%s9 + $0x80] sm:$0xff]
    %v3213 = vld [vmem:[%s9 + $0x88] sm:$0xff]
    %v3214 = vld [vmem:[%s9 + $0x90] sm:$0xff]
    %v3215 = vld [vmem:[%s9 + $0x98] sm:$0xff]
    %v3216 = vld [vmem:[%s9 + $0xa0] sm:$0xff]
    %v3217 = vld [vmem:[%s9 + $0xa8] sm:$0xff]
    %v3218 = vld [vmem:[%s9 + $0xb0] sm:$0xff]
    %v3219 = vld [vmem:[%s9 + $0xb8] sm:$0xff]
    %v3220 = vld [vmem:[%s9 + $0xc0] sm:$0xff]
    %v3221 = vld [vmem:[%s9 + $0xc8] sm:$0xff]
    %v3222 = vld [vmem:[%s9 + $0xd0] sm:$0xff]
    %v3223 = vld [vmem:[%s9 + $0xd8] sm:$0xff]
    %v3224 = vld [vmem:[%s9 + $0xe0] sm:$0xff]
    %v3225 = vld [vmem:[%s9 + $0xe8] sm:$0xff]
    %v3226 = vld [vmem:[%s9 + $0xf0] sm:$0xff]
    %v3227 = vld [vmem:[%s9 + $0xf8] sm:$0xff]
    %v3228 = vld [vmem:[%s9 + $0x100] sm:$0xff]
    %v3229 = vld [vmem:[%s9 + $0x108] sm:$0xff]
    %v3230 = vld [vmem:[%s9 + $0x110] sm:$0xff]
    %v3231 = vld [vmem:[%s9 + $0x118] sm:$0xff]
    %v3232 = vld [vmem:[%s9 + $0x120] sm:$0xff]
    %v3233 = vld [vmem:[%s9 + $0x128] sm:$0xff]
    %v3234 = vld [vmem:[%s9 + $0x130] sm:$0xff]
    %v3235 = vld [vmem:[%s9 + $0x138] sm:$0xff]
    %v3236 = vld [vmem:[%s9 + $0x140] sm:$0xff]
    %v3237 = vld [vmem:[%s9 + $0x148] sm:$0xff]
    %v3238 = vld [vmem:[%s9 + $0x150] sm:$0xff]
    %v3239 = vld [vmem:[%s9 + $0x158] sm:$0xff]
    %v3240 = vld [vmem:[%s9 + $0x160] sm:$0xff]
    %v3241 = vld [vmem:[%s9 + $0x168] sm:$0xff]
    %v3242 = vld [vmem:[%s9 + $0x170] sm:$0xff]
    %v3243 = vld [vmem:[%s9 + $0x178] sm:$0xff]
    %v3244 = vld [vmem:[%s9 + $0x180] sm:$0xff]
    %v3245 = vld [vmem:[%s9 + $0x188] sm:$0xff]
    %v3246 = vld [vmem:[%s9 + $0x190] sm:$0xff]
    %v3247 = vld [vmem:[%s9 + $0x198] sm:$0xff]
    %v3248 = vld [vmem:[%s9 + $0x1a0] sm:$0xff]
    %v3249 = vld [vmem:[%s9 + $0x1a8] sm:$0xff]
    %v3250 = vld [vmem:[%s9 + $0x1b0] sm:$0xff]
    %v3251 = vld [vmem:[%s9 + $0x1b8] sm:$0xff]
    %v3252 = vld [vmem:[%s9 + $0x1c0] sm:$0xff]
    %v3253 = vld [vmem:[%s9 + $0x1c8] sm:$0xff]
    %v3254 = vld [vmem:[%s9 + $0x1d0] sm:$0xff]
    %v3255 = vld [vmem:[%s9 + $0x1d8] sm:$0xff]
    %v3256 = vld [vmem:[%s9 + $0x1e0] sm:$0xff]
    %v3257 = vld [vmem:[%s9 + $0x1e8] sm:$0xff]
    %v3258 = vld [vmem:[%s9 + $0x1f0] sm:$0xff]
    %v3259 = vld [vmem:[%s9 + $0x1f8] sm:$0xff]
    %v3260 = vld [vmem:[%s9 + $0x200] sm:$0xff]
    %v3261 = vld [vmem:[%s9 + $0x208] sm:$0xff]
    %v3262 = vld [vmem:[%s9 + $0x210] sm:$0xff]
    %v3263 = vld [vmem:[%s9 + $0x218] sm:$0xff]
    %v3264 = vld [vmem:[%s9 + $0x220] sm:$0xff]
    %v3265 = vld [vmem:[%s9 + $0x228] sm:$0xff]
    %v3266 = vld [vmem:[%s9 + $0x230] sm:$0xff]
    %v3267 = vld [vmem:[%s9 + $0x238] sm:$0xff]
    %v3268 = vld [vmem:[%s9 + $0x240] sm:$0xff]
    %v3269 = vld [vmem:[%s9 + $0x248] sm:$0xff]
    %v3270 = vld [vmem:[%s9 + $0x250] sm:$0xff]
    %v3271 = vld [vmem:[%s9 + $0x258] sm:$0xff]
    %v3272 = vld [vmem:[%s9 + $0x260] sm:$0xff]
    %v3273 = vld [vmem:[%s9 + $0x268] sm:$0xff]
    %v3274 = vld [vmem:[%s9 + $0x270] sm:$0xff]
    %v3275 = vld [vmem:[%s9 + $0x278] sm:$0xff]
    %v3276 = vld [vmem:[%s9 + $0x280] sm:$0xff]
    %v3277 = vld [vmem:[%s9 + $0x288] sm:$0xff]
    %v3278 = vld [vmem:[%s9 + $0x290] sm:$0xff]
    %v3279 = vld [vmem:[%s9 + $0x298] sm:$0xff]
    %v3280 = vld [vmem:[%s9 + $0x2a0] sm:$0xff]
    %v3281 = vld [vmem:[%s9 + $0x2a8] sm:$0xff]
    %v3282 = vld [vmem:[%s9 + $0x2b0] sm:$0xff]
    %v3283 = vld [vmem:[%s9 + $0x2b8] sm:$0xff]
    %v3284 = vld [vmem:[%s9 + $0x2c0] sm:$0xff]
    %v3285 = vld [vmem:[%s9 + $0x2c8] sm:$0xff]
    %v3286 = vld [vmem:[%s9 + $0x2d0] sm:$0xff]
    %v3287 = vld [vmem:[%s9 + $0x2d8] sm:$0xff]
    %v3288 = vld [vmem:[%s9 + $0x2e0] sm:$0xff]
    %v3289 = vld [vmem:[%s9 + $0x2e8] sm:$0xff]
    %v3290 = vld [vmem:[%s9 + $0x2f0] sm:$0xff]
    %v3291 = vld [vmem:[%s9 + $0x2f8] sm:$0xff]
    %v3292 = vld [vmem:[%s9 + $0x300] sm:$0xff]
    %v3293 = vld [vmem:[%s9 + $0x308] sm:$0xff]
    %v3294 = vld [vmem:[%s9 + $0x310] sm:$0xff]
    %v3295 = vld [vmem:[%s9 + $0x318] sm:$0xff]
    %v3296 = vld [vmem:[%s9 + $0x320] sm:$0xff]
    %v3297 = vld [vmem:[%s9 + $0x328] sm:$0xff]
    %v3298 = vld [vmem:[%s9 + $0x330] sm:$0xff]
    %v3299 = vld [vmem:[%s9 + $0x338] sm:$0xff]
    %v3300 = vld [vmem:[%s9 + $0x340] sm:$0xff]
    %v3301 = vld [vmem:[%s9 + $0x348] sm:$0xff]
    %v3302 = vld [vmem:[%s9 + $0x350] sm:$0xff]
    %v3303 = vld [vmem:[%s9 + $0x358] sm:$0xff]
    %v3304 = vld [vmem:[%s9 + $0x360] sm:$0xff]
    %v3305 = vld [vmem:[%s9 + $0x368] sm:$0xff]
    %v3306 = vld [vmem:[%s9 + $0x370] sm:$0xff]
    %v3307 = vld [vmem:[%s9 + $0x378] sm:$0xff]
    %v3308 = vld [vmem:[%s9 + $0x380] sm:$0xff]
    %v3309 = vld [vmem:[%s9 + $0x388] sm:$0xff]
    %v3310 = vld [vmem:[%s9 + $0x390] sm:$0xff]
    %v3311 = vld [vmem:[%s9 + $0x398] sm:$0xff]
    %v3312 = vld [vmem:[%s9 + $0x3a0] sm:$0xff]
    %v3313 = vld [vmem:[%s9 + $0x3a8] sm:$0xff]
    %v3314 = vld [vmem:[%s9 + $0x3b0] sm:$0xff]
    %v3315 = vld [vmem:[%s9 + $0x3b8] sm:$0xff]
    %v3316 = vld [vmem:[%s9 + $0x3c0] sm:$0xff]
    %v3317 = vld [vmem:[%s9 + $0x3c8] sm:$0xff]
    %v3318 = vld [vmem:[%s9 + $0x3d0] sm:$0xff]
    %v3319 = vld [vmem:[%s9 + $0x3d8] sm:$0xff]
    %v3320 = vld [vmem:[%s9 + $0x3e0] sm:$0xff]
    %v3321 = vld [vmem:[%s9 + $0x3e8] sm:$0xff]
    %v3322 = vld [vmem:[%s9 + $0x3f0] sm:$0xff]
    %v3323 = vld [vmem:[%s9 + $0x3f8] sm:$0xff]
    %v3324 = vld [vmem:[%s9 + $0x400] sm:$0xff]
    %v3325 = vld [vmem:[%s9 + $0x408] sm:$0xff]
    %v3326 = vld [vmem:[%s9 + $0x410] sm:$0xff]
    %v3327 = vld [vmem:[%s9 + $0x418] sm:$0xff]
    %v3328 = vld [vmem:[%s9 + $0x420] sm:$0xff]
    %v3329 = vld [vmem:[%s9 + $0x428] sm:$0xff]
    %v3330 = vld [vmem:[%s9 + $0x430] sm:$0xff]
    %v3331 = vld [vmem:[%s9 + $0x438] sm:$0xff]
    %v3332 = vld [vmem:[%s9 + $0x440] sm:$0xff]
    %v3333 = vld [vmem:[%s9 + $0x448] sm:$0xff]
    %v3334 = vld [vmem:[%s9 + $0x450] sm:$0xff]
    %v3335 = vld [vmem:[%s9 + $0x458] sm:$0xff]
    %v3336 = vld [vmem:[%s9 + $0x460] sm:$0xff]
    %v3337 = vld [vmem:[%s9 + $0x468] sm:$0xff]
    %v3338 = vld [vmem:[%s9 + $0x470] sm:$0xff]
    %v3339 = vld [vmem:[%s9 + $0x478] sm:$0xff]
    %v3340 = vld [vmem:[%s9 + $0x480] sm:$0xff]
    %v3341 = vld [vmem:[%s9 + $0x488] sm:$0xff]
    %v3342 = vld [vmem:[%s9 + $0x490] sm:$0xff]
    %v3343 = vld [vmem:[%s9 + $0x498] sm:$0xff]
    %v3344 = vld [vmem:[%s9 + $0x4a0] sm:$0xff]
    %v3345 = vld [vmem:[%s9 + $0x4a8] sm:$0xff]
    %v3346 = vld [vmem:[%s9 + $0x4b0] sm:$0xff]
    %v3347 = vld [vmem:[%s9 + $0x4b8] sm:$0xff]
    %v3348 = vld [vmem:[%s9 + $0x4c0] sm:$0xff]
    %v3349 = vld [vmem:[%s9 + $0x4c8] sm:$0xff]
    %v3350 = vld [vmem:[%s9 + $0x4d0] sm:$0xff]
    %v3351 = vld [vmem:[%s9 + $0x4d8] sm:$0xff]
    %v3352 = vld [vmem:[%s9 + $0x4e0] sm:$0xff]
    %v3353 = vld [vmem:[%s9 + $0x4e8] sm:$0xff]
    %v3354 = vld [vmem:[%s9 + $0x4f0] sm:$0xff]
    %v3355 = vld [vmem:[%s9 + $0x4f8] sm:$0xff]
    %v3356 = vld [vmem:[%s10] sm:$0xff]
    %v3357 = vld [vmem:[%s10 + $0x8] sm:$0xff]
    %v3358 = vld [vmem:[%s10 + $0x10] sm:$0xff]
    %v3359 = vld [vmem:[%s10 + $0x18] sm:$0xff]
    %v3361 = vsel %vm560, %v3195, 0
    %3363 = vmatprep.subr.mxu0 0.0
    %3364 = vmatpush1.msra.mxu0 %v3356
    %3365 = vmatprep.subr.mxu0 0.0
    %3366 = vmatpush1.msra.mxu0 %v3357
    %3367 = vmatprep.subr.mxu0 0.0
    %3368 = vmatpush1.msra.mxu0 %v3358
    %3369 = vmatprep.subr.mxu0 0.0
    %3370 = vmatpush1.msra.mxu0 %v3359
    %3371 = vmatprep.subr.mxu0 0.0
    %3372 = vmatpush1.msra.mxu0 0.0
    %3373 = vmatprep.subr.mxu0 0.0
    %3374 = vmatpush1.msra.mxu0 0.0
    %3375 = vmatprep.subr.mxu0 0.0
    %3376 = vmatpush1.msra.mxu0 0.0
    %3377 = vmatprep.subr.mxu0 0.0
    %3378 = vmatpush1.msra.mxu0 0.0
    %3379 = vmatprep.subr.mxu0 0.0
    %3380 = vmatpush1.msra.mxu0 0.0
    %3381 = vmatprep.subr.mxu0 0.0
    %3382 = vmatpush1.msra.mxu0 0.0
    %3383 = vmatprep.subr.mxu0 0.0
    %3384 = vmatpush1.msra.mxu0 0.0
    %3385 = vmatprep.subr.mxu0 0.0
    %3386 = vmatpush1.msra.mxu0 0.0
    %3387 = vmatprep.subr.mxu0 0.0
    %3388 = vmatpush1.msra.mxu0 0.0
    %3389 = vmatprep.subr.mxu0 0.0
    %3390 = vmatpush1.msra.mxu0 0.0
    %3391 = vmatprep.subr.mxu0 0.0
    %3392 = vmatpush1.msra.mxu0 0.0
    %3393 = vmatprep.subr.mxu0 0.0
    %3394 = vmatpush1.msra.mxu0 0.0
    %3395 = vmatprep.subr.mxu0 0.0
    %3396 = vmatpush1.msra.mxu0 0.0
    %3397 = vmatprep.subr.mxu0 0.0
    %3398 = vmatpush1.msra.mxu0 0.0
    %3399 = vmatprep.subr.mxu0 0.0
    %3400 = vmatpush1.msra.mxu0 0.0
    %3401 = vmatprep.subr.mxu0 0.0
    %3402 = vmatpush1.msra.mxu0 0.0
    %3403 = vmatprep.subr.mxu0 0.0
    %3404 = vmatpush1.msra.mxu0 0.0
    %3405 = vmatprep.subr.mxu0 0.0
    %3406 = vmatpush1.msra.mxu0 0.0
    %3407 = vmatprep.subr.mxu0 0.0
    %3408 = vmatpush1.msra.mxu0 0.0
    %3409 = vmatprep.subr.mxu0 0.0
    %3410 = vmatpush1.msra.mxu0 0.0
    %3411 = vmatprep.subr.mxu0 0.0
    %3412 = vmatpush1.msra.mxu0 0.0
    %3413 = vmatprep.subr.mxu0 0.0
    %3414 = vmatpush1.msra.mxu0 0.0
    %3415 = vmatprep.subr.mxu0 0.0
    %3416 = vmatpush1.msra.mxu0 0.0
    %3417 = vmatprep.subr.mxu0 0.0
    %3418 = vmatpush1.msra.mxu0 0.0
    %3419 = vmatprep.subr.mxu0 0.0
    %3420 = vmatpush1.msra.mxu0 0.0
    %3421 = vmatprep.subr.mxu0 0.0
    %3422 = vmatpush1.msra.mxu0 0.0
    %3423 = vmatprep.subr.mxu0 0.0
    %3424 = vmatpush1.msra.mxu0 0.0
    %3425 = vmatprep.subr.mxu0 0.0
    %3426 = vmatpush1.msra.mxu0 0.0
    %3427 = vmatprep.mubr.f32.mxu0 0.0
    %3428 = vmatmul.mubr.f32.gmra.mrb[0].mxu0 %v3361
    %v3429 = vpop.f32.mrb[0].mxu0
    %v3430 = vadd.f32 0.0, %v3429
    %v3431 = vpop.f32.mrb[0].mxu0
    %3432 = vdwg.mxu0
    %3433 = vmatprep.subr.mxu0 0.0
    %3434 = vmatpush1.msra.mxu0 %v3196
    %3435 = vmatprep.subr.mxu0 0.0
    %3436 = vmatpush1.msra.mxu0 %v3197
    %3437 = vmatprep.subr.mxu0 0.0
    %3438 = vmatpush1.msra.mxu0 %v3198
    %3439 = vmatprep.subr.mxu0 0.0
    %3440 = vmatpush1.msra.mxu0 %v3199
    %3441 = vmatprep.subr.mxu0 0.0
    %3442 = vmatpush1.msra.mxu0 %v3200
    %3443 = vmatprep.subr.mxu0 0.0
    %3444 = vmatpush1.msra.mxu0 %v3201
    %3445 = vmatprep.subr.mxu0 0.0
    %3446 = vmatpush1.msra.mxu0 %v3202
    %3447 = vmatprep.subr.mxu0 0.0
    %3448 = vmatpush1.msra.mxu0 %v3203
    %3449 = vmatprep.subr.mxu0 0.0
    %3450 = vmatpush1.msra.mxu0 %v3204
    %3451 = vmatprep.subr.mxu0 0.0
    %3452 = vmatpush1.msra.mxu0 %v3205
    %3453 = vmatprep.subr.mxu0 0.0
    %3454 = vmatpush1.msra.mxu0 %v3206
    %3455 = vmatprep.subr.mxu0 0.0
    %3456 = vmatpush1.msra.mxu0 %v3207
    %3457 = vmatprep.subr.mxu0 0.0
    %3458 = vmatpush1.msra.mxu0 %v3208
    %3459 = vmatprep.subr.mxu0 0.0
    %3460 = vmatpush1.msra.mxu0 %v3209
    %3461 = vmatprep.subr.mxu0 0.0
    %3462 = vmatpush1.msra.mxu0 %v3210
    %3463 = vmatprep.subr.mxu0 0.0
    %3464 = vmatpush1.msra.mxu0 %v3211
    %3465 = vmatprep.subr.mxu0 0.0
    %3466 = vmatpush1.msra.mxu0 %v3212
    %3467 = vmatprep.subr.mxu0 0.0
    %3468 = vmatpush1.msra.mxu0 %v3213
    %3469 = vmatprep.subr.mxu0 0.0
    %3470 = vmatpush1.msra.mxu0 %v3214
    %3471 = vmatprep.subr.mxu0 0.0
    %3472 = vmatpush1.msra.mxu0 %v3215
    %3473 = vmatprep.subr.mxu0 0.0
    %3474 = vmatpush1.msra.mxu0 %v3216
    %3475 = vmatprep.subr.mxu0 0.0
    %3476 = vmatpush1.msra.mxu0 %v3217
    %3477 = vmatprep.subr.mxu0 0.0
    %3478 = vmatpush1.msra.mxu0 %v3218
    %3479 = vmatprep.subr.mxu0 0.0
    %3480 = vmatpush1.msra.mxu0 %v3219
    %3481 = vmatprep.subr.mxu0 0.0
    %3482 = vmatpush1.msra.mxu0 %v3220
    %3483 = vmatprep.subr.mxu0 0.0
    %3484 = vmatpush1.msra.mxu0 %v3221
    %3485 = vmatprep.subr.mxu0 0.0
    %3486 = vmatpush1.msra.mxu0 %v3222
    %3487 = vmatprep.subr.mxu0 0.0
    %3488 = vmatpush1.msra.mxu0 %v3223
    %3489 = vmatprep.subr.mxu0 0.0
    %3490 = vmatpush1.msra.mxu0 %v3224
    %3491 = vmatprep.subr.mxu0 0.0
    %3492 = vmatpush1.msra.mxu0 %v3225
    %3493 = vmatprep.subr.mxu0 0.0
    %3494 = vmatpush1.msra.mxu0 %v3226
    %3495 = vmatprep.subr.mxu0 0.0
    %3496 = vmatpush1.msra.mxu0 %v3227
    %3497 = vmatprep.mubr.f32.mxu0 %v2820
    %3498 = vmatmul.mubr.f32.gmra.mrb[0].mxu0 %v2818
    %v3499 = vpop.f32.mrb[0].mxu0
    %v3500 = vadd.f32 %v3430, %v3499
    %v3501 = vpop.f32.mrb[0].mxu0
    %3502 = vdwg.mxu0
    %3503 = vmatprep.subr.mxu0 0.0
    %3504 = vmatpush1.msra.mxu0 %v3228
    %3505 = vmatprep.subr.mxu0 0.0
    %3506 = vmatpush1.msra.mxu0 %v3229
    %3507 = vmatprep.subr.mxu0 0.0
    %3508 = vmatpush1.msra.mxu0 %v3230
    %3509 = vmatprep.subr.mxu0 0.0
    %3510 = vmatpush1.msra.mxu0 %v3231
    %3511 = vmatprep.subr.mxu0 0.0
    %3512 = vmatpush1.msra.mxu0 %v3232
    %3513 = vmatprep.subr.mxu0 0.0
    %3514 = vmatpush1.msra.mxu0 %v3233
    %3515 = vmatprep.subr.mxu0 0.0
    %3516 = vmatpush1.msra.mxu0 %v3234
    %3517 = vmatprep.subr.mxu0 0.0
    %3518 = vmatpush1.msra.mxu0 %v3235
    %3519 = vmatprep.subr.mxu0 0.0
    %3520 = vmatpush1.msra.mxu0 %v3236
    %3521 = vmatprep.subr.mxu0 0.0
    %3522 = vmatpush1.msra.mxu0 %v3237
    %3523 = vmatprep.subr.mxu0 0.0
    %3524 = vmatpush1.msra.mxu0 %v3238
    %3525 = vmatprep.subr.mxu0 0.0
    %3526 = vmatpush1.msra.mxu0 %v3239
    %3527 = vmatprep.subr.mxu0 0.0
    %3528 = vmatpush1.msra.mxu0 %v3240
    %3529 = vmatprep.subr.mxu0 0.0
    %3530 = vmatpush1.msra.mxu0 %v3241
    %3531 = vmatprep.subr.mxu0 0.0
    %3532 = vmatpush1.msra.mxu0 %v3242
    %3533 = vmatprep.subr.mxu0 0.0
    %3534 = vmatpush1.msra.mxu0 %v3243
    %3535 = vmatprep.subr.mxu0 0.0
    %3536 = vmatpush1.msra.mxu0 %v3244
    %3537 = vmatprep.subr.mxu0 0.0
    %3538 = vmatpush1.msra.mxu0 %v3245
    %3539 = vmatprep.subr.mxu0 0.0
    %3540 = vmatpush1.msra.mxu0 %v3246
    %3541 = vmatprep.subr.mxu0 0.0
    %3542 = vmatpush1.msra.mxu0 %v3247
    %3543 = vmatprep.subr.mxu0 0.0
    %3544 = vmatpush1.msra.mxu0 %v3248
    %3545 = vmatprep.subr.mxu0 0.0
    %3546 = vmatpush1.msra.mxu0 %v3249
    %3547 = vmatprep.subr.mxu0 0.0
    %3548 = vmatpush1.msra.mxu0 %v3250
    %3549 = vmatprep.subr.mxu0 0.0
    %3550 = vmatpush1.msra.mxu0 %v3251
    %3551 = vmatprep.subr.mxu0 0.0
    %3552 = vmatpush1.msra.mxu0 %v3252
    %3553 = vmatprep.subr.mxu0 0.0
    %3554 = vmatpush1.msra.mxu0 %v3253
    %3555 = vmatprep.subr.mxu0 0.0
    %3556 = vmatpush1.msra.mxu0 %v3254
    %3557 = vmatprep.subr.mxu0 0.0
    %3558 = vmatpush1.msra.mxu0 %v3255
    %3559 = vmatprep.subr.mxu0 0.0
    %3560 = vmatpush1.msra.mxu0 %v3256
    %3561 = vmatprep.subr.mxu0 0.0
    %3562 = vmatpush1.msra.mxu0 %v3257
    %3563 = vmatprep.subr.mxu0 0.0
    %3564 = vmatpush1.msra.mxu0 %v3258
    %3565 = vmatprep.subr.mxu0 0.0
    %3566 = vmatpush1.msra.mxu0 %v3259
    %3567 = vmatprep.mubr.f32.mxu0 %v2891
    %3568 = vmatmul.mubr.f32.gmra.mrb[0].mxu0 %v2889
    %v3569 = vpop.f32.mrb[0].mxu0
    %v3570 = vadd.f32 %v3500, %v3569
    %v3571 = vpop.f32.mrb[0].mxu0
    %3572 = vdwg.mxu0
    %3573 = vmatprep.subr.mxu0 0.0
    %3574 = vmatpush1.msra.mxu0 %v3260
    %3575 = vmatprep.subr.mxu0 0.0
    %3576 = vmatpush1.msra.mxu0 %v3261
    %3577 = vmatprep.subr.mxu0 0.0
    %3578 = vmatpush1.msra.mxu0 %v3262
    %3579 = vmatprep.subr.mxu0 0.0
    %3580 = vmatpush1.msra.mxu0 %v3263
    %3581 = vmatprep.subr.mxu0 0.0
    %3582 = vmatpush1.msra.mxu0 %v3264
    %3583 = vmatprep.subr.mxu0 0.0
    %3584 = vmatpush1.msra.mxu0 %v3265
    %3585 = vmatprep.subr.mxu0 0.0
    %3586 = vmatpush1.msra.mxu0 %v3266
    %3587 = vmatprep.subr.mxu0 0.0
    %3588 = vmatpush1.msra.mxu0 %v3267
    %3589 = vmatprep.subr.mxu0 0.0
    %3590 = vmatpush1.msra.mxu0 %v3268
    %3591 = vmatprep.subr.mxu0 0.0
    %3592 = vmatpush1.msra.mxu0 %v3269
    %3593 = vmatprep.subr.mxu0 0.0
    %3594 = vmatpush1.msra.mxu0 %v3270
    %3595 = vmatprep.subr.mxu0 0.0
    %3596 = vmatpush1.msra.mxu0 %v3271
    %3597 = vmatprep.subr.mxu0 0.0
    %3598 = vmatpush1.msra.mxu0 %v3272
    %3599 = vmatprep.subr.mxu0 0.0
    %3600 = vmatpush1.msra.mxu0 %v3273
    %3601 = vmatprep.subr.mxu0 0.0
    %3602 = vmatpush1.msra.mxu0 %v3274
    %3603 = vmatprep.subr.mxu0 0.0
    %3604 = vmatpush1.msra.mxu0 %v3275
    %3605 = vmatprep.subr.mxu0 0.0
    %3606 = vmatpush1.msra.mxu0 %v3276
    %3607 = vmatprep.subr.mxu0 0.0
    %3608 = vmatpush1.msra.mxu0 %v3277
    %3609 = vmatprep.subr.mxu0 0.0
    %3610 = vmatpush1.msra.mxu0 %v3278
    %3611 = vmatprep.subr.mxu0 0.0
    %3612 = vmatpush1.msra.mxu0 %v3279
    %3613 = vmatprep.subr.mxu0 0.0
    %3614 = vmatpush1.msra.mxu0 %v3280
    %3615 = vmatprep.subr.mxu0 0.0
    %3616 = vmatpush1.msra.mxu0 %v3281
    %3617 = vmatprep.subr.mxu0 0.0
    %3618 = vmatpush1.msra.mxu0 %v3282
    %3619 = vmatprep.subr.mxu0 0.0
    %3620 = vmatpush1.msra.mxu0 %v3283
    %3621 = vmatprep.subr.mxu0 0.0
    %3622 = vmatpush1.msra.mxu0 %v3284
    %3623 = vmatprep.subr.mxu0 0.0
    %3624 = vmatpush1.msra.mxu0 %v3285
    %3625 = vmatprep.subr.mxu0 0.0
    %3626 = vmatpush1.msra.mxu0 %v3286
    %3627 = vmatprep.subr.mxu0 0.0
    %3628 = vmatpush1.msra.mxu0 %v3287
    %3629 = vmatprep.subr.mxu0 0.0
    %3630 = vmatpush1.msra.mxu0 %v3288
    %3631 = vmatprep.subr.mxu0 0.0
    %3632 = vmatpush1.msra.mxu0 %v3289
    %3633 = vmatprep.subr.mxu0 0.0
    %3634 = vmatpush1.msra.mxu0 %v3290
    %3635 = vmatprep.subr.mxu0 0.0
    %3636 = vmatpush1.msra.mxu0 %v3291
    %3637 = vmatprep.mubr.f32.mxu0 %v2962
    %3638 = vmatmul.mubr.f32.gmra.mrb[0].mxu0 %v2960
    %v3639 = vpop.f32.mrb[0].mxu0
    %v3640 = vadd.f32 %v3570, %v3639
    %v3641 = vpop.f32.mrb[0].mxu0
    %3642 = vdwg.mxu0
    %3643 = vmatprep.subr.mxu0 0.0
    %3644 = vmatpush1.msra.mxu0 %v3292
    %3645 = vmatprep.subr.mxu0 0.0
    %3646 = vmatpush1.msra.mxu0 %v3293
    %3647 = vmatprep.subr.mxu0 0.0
    %3648 = vmatpush1.msra.mxu0 %v3294
    %3649 = vmatprep.subr.mxu0 0.0
    %3650 = vmatpush1.msra.mxu0 %v3295
    %3651 = vmatprep.subr.mxu0 0.0
    %3652 = vmatpush1.msra.mxu0 %v3296
    %3653 = vmatprep.subr.mxu0 0.0
    %3654 = vmatpush1.msra.mxu0 %v3297
    %3655 = vmatprep.subr.mxu0 0.0
    %3656 = vmatpush1.msra.mxu0 %v3298
    %3657 = vmatprep.subr.mxu0 0.0
    %3658 = vmatpush1.msra.mxu0 %v3299
    %3659 = vmatprep.subr.mxu0 0.0
    %3660 = vmatpush1.msra.mxu0 %v3300
    %3661 = vmatprep.subr.mxu0 0.0
    %3662 = vmatpush1.msra.mxu0 %v3301
    %3663 = vmatprep.subr.mxu0 0.0
    %3664 = vmatpush1.msra.mxu0 %v3302
    %3665 = vmatprep.subr.mxu0 0.0
    %3666 = vmatpush1.msra.mxu0 %v3303
    %3667 = vmatprep.subr.mxu0 0.0
    %3668 = vmatpush1.msra.mxu0 %v3304
    %3669 = vmatprep.subr.mxu0 0.0
    %3670 = vmatpush1.msra.mxu0 %v3305
    %3671 = vmatprep.subr.mxu0 0.0
    %3672 = vmatpush1.msra.mxu0 %v3306
    %3673 = vmatprep.subr.mxu0 0.0
    %3674 = vmatpush1.msra.mxu0 %v3307
    %3675 = vmatprep.subr.mxu0 0.0
    %3676 = vmatpush1.msra.mxu0 %v3308
    %3677 = vmatprep.subr.mxu0 0.0
    %3678 = vmatpush1.msra.mxu0 %v3309
    %3679 = vmatprep.subr.mxu0 0.0
    %3680 = vmatpush1.msra.mxu0 %v3310
    %3681 = vmatprep.subr.mxu0 0.0
    %3682 = vmatpush1.msra.mxu0 %v3311
    %3683 = vmatprep.subr.mxu0 0.0
    %3684 = vmatpush1.msra.mxu0 %v3312
    %3685 = vmatprep.subr.mxu0 0.0
    %3686 = vmatpush1.msra.mxu0 %v3313
    %3687 = vmatprep.subr.mxu0 0.0
    %3688 = vmatpush1.msra.mxu0 %v3314
    %3689 = vmatprep.subr.mxu0 0.0
    %3690 = vmatpush1.msra.mxu0 %v3315
    %3691 = vmatprep.subr.mxu0 0.0
    %3692 = vmatpush1.msra.mxu0 %v3316
    %3693 = vmatprep.subr.mxu0 0.0
    %3694 = vmatpush1.msra.mxu0 %v3317
    %3695 = vmatprep.subr.mxu0 0.0
    %3696 = vmatpush1.msra.mxu0 %v3318
    %3697 = vmatprep.subr.mxu0 0.0
    %3698 = vmatpush1.msra.mxu0 %v3319
    %3699 = vmatprep.subr.mxu0 0.0
    %3700 = vmatpush1.msra.mxu0 %v3320
    %3701 = vmatprep.subr.mxu0 0.0
    %3702 = vmatpush1.msra.mxu0 %v3321
    %3703 = vmatprep.subr.mxu0 0.0
    %3704 = vmatpush1.msra.mxu0 %v3322
    %3705 = vmatprep.subr.mxu0 0.0
    %3706 = vmatpush1.msra.mxu0 %v3323
    %3707 = vmatprep.mubr.f32.mxu0 %v3033
    %3708 = vmatmul.mubr.f32.gmra.mrb[0].mxu0 %v3031
    %v3709 = vpop.f32.mrb[0].mxu0
    %v3710 = vadd.f32 %v3640, %v3709
    %v3711 = vpop.f32.mrb[0].mxu0
    %3712 = vdwg.mxu0
    %3713 = vmatprep.subr.mxu0 0.0
    %3714 = vmatpush1.msra.mxu0 %v3324
    %3715 = vmatprep.subr.mxu0 0.0
    %3716 = vmatpush1.msra.mxu0 %v3325
    %3717 = vmatprep.subr.mxu0 0.0
    %3718 = vmatpush1.msra.mxu0 %v3326
    %3719 = vmatprep.subr.mxu0 0.0
    %3720 = vmatpush1.msra.mxu0 %v3327
    %3721 = vmatprep.subr.mxu0 0.0
    %3722 = vmatpush1.msra.mxu0 %v3328
    %3723 = vmatprep.subr.mxu0 0.0
    %3724 = vmatpush1.msra.mxu0 %v3329
    %3725 = vmatprep.subr.mxu0 0.0
    %3726 = vmatpush1.msra.mxu0 %v3330
    %3727 = vmatprep.subr.mxu0 0.0
    %3728 = vmatpush1.msra.mxu0 %v3331
    %3729 = vmatprep.subr.mxu0 0.0
    %3730 = vmatpush1.msra.mxu0 %v3332
    %3731 = vmatprep.subr.mxu0 0.0
    %3732 = vmatpush1.msra.mxu0 %v3333
    %3733 = vmatprep.subr.mxu0 0.0
    %3734 = vmatpush1.msra.mxu0 %v3334
    %3735 = vmatprep.subr.mxu0 0.0
    %3736 = vmatpush1.msra.mxu0 %v3335
    %3737 = vmatprep.subr.mxu0 0.0
    %3738 = vmatpush1.msra.mxu0 %v3336
    %3739 = vmatprep.subr.mxu0 0.0
    %3740 = vmatpush1.msra.mxu0 %v3337
    %3741 = vmatprep.subr.mxu0 0.0
    %3742 = vmatpush1.msra.mxu0 %v3338
    %3743 = vmatprep.subr.mxu0 0.0
    %3744 = vmatpush1.msra.mxu0 %v3339
    %3745 = vmatprep.subr.mxu0 0.0
    %3746 = vmatpush1.msra.mxu0 %v3340
    %3747 = vmatprep.subr.mxu0 0.0
    %3748 = vmatpush1.msra.mxu0 %v3341
    %3749 = vmatprep.subr.mxu0 0.0
    %3750 = vmatpush1.msra.mxu0 %v3342
    %3751 = vmatprep.subr.mxu0 0.0
    %3752 = vmatpush1.msra.mxu0 %v3343
    %3753 = vmatprep.subr.mxu0 0.0
    %3754 = vmatpush1.msra.mxu0 %v3344
    %3755 = vmatprep.subr.mxu0 0.0
    %3756 = vmatpush1.msra.mxu0 %v3345
    %3757 = vmatprep.subr.mxu0 0.0
    %3758 = vmatpush1.msra.mxu0 %v3346
    %3759 = vmatprep.subr.mxu0 0.0
    %3760 = vmatpush1.msra.mxu0 %v3347
    %3761 = vmatprep.subr.mxu0 0.0
    %3762 = vmatpush1.msra.mxu0 %v3348
    %3763 = vmatprep.subr.mxu0 0.0
    %3764 = vmatpush1.msra.mxu0 %v3349
    %3765 = vmatprep.subr.mxu0 0.0
    %3766 = vmatpush1.msra.mxu0 %v3350
    %3767 = vmatprep.subr.mxu0 0.0
    %3768 = vmatpush1.msra.mxu0 %v3351
    %3769 = vmatprep.subr.mxu0 0.0
    %3770 = vmatpush1.msra.mxu0 %v3352
    %3771 = vmatprep.subr.mxu0 0.0
    %3772 = vmatpush1.msra.mxu0 %v3353
    %3773 = vmatprep.subr.mxu0 0.0
    %3774 = vmatpush1.msra.mxu0 %v3354
    %3775 = vmatprep.subr.mxu0 0.0
    %3776 = vmatpush1.msra.mxu0 %v3355
    %3777 = vmatprep.mubr.f32.mxu0 %v3104
    %3778 = vmatmul.mubr.f32.gmra.mrb[0].mxu0 %v3102
    %v3779 = vpop.f32.mrb[0].mxu0
    %v3780 = vadd.f32 %v3710, %v3779
    %v3781 = vpop.f32.mrb[0].mxu0
    %3782 = vdwg.mxu0
    %v3783 = vld [vmem:[%s11] sm:$0x1]
    %v3785 = vlaneseq
    %v3786 = vshrl.u32 %v3785, 7
    %v3787 = vsub.s32 0, %v3786
    %v3788 = vrot.slane %v3783, %v3787
    %v3790 = vadd.f32 %v3780, %v3788
    %3791 = vst [vmem:[#allocation2] sm:$0x3] %v3790
    // Predicated region
    $region50: #{cnn_with_tabular_forward.1} parent=1 // pred_check
      _
    $region51: #{cnn_with_tabular_forward.1} parent=1 // pred_check_branch
      %3793 = sbr.rel (0) target = $region53
    $region52: #{cnn_with_tabular_forward.1} parent=1 // pred_region
      %s3795 = ssub.s32 32, 32
      %3796 = vsyncadd [#allocation3], %s3795
      %s3798 = sshll.u32 [#allocation2], 4
      %s3799 = int_to_ptr.vmem [resolvable:$true] %s3798
      %3801 = dma.vmem_to_hbm [thread:$0]  %s3799, 32, %s12, [#allocation3]
    $region53: #{cnn_with_tabular_forward.1} parent=1 // pred_fallthru
      _
    // Predicated region
    $region54: #{cnn_with_tabular_forward.1} parent=1 // pred_check
      _
    $region55: #{cnn_with_tabular_forward.1} parent=1 // pred_check_branch
      %3803 = sbr.rel (0) target = $region57
    $region56: #{cnn_with_tabular_forward.1} parent=1 // pred_region
      %3804 = dma.done [#allocation3], 32
    $region57: #{cnn_with_tabular_forward.1} parent=1 // pred_fallthru
      _
    %3805 = vsyncpa [#allocation3], 1

</llo_original>
